<compile_context>
chip_gen: v6e
topology: v6e:2x2x1
jax: 0.10.0
libtpu: 0.0.40
codegen_flags: <defaults>
</compile_context>

<pallas_src>
import jax
import jax.numpy as jnp
import numpy as np
from jax.experimental import pallas as pl
from jax.experimental.pallas import tpu as pltpu


def dan_kernel(tok_ref, invlen_ref, table_ref, w1_ref, b1_ref, wc_ref, bc_ref, out_ref):
    tb, s = tok_ref.shape
    v = table_ref.shape[0]

    # --- fused embedding lookup + avg pooling (bag-of-words @ table on the MXU) -----
    tok = tok_ref[...]                                                    # [TB, S] i32
    vid = jax.lax.broadcasted_iota(jnp.int32, (tb, s, v), 2)              # [TB, S, V]
    counts = jnp.sum((tok[:, :, None] == vid).astype(jnp.float32), axis=1)  # [TB, V]
    # counts <= S are exact in bf16 for S <= 256.
    pooled = jnp.dot(counts.astype(jnp.bfloat16), table_ref[...],
                     preferred_element_type=jnp.float32)                  # [TB, E] f32
    pooled = pooled * invlen_ref[...]                                     # avg pooling

    # --- DanEncoder layer: Linear (+ folded BN) -> ELU (Dropout = identity in eval) --
    h = jnp.dot(pooled.astype(jnp.bfloat16), w1_ref[...],
                preferred_element_type=jnp.float32) + b1_ref[...]
    h = jnp.where(h > 0.0, h, jnp.exp(jnp.minimum(h, 0.0)) - 1.0)         # ELU, alpha=1

    # --- classifier: Linear (+ folded BN), lane-dense padded output ------------------
    out_ref[...] = (jnp.dot(h.astype(jnp.bfloat16), wc_ref[...],
                            preferred_element_type=jnp.float32)
                    + bc_ref[...]).astype(out_ref.dtype)


def _fold_linear_bn(w, b, gamma, beta, mean, var, eps=1e-5):
    """Fold eval-mode BatchNorm1d(Linear(x)) into a single (W', b')."""
    scale = gamma / jnp.sqrt(var + eps)            # [out]
    return w * scale[None, :], (b - mean) * scale + beta


def _tpu_vmem_and_cores():
    """Best-effort (VMEM capacity bytes, TensorCores per chip). Conservative fallbacks."""
    vmem = 64 * 1024 * 1024          # v7x per-core VMEM; safe lower bound for all gens
    cores = 1                        # v5e / v6e are single-TC
    try:
        info = pltpu.get_tpu_info()
        cap = getattr(info, "vmem_capacity_bytes", None)
        if cap:
            vmem = int(cap)
        for name in ("tensorcore_count", "num_tensorcores", "core_count", "num_cores"):
            c = getattr(info, name, None)
            if isinstance(c, int) and c > 0:
                cores = c
                break
    except Exception:
        pass
    return vmem, cores


def _choose_tiling(B, S, V, E, H, Cp, vmem_budget, n_cores, cap=1024):
    """Largest batch tile (multiple of 8, <= cap) whose working set fits vmem_budget."""
    # Resident (constant index_map) blocks; default pipelining double-buffers them.
    fixed = 2 * (V * E * 2 + E * H * 2 + H * 4 + H * Cp * 2 + Cp * 4)
    # Per batch-row bytes: pipelined I/O blocks (x2 buffers) + in-kernel temporaries.
    per_row = 2 * (S * 4 + 4 + Cp * 4) + (S * V * 4 + V * 4 + E * 4 + H * 4 + Cp * 4)
    avail = max(vmem_budget - fixed, 8 * per_row)
    max_rows = min(cap, max(8, (avail // per_row) // 8 * 8))

    b8 = ((B + 7) // 8) * 8
    tile = min(b8, max_rows)
    if n_cores >= 2 and tile >= b8 and b8 >= 16:
        # Keep >= 2 grid steps only when there is a second TensorCore to feed (v7x).
        tile = ((b8 // 2 + 7) // 8) * 8
    b_padded = ((B + tile - 1) // tile) * tile
    return tile, b_padded


def dan_forward(tokens, lengths, emb_table, params, *, pad_idx=0, lane=128):
    """tokens: [B, S] int32 ids, lengths: [B] float, emb_table: [V, E] bf16."""
    B, S = tokens.shape
    V, E = emb_table.shape
    H = params["w1"].shape[1]
    C = params["wc"].shape[1]
    Cp = ((C + lane - 1) // lane) * lane

    vmem_cap, n_cores = _tpu_vmem_and_cores()
    vmem_limit = int(vmem_cap * 0.85)
    tile_b, Bp = _choose_tiling(B, S, V, E, H, Cp, int(vmem_limit * 0.9), n_cores)

    # Exact 1/length (multiply is cheaper than an in-kernel divide).
    inv_len = (1.0 / lengths.astype(jnp.float32)).reshape(B, 1)
    # Pad batch to a multiple of the tile (pad rows: PAD tokens, 1/len = 1; sliced off).
    if Bp != B:
        tokens = jnp.pad(tokens, ((0, Bp - B), (0, 0)), constant_values=pad_idx)
        inv_len = jnp.pad(inv_len, ((0, Bp - B), (0, 0)), constant_values=1.0)

    # Fold eval-mode BatchNorm1d (+ bias) into the weights, then cast matrices to bf16
    # for the MXU (f32 accumulation happens in-kernel).
    w1f, b1f = _fold_linear_bn(params["w1"], params["b1"],
                               params["bn1_gamma"], params["bn1_beta"],
                               params["bn1_mean"], params["bn1_var"])
    wcf, bcf = _fold_linear_bn(params["wc"], params["bc"],
                               params["bn2_gamma"], params["bn2_beta"],
                               params["bn2_mean"], params["bn2_var"])
    if Cp != C:   # lane-dense classifier output
        wcf = jnp.pad(wcf, ((0, 0), (0, Cp - C)))
        bcf = jnp.pad(bcf, ((0, Cp - C),))
    w1_bf = w1f.astype(jnp.bfloat16)
    wc_bf = wcf.astype(jnp.bfloat16)
    b1f = b1f.reshape(1, H)
    bcf = bcf.reshape(1, Cp)

    full = lambda i: (0, 0)   # resident whole-array block across all grid steps

    cost = pl.CostEstimate(
        flops=2 * Bp * (V * E + E * H + H * Cp),
        transcendentals=Bp * H,
        bytes_accessed=(Bp * S * 4 + Bp * 4 + V * E * 2 + E * H * 2
                        + H * Cp * 2 + (H + Cp) * 4 + Bp * Cp * 4),
    )

    out = pl.pallas_call(
        dan_kernel,
        out_shape=jax.ShapeDtypeStruct((Bp, Cp), jnp.float32),
        grid_spec=pltpu.PrefetchScalarGridSpec(
            num_scalar_prefetch=0,
            grid=(Bp // tile_b,),
            in_specs=[
                pl.BlockSpec((tile_b, S), lambda i: (i, 0)),   # token ids (int32)
                pl.BlockSpec((tile_b, 1), lambda i: (i, 0)),   # 1/length
                pl.BlockSpec((V, E), full),                    # bf16 embedding table
                pl.BlockSpec((E, H), full),                    # folded W1 (bf16)
                pl.BlockSpec((1, H), full),                    # folded b1 (f32)
                pl.BlockSpec((H, Cp), full),                   # folded Wc (bf16, padded)
                pl.BlockSpec((1, Cp), full),                   # folded bc (f32, padded)
            ],
            out_specs=pl.BlockSpec((tile_b, Cp), lambda i: (i, 0)),
        ),
        compiler_params=pltpu.CompilerParams(
            dimension_semantics=("parallel",),       # megacore-shardable on v7x
            vmem_limit_bytes=vmem_limit),
        cost_estimate=cost,
    )(tokens, inv_len, emb_table, w1_bf, b1f, wc_bf, bcf)

    return out[:B, :C]


def reference_forward(tokens, lengths, emb_table, params, eps=1e-5):
    emb = jnp.take(emb_table, tokens, axis=0).astype(jnp.float32)   # [B, S, E]
    pooled = emb.sum(axis=1) / lengths[:, None].astype(jnp.float32)
    h = pooled @ params["w1"] + params["b1"]
    h = (h - params["bn1_mean"]) / jnp.sqrt(params["bn1_var"] + eps) \
        * params["bn1_gamma"] + params["bn1_beta"]
    h = jnp.where(h > 0, h, jnp.exp(jnp.minimum(h, 0.0)) - 1.0)
    o = h @ params["wc"] + params["bc"]
    o = (o - params["bn2_mean"]) / jnp.sqrt(params["bn2_var"] + eps) \
        * params["bn2_gamma"] + params["bn2_beta"]
    return o


if __name__ == "__main__":
    # Small shapes consistent with the module (emb_dim / n_hidden_units / n_classes
    # scaled down), lane-dense so the kernel exercises the intended fast path.
    B, S = 64, 16            # batch, seq_len
    VOCAB = 512              # text vocab size
    E, H, C = 128, 256, 100  # emb_dim, n_hidden_units, n_classes
    PAD = 0

    key = jax.random.PRNGKey(0)
    ks = jax.random.split(key, 12)

    # Embedding table stored in bf16; padding_idx row is zero (nn.Embedding semantics).
    emb_table = (0.1 * jax.random.normal(ks[0], (VOCAB, E), jnp.float32)).astype(jnp.bfloat16)
    emb_table = emb_table.at[PAD].set(0.0)

    # Token indices and lengths; positions >= length are PAD.
    lengths_i = jax.random.randint(ks[1], (B,), 1, S + 1)
    tokens = jax.random.randint(ks[2], (B, S), 1, VOCAB)
    pos = jnp.arange(S)[None, :]
    tokens = jnp.where(pos < lengths_i[:, None], tokens, PAD).astype(jnp.int32)
    lengths = lengths_i.astype(jnp.float32)

    params = {
        "w1": 0.05 * jax.random.normal(ks[3], (E, H), jnp.float32),
        "b1": 0.05 * jax.random.normal(ks[4], (H,), jnp.float32),
        "bn1_gamma": 1.0 + 0.1 * jax.random.normal(ks[5], (H,), jnp.float32),
        "bn1_beta": 0.1 * jax.random.normal(ks[6], (H,), jnp.float32),
        "bn1_mean": 0.05 * jax.random.normal(ks[7], (H,), jnp.float32),
        "bn1_var": jnp.ones((H,), jnp.float32) + 0.1 * jax.random.uniform(ks[8], (H,)),
        "wc": 0.05 * jax.random.normal(ks[9], (H, C), jnp.float32),
        "bc": 0.05 * jax.random.normal(ks[10], (C,), jnp.float32),
        "bn2_gamma": jnp.ones((C,), jnp.float32),
        "bn2_beta": jnp.zeros((C,), jnp.float32),
        "bn2_mean": jnp.zeros((C,), jnp.float32),
        "bn2_var": jnp.ones((C,), jnp.float32) + 0.05 * jax.random.uniform(ks[11], (C,)),
    }

    out = dan_forward(tokens, lengths, emb_table, params, pad_idx=PAD)
    out = jax.block_until_ready(out)

    ref = reference_forward(tokens, lengths, emb_table, params)
    # Tolerance covers the bf16 MXU weight cast (reference keeps f32 weights).
    np.testing.assert_allclose(np.asarray(out), np.asarray(ref), rtol=2e-2, atol=2e-3)

    print("KERNEL_OK")
</pallas_src>

<mosaic_0001>
module attributes {stable_mosaic.version = 11 : i64} {
  func.func @dan_kernel(%arg0: i32, %arg1: memref<64x16xi32, #tpu.memory_space<vmem>>, %arg2: memref<64x1xf32, #tpu.memory_space<vmem>>, %arg3: memref<512x128xbf16, #tpu.memory_space<vmem>>, %arg4: memref<128x256xbf16, #tpu.memory_space<vmem>>, %arg5: memref<1x256xf32, #tpu.memory_space<vmem>>, %arg6: memref<256x128xbf16, #tpu.memory_space<vmem>>, %arg7: memref<1x128xf32, #tpu.memory_space<vmem>>, %arg8: memref<64x128xf32, #tpu.memory_space<vmem>>) attributes {dimension_semantics = [#tpu.dimension_semantics<parallel>], iteration_bounds = array<i64: 1>, scalar_prefetch = 0 : i64, scratch_operands = 0 : i64, tpu.core_type = #tpu.core_type<tc>, window_params = [{transform_indices = @transform_0, window_bounds = array<i64: 64, 16>}, {transform_indices = @transform_1, window_bounds = array<i64: 64, 1>}, {pipeline_mode = #tpu.pipeline_mode<synchronous>, transform_indices = @transform_2, window_bounds = array<i64: 512, 128>}, {pipeline_mode = #tpu.pipeline_mode<synchronous>, transform_indices = @transform_3, window_bounds = array<i64: 128, 256>}, {pipeline_mode = #tpu.pipeline_mode<synchronous>, transform_indices = @transform_4, window_bounds = array<i64: 1, 256>}, {pipeline_mode = #tpu.pipeline_mode<synchronous>, transform_indices = @transform_5, window_bounds = array<i64: 256, 128>}, {pipeline_mode = #tpu.pipeline_mode<synchronous>, transform_indices = @transform_6, window_bounds = array<i64: 1, 128>}, {transform_indices = @transform_7, window_bounds = array<i64: 64, 128>}]} {
    %c0 = arith.constant 0 : index
    %c0_0 = arith.constant 0 : index
    %0 = vector.load %arg1[%c0, %c0_0] : memref<64x16xi32, #tpu.memory_space<vmem>>, vector<64x16xi32>
    %1 = tpu.iota {dimensions = array<i32: 2>} : vector<64x16x512xi32>
    %2 = vector.shape_cast %0 : vector<64x16xi32> to vector<64x16x1xi32>
    %3 = vector.broadcast %2 : vector<64x16x1xi32> to vector<64x16x512xi32>
    %4 = arith.cmpi eq, %3, %1 : vector<64x16x512xi32>
    %5 = arith.extui %4 : vector<64x16x512xi1> to vector<64x16x512xi32>
    %6 = arith.sitofp %5 : vector<64x16x512xi32> to vector<64x16x512xf32>
    %cst = arith.constant dense<0.000000e+00> : vector<64x512xf32>
    %7 = vector.multi_reduction <add>, %6, %cst [1] : vector<64x16x512xf32> to vector<64x512xf32>
    %8 = arith.truncf %7 : vector<64x512xf32> to vector<64x512xbf16>
    %c0_1 = arith.constant 0 : index
    %c0_2 = arith.constant 0 : index
    %9 = vector.load %arg3[%c0_1, %c0_2] : memref<512x128xbf16, #tpu.memory_space<vmem>>, vector<512x128xbf16>
    %cst_3 = arith.constant dense<0.000000e+00> : vector<64x128xf32>
    %10 = tpu.matmul %8, %9, %cst_3 {dimension_numbers = #tpu.dot_dimension_numbers<[1], [0], [0], [1], [0, 0, 1, 1], [], []>} : vector<64x512xbf16>, vector<512x128xbf16>, vector<64x128xf32> -> vector<64x128xf32>
    %c0_4 = arith.constant 0 : index
    %c0_5 = arith.constant 0 : index
    %11 = vector.load %arg2[%c0_4, %c0_5] : memref<64x1xf32, #tpu.memory_space<vmem>>, vector<64x1xf32>
    %12 = vector.broadcast %11 : vector<64x1xf32> to vector<64x128xf32>
    %13 = arith.mulf %10, %12 : vector<64x128xf32>
    %14 = arith.truncf %13 : vector<64x128xf32> to vector<64x128xbf16>
    %c0_6 = arith.constant 0 : index
    %c0_7 = arith.constant 0 : index
    %15 = vector.load %arg4[%c0_6, %c0_7] : memref<128x256xbf16, #tpu.memory_space<vmem>>, vector<128x256xbf16>
    %cst_8 = arith.constant dense<0.000000e+00> : vector<64x256xf32>
    %16 = tpu.matmul %14, %15, %cst_8 {dimension_numbers = #tpu.dot_dimension_numbers<[1], [0], [0], [1], [0, 0, 1, 1], [], []>} : vector<64x128xbf16>, vector<128x256xbf16>, vector<64x256xf32> -> vector<64x256xf32>
    %c0_9 = arith.constant 0 : index
    %c0_10 = arith.constant 0 : index
    %17 = vector.load %arg5[%c0_9, %c0_10] : memref<1x256xf32, #tpu.memory_space<vmem>>, vector<1x256xf32>
    %18 = vector.broadcast %17 : vector<1x256xf32> to vector<64x256xf32>
    %19 = arith.addf %16, %18 : vector<64x256xf32>
    %cst_11 = arith.constant 0.000000e+00 : f32
    %20 = vector.broadcast %cst_11 : f32 to vector<64x256xf32>
    %21 = arith.cmpf ogt, %19, %20 : vector<64x256xf32>
    %cst_12 = arith.constant 0.000000e+00 : f32
    %22 = vector.broadcast %cst_12 : f32 to vector<64x256xf32>
    %23 = arith.minimumf %19, %22 : vector<64x256xf32>
    %24 = math.exp %23 : vector<64x256xf32>
    %cst_13 = arith.constant 1.000000e+00 : f32
    %25 = vector.broadcast %cst_13 : f32 to vector<64x256xf32>
    %26 = arith.subf %24, %25 : vector<64x256xf32>
    %27 = arith.select %21, %19, %26 : vector<64x256xi1>, vector<64x256xf32>
    %28 = arith.truncf %27 : vector<64x256xf32> to vector<64x256xbf16>
    %c0_14 = arith.constant 0 : index
    %c0_15 = arith.constant 0 : index
    %29 = vector.load %arg6[%c0_14, %c0_15] : memref<256x128xbf16, #tpu.memory_space<vmem>>, vector<256x128xbf16>
    %cst_16 = arith.constant dense<0.000000e+00> : vector<64x128xf32>
    %30 = tpu.matmul %28, %29, %cst_16 {dimension_numbers = #tpu.dot_dimension_numbers<[1], [0], [0], [1], [0, 0, 1, 1], [], []>} : vector<64x256xbf16>, vector<256x128xbf16>, vector<64x128xf32> -> vector<64x128xf32>
    %c0_17 = arith.constant 0 : index
    %c0_18 = arith.constant 0 : index
    %31 = vector.load %arg7[%c0_17, %c0_18] : memref<1x128xf32, #tpu.memory_space<vmem>>, vector<1x128xf32>
    %32 = vector.broadcast %31 : vector<1x128xf32> to vector<64x128xf32>
    %33 = arith.addf %30, %32 : vector<64x128xf32>
    %c0_19 = arith.constant 0 : index
    %c0_20 = arith.constant 0 : index
    %34 = vector.load %arg8[%c0_19, %c0_20] : memref<64x128xf32, #tpu.memory_space<vmem>>, vector<64x128xf32>
    tpu.vector_store %arg8[%c0_19, %c0_20], %33 {strides = array<i32>} : memref<64x128xf32, #tpu.memory_space<vmem>>, vector<64x128xf32>,
    return
  }
  func.func @transform_0(%arg0: i32) -> (i32, i32) {
    %c0_i32 = arith.constant 0 : i32
    %c0_i32_0 = arith.constant 0 : i32
    return %arg0, %c0_i32 : i32, i32
  }
  func.func @transform_1(%arg0: i32) -> (i32, i32) {
    %c0_i32 = arith.constant 0 : i32
    %c0_i32_0 = arith.constant 0 : i32
    return %arg0, %c0_i32 : i32, i32
  }
  func.func @transform_2(%arg0: i32) -> (i32, i32) {
    %c0_i32 = arith.constant 0 : i32
    %c0_i32_0 = arith.constant 0 : i32
    %c0_i32_1 = arith.constant 0 : i32
    return %c0_i32, %c0_i32_0 : i32, i32
  }
  func.func @transform_3(%arg0: i32) -> (i32, i32) {
    %c0_i32 = arith.constant 0 : i32
    %c0_i32_0 = arith.constant 0 : i32
    %c0_i32_1 = arith.constant 0 : i32
    return %c0_i32, %c0_i32_0 : i32, i32
  }
  func.func @transform_4(%arg0: i32) -> (i32, i32) {
    %c0_i32 = arith.constant 0 : i32
    %c0_i32_0 = arith.constant 0 : i32
    %c0_i32_1 = arith.constant 0 : i32
    return %c0_i32, %c0_i32_0 : i32, i32
  }
  func.func @transform_5(%arg0: i32) -> (i32, i32) {
    %c0_i32 = arith.constant 0 : i32
    %c0_i32_0 = arith.constant 0 : i32
    %c0_i32_1 = arith.constant 0 : i32
    return %c0_i32, %c0_i32_0 : i32, i32
  }
  func.func @transform_6(%arg0: i32) -> (i32, i32) {
    %c0_i32 = arith.constant 0 : i32
    %c0_i32_0 = arith.constant 0 : i32
    %c0_i32_1 = arith.constant 0 : i32
    return %c0_i32, %c0_i32_0 : i32, i32
  }
  func.func @transform_7(%arg0: i32) -> (i32, i32) {
    %c0_i32 = arith.constant 0 : i32
    %c0_i32_0 = arith.constant 0 : i32
    return %arg0, %c0_i32 : i32, i32
  }
}

</mosaic_0001>

<llo_original>
// kernel: tpu_custom_call.1
$region0: #{tpu_custom_call.1}
  #allocation0 [shape = 'u32[]', space=smem, size = 0x4, offset = 0x4, fixed_abs, tag = 'smem constant byte address 0x4 - core index']
  #allocation1 [shape = 'u32[144,128]{1,0:T(1,128)}', space=vmem, size = 0x12000, scoped, tag = 'internal scratch']
  %s0 = inlined_call_operand.vmem [shape: s32[64,16], index: 0, kind: input, shape index: {}]
  %s1 = inlined_call_operand.vmem [shape: f32[64,1], index: 1, kind: input, shape index: {}]
  %s2 = inlined_call_operand.hbm [shape: bf16[512,128], index: 2, kind: input, shape index: {}]
  %s3 = inlined_call_operand.vmem [shape: bf16[128,256], index: 3, kind: input, shape index: {}]
  %s4 = inlined_call_operand.vmem [shape: f32[1,256], index: 4, kind: input, shape index: {}]
  %s5 = inlined_call_operand.hbm [shape: bf16[256,128], index: 5, kind: input, shape index: {}]
  %s6 = inlined_call_operand.vmem [shape: f32[1,128], index: 6, kind: input, shape index: {}]
  %s7 = inlined_call_operand.hbm [shape: f32[64,128], index: 7, kind: output, shape index: {}]
  %s8 = sld [smem:[#allocation0]]
  $region46: #{tpu_custom_call.1} parent=0
    _
  %s10 = ssub.s32 1, %s8
  %s11 = scalar_select 0, %s10, %s8
  $region1: #{tpu_custom_call.1} parent=0
    #allocation2 [shape = 'u8[131072]{0}', space=vmem, size = 0x20000, scoped, tag = 'input window, operand 2, single buffered']
    #allocation3 [shape = 's32[1]{0}', space=sflag, size = 0x4, scoped, tag = 'scoped memory for tpu_custom_call.1']
    #allocation4 [shape = 's32[1]{0}', space=sflag, size = 0x4, scoped, tag = 'scoped memory for tpu_custom_call.1']
    #allocation5 [shape = 'u8[65536]{0}', space=vmem, size = 0x10000, scoped, tag = 'input window, operand 5, single buffered']
    #allocation6 [shape = 's32[1]{0}', space=sflag, size = 0x4, scoped, tag = 'scoped memory for tpu_custom_call.1']
    #allocation7 [shape = 'u8[32768]{0}', space=vmem, size = 0x8000, scoped, tag = 'output window, operand 0, single buffered']
    %12 = vsyncpa [#allocation3], 0
    %13 = vsyncpa [#allocation6], 0
    %14 = vsyncpa [#allocation4], 0
    // Predicated region
    $region2: #{tpu_custom_call.1} parent=1 // pred_check
      _
    $region3: #{tpu_custom_call.1} parent=1 // pred_check_branch
      %16 = sbr.rel (0) target = $region5
    $region4: #{tpu_custom_call.1} parent=1 // pred_region
      _
    $region5: #{tpu_custom_call.1} parent=1 // pred_fallthru
      _
    // Predicated region
    $region6: #{tpu_custom_call.1} parent=1 // pred_check
      _
    $region7: #{tpu_custom_call.1} parent=1 // pred_check_branch
      %18 = sbr.rel (0) target = $region9
    $region8: #{tpu_custom_call.1} parent=1 // pred_region
      _
    $region9: #{tpu_custom_call.1} parent=1 // pred_fallthru
      _
    // Predicated region
    $region10: #{tpu_custom_call.1} parent=1 // pred_check
      _
    $region11: #{tpu_custom_call.1} parent=1 // pred_check_branch
      %20 = sbr.rel (0) target = $region13
    $region12: #{tpu_custom_call.1} parent=1 // pred_region
      %s22 = ssub.s32 4096, 4096
      %23 = vsyncadd [#allocation3], %s22
      %s24 = sshll.u32 [#allocation2], 4
      %s25 = int_to_ptr.vmem [resolvable:$true] %s24
      %30 = dma.hbm_to_vmem [thread:$0]  %s2, 4096, %s25, [#allocation3], 64, 64, 4
    $region13: #{tpu_custom_call.1} parent=1 // pred_fallthru
      _
    // Predicated region
    $region14: #{tpu_custom_call.1} parent=1 // pred_check
      _
    $region15: #{tpu_custom_call.1} parent=1 // pred_check_branch
      %32 = sbr.rel (0) target = $region17
    $region16: #{tpu_custom_call.1} parent=1 // pred_region
      _
    $region17: #{tpu_custom_call.1} parent=1 // pred_fallthru
      _
    // Predicated region
    $region18: #{tpu_custom_call.1} parent=1 // pred_check
      _
    $region19: #{tpu_custom_call.1} parent=1 // pred_check_branch
      %34 = sbr.rel (0) target = $region21
    $region20: #{tpu_custom_call.1} parent=1 // pred_region
      _
    $region21: #{tpu_custom_call.1} parent=1 // pred_fallthru
      _
    // Predicated region
    $region22: #{tpu_custom_call.1} parent=1 // pred_check
      _
    $region23: #{tpu_custom_call.1} parent=1 // pred_check_branch
      %36 = sbr.rel (0) target = $region25
    $region24: #{tpu_custom_call.1} parent=1 // pred_region
      %s38 = ssub.s32 2048, 2048
      %39 = vsyncadd [#allocation6], %s38
      %s40 = sshll.u32 [#allocation5], 4
      %s41 = int_to_ptr.vmem [resolvable:$true] %s40
      %46 = dma.hbm_to_vmem [thread:$0]  %s5, 2048, %s41, [#allocation6], 64, 64, 4
    $region25: #{tpu_custom_call.1} parent=1 // pred_fallthru
      _
    // Predicated region
    $region26: #{tpu_custom_call.1} parent=1 // pred_check
      _
    $region27: #{tpu_custom_call.1} parent=1 // pred_check_branch
      %48 = sbr.rel (0) target = $region29
    $region28: #{tpu_custom_call.1} parent=1 // pred_region
      _
    $region29: #{tpu_custom_call.1} parent=1 // pred_fallthru
      _
    // Predicated region
    $region30: #{tpu_custom_call.1} parent=1 // pred_check
      _
    $region31: #{tpu_custom_call.1} parent=1 // pred_check_branch
      %50 = sbr.rel (0) target = $region33
    $region32: #{tpu_custom_call.1} parent=1 // pred_region
      %51 = dma.done [#allocation3], 4096
    $region33: #{tpu_custom_call.1} parent=1 // pred_fallthru
      _
    // Predicated region
    $region34: #{tpu_custom_call.1} parent=1 // pred_check
      _
    $region35: #{tpu_custom_call.1} parent=1 // pred_check_branch
      %53 = sbr.rel (0) target = $region37
    $region36: #{tpu_custom_call.1} parent=1 // pred_region
      %54 = dma.done [#allocation6], 2048
    $region37: #{tpu_custom_call.1} parent=1 // pred_fallthru
      _
    %v56 = vld [vmem:[%s0] sm:$0xff]
    %v57 = vld [vmem:[%s0 + $0x8] sm:$0xff]
    %v58 = vld [vmem:[%s0 + $0x10] sm:$0xff]
    %v59 = vld [vmem:[%s0 + $0x18] sm:$0xff]
    %v60 = vld [vmem:[%s0 + $0x20] sm:$0xff]
    %v61 = vld [vmem:[%s0 + $0x28] sm:$0xff]
    %v62 = vld [vmem:[%s0 + $0x30] sm:$0xff]
    %v63 = vld [vmem:[%s0 + $0x38] sm:$0xff]
    %v64 = vlaneseq
    %v65 = vand.u32 %v64, 127
    %v66 = vadd.s32 %v65, 128
    %v67 = vadd.s32 %v65, 256
    %v68 = vadd.s32 %v65, 384
    %v69 = vlaneseq
    %v70 = vshrl.u32 %v69, 7
    %v71 = vsub.s32 0, %v70
    %v72 = vrot.slane %v56, %v71
    %74 = vbcast.lane.b32.xlu0 %v72, 256
    %v75 = vpop.permute.xlu0 %74
    %s77 = sor.u32 256, 8
    %78 = vbcast.lane.b32.xlu0 %v72, %s77
    %v79 = vpop.permute.xlu0 %78
    %v80 = vlaneseq
    %v81 = vshrl.u32 %v80, 7
    %v82 = vsub.s32 1, %v81
    %v83 = vrot.slane %v56, %v82
    %85 = vbcast.lane.b32.xlu0 %v83, 256
    %v86 = vpop.permute.xlu0 %85
    %s88 = sor.u32 256, 8
    %89 = vbcast.lane.b32.xlu0 %v83, %s88
    %v90 = vpop.permute.xlu0 %89
    %v91 = vlaneseq
    %v92 = vshrl.u32 %v91, 7
    %v93 = vsub.s32 2, %v92
    %v94 = vrot.slane %v56, %v93
    %96 = vbcast.lane.b32.xlu0 %v94, 256
    %v97 = vpop.permute.xlu0 %96
    %s99 = sor.u32 256, 8
    %100 = vbcast.lane.b32.xlu0 %v94, %s99
    %v101 = vpop.permute.xlu0 %100
    %v102 = vlaneseq
    %v103 = vshrl.u32 %v102, 7
    %v104 = vsub.s32 3, %v103
    %v105 = vrot.slane %v56, %v104
    %107 = vbcast.lane.b32.xlu0 %v105, 256
    %v108 = vpop.permute.xlu0 %107
    %s110 = sor.u32 256, 8
    %111 = vbcast.lane.b32.xlu0 %v105, %s110
    %v112 = vpop.permute.xlu0 %111
    %v113 = vlaneseq
    %v114 = vshrl.u32 %v113, 7
    %v115 = vsub.s32 4, %v114
    %v116 = vrot.slane %v56, %v115
    %118 = vbcast.lane.b32.xlu0 %v116, 256
    %v119 = vpop.permute.xlu0 %118
    %s121 = sor.u32 256, 8
    %122 = vbcast.lane.b32.xlu0 %v116, %s121
    %v123 = vpop.permute.xlu0 %122
    %v124 = vlaneseq
    %v125 = vshrl.u32 %v124, 7
    %v126 = vsub.s32 5, %v125
    %v127 = vrot.slane %v56, %v126
    %129 = vbcast.lane.b32.xlu0 %v127, 256
    %v130 = vpop.permute.xlu0 %129
    %s132 = sor.u32 256, 8
    %133 = vbcast.lane.b32.xlu0 %v127, %s132
    %v134 = vpop.permute.xlu0 %133
    %v135 = vlaneseq
    %v136 = vshrl.u32 %v135, 7
    %v137 = vsub.s32 6, %v136
    %v138 = vrot.slane %v56, %v137
    %140 = vbcast.lane.b32.xlu0 %v138, 256
    %v141 = vpop.permute.xlu0 %140
    %s143 = sor.u32 256, 8
    %144 = vbcast.lane.b32.xlu0 %v138, %s143
    %v145 = vpop.permute.xlu0 %144
    %v146 = vlaneseq
    %v147 = vshrl.u32 %v146, 7
    %v148 = vsub.s32 7, %v147
    %v149 = vrot.slane %v56, %v148
    %151 = vbcast.lane.b32.xlu0 %v149, 256
    %v152 = vpop.permute.xlu0 %151
    %s154 = sor.u32 256, 8
    %155 = vbcast.lane.b32.xlu0 %v149, %s154
    %v156 = vpop.permute.xlu0 %155
    %v157 = vlaneseq
    %v158 = vshrl.u32 %v157, 7
    %v159 = vsub.s32 0, %v158
    %v160 = vrot.slane %v57, %v159
    %162 = vbcast.lane.b32.xlu0 %v160, 256
    %v163 = vpop.permute.xlu0 %162
    %s165 = sor.u32 256, 8
    %166 = vbcast.lane.b32.xlu0 %v160, %s165
    %v167 = vpop.permute.xlu0 %166
    %v168 = vlaneseq
    %v169 = vshrl.u32 %v168, 7
    %v170 = vsub.s32 1, %v169
    %v171 = vrot.slane %v57, %v170
    %173 = vbcast.lane.b32.xlu0 %v171, 256
    %v174 = vpop.permute.xlu0 %173
    %s176 = sor.u32 256, 8
    %177 = vbcast.lane.b32.xlu0 %v171, %s176
    %v178 = vpop.permute.xlu0 %177
    %v179 = vlaneseq
    %v180 = vshrl.u32 %v179, 7
    %v181 = vsub.s32 2, %v180
    %v182 = vrot.slane %v57, %v181
    %184 = vbcast.lane.b32.xlu0 %v182, 256
    %v185 = vpop.permute.xlu0 %184
    %s187 = sor.u32 256, 8
    %188 = vbcast.lane.b32.xlu0 %v182, %s187
    %v189 = vpop.permute.xlu0 %188
    %v190 = vlaneseq
    %v191 = vshrl.u32 %v190, 7
    %v192 = vsub.s32 3, %v191
    %v193 = vrot.slane %v57, %v192
    %195 = vbcast.lane.b32.xlu0 %v193, 256
    %v196 = vpop.permute.xlu0 %195
    %s198 = sor.u32 256, 8
    %199 = vbcast.lane.b32.xlu0 %v193, %s198
    %v200 = vpop.permute.xlu0 %199
    %v201 = vlaneseq
    %v202 = vshrl.u32 %v201, 7
    %v203 = vsub.s32 4, %v202
    %v204 = vrot.slane %v57, %v203
    %206 = vbcast.lane.b32.xlu0 %v204, 256
    %v207 = vpop.permute.xlu0 %206
    %s209 = sor.u32 256, 8
    %210 = vbcast.lane.b32.xlu0 %v204, %s209
    %v211 = vpop.permute.xlu0 %210
    %v212 = vlaneseq
    %v213 = vshrl.u32 %v212, 7
    %v214 = vsub.s32 5, %v213
    %v215 = vrot.slane %v57, %v214
    %217 = vbcast.lane.b32.xlu0 %v215, 256
    %v218 = vpop.permute.xlu0 %217
    %s220 = sor.u32 256, 8
    %221 = vbcast.lane.b32.xlu0 %v215, %s220
    %v222 = vpop.permute.xlu0 %221
    %v223 = vlaneseq
    %v224 = vshrl.u32 %v223, 7
    %v225 = vsub.s32 6, %v224
    %v226 = vrot.slane %v57, %v225
    %228 = vbcast.lane.b32.xlu0 %v226, 256
    %v229 = vpop.permute.xlu0 %228
    %s231 = sor.u32 256, 8
    %232 = vbcast.lane.b32.xlu0 %v226, %s231
    %v233 = vpop.permute.xlu0 %232
    %v234 = vlaneseq
    %v235 = vshrl.u32 %v234, 7
    %v236 = vsub.s32 7, %v235
    %v237 = vrot.slane %v57, %v236
    %239 = vbcast.lane.b32.xlu0 %v237, 256
    %v240 = vpop.permute.xlu0 %239
    %s242 = sor.u32 256, 8
    %243 = vbcast.lane.b32.xlu0 %v237, %s242
    %v244 = vpop.permute.xlu0 %243
    %v245 = vlaneseq
    %v246 = vshrl.u32 %v245, 7
    %v247 = vsub.s32 0, %v246
    %v248 = vrot.slane %v58, %v247
    %250 = vbcast.lane.b32.xlu0 %v248, 256
    %v251 = vpop.permute.xlu0 %250
    %s253 = sor.u32 256, 8
    %254 = vbcast.lane.b32.xlu0 %v248, %s253
    %v255 = vpop.permute.xlu0 %254
    %v256 = vlaneseq
    %v257 = vshrl.u32 %v256, 7
    %v258 = vsub.s32 1, %v257
    %v259 = vrot.slane %v58, %v258
    %261 = vbcast.lane.b32.xlu0 %v259, 256
    %v262 = vpop.permute.xlu0 %261
    %s264 = sor.u32 256, 8
    %265 = vbcast.lane.b32.xlu0 %v259, %s264
    %v266 = vpop.permute.xlu0 %265
    %v267 = vlaneseq
    %v268 = vshrl.u32 %v267, 7
    %v269 = vsub.s32 2, %v268
    %v270 = vrot.slane %v58, %v269
    %272 = vbcast.lane.b32.xlu0 %v270, 256
    %v273 = vpop.permute.xlu0 %272
    %s275 = sor.u32 256, 8
    %276 = vbcast.lane.b32.xlu0 %v270, %s275
    %v277 = vpop.permute.xlu0 %276
    %v278 = vlaneseq
    %v279 = vshrl.u32 %v278, 7
    %v280 = vsub.s32 3, %v279
    %v281 = vrot.slane %v58, %v280
    %283 = vbcast.lane.b32.xlu0 %v281, 256
    %v284 = vpop.permute.xlu0 %283
    %s286 = sor.u32 256, 8
    %287 = vbcast.lane.b32.xlu0 %v281, %s286
    %v288 = vpop.permute.xlu0 %287
    %v289 = vlaneseq
    %v290 = vshrl.u32 %v289, 7
    %v291 = vsub.s32 4, %v290
    %v292 = vrot.slane %v58, %v291
    %294 = vbcast.lane.b32.xlu0 %v292, 256
    %v295 = vpop.permute.xlu0 %294
    %s297 = sor.u32 256, 8
    %298 = vbcast.lane.b32.xlu0 %v292, %s297
    %v299 = vpop.permute.xlu0 %298
    %v300 = vlaneseq
    %v301 = vshrl.u32 %v300, 7
    %v302 = vsub.s32 5, %v301
    %v303 = vrot.slane %v58, %v302
    %305 = vbcast.lane.b32.xlu0 %v303, 256
    %v306 = vpop.permute.xlu0 %305
    %s308 = sor.u32 256, 8
    %309 = vbcast.lane.b32.xlu0 %v303, %s308
    %v310 = vpop.permute.xlu0 %309
    %v311 = vlaneseq
    %v312 = vshrl.u32 %v311, 7
    %v313 = vsub.s32 6, %v312
    %v314 = vrot.slane %v58, %v313
    %316 = vbcast.lane.b32.xlu0 %v314, 256
    %v317 = vpop.permute.xlu0 %316
    %s319 = sor.u32 256, 8
    %320 = vbcast.lane.b32.xlu0 %v314, %s319
    %v321 = vpop.permute.xlu0 %320
    %v322 = vlaneseq
    %v323 = vshrl.u32 %v322, 7
    %v324 = vsub.s32 7, %v323
    %v325 = vrot.slane %v58, %v324
    %327 = vbcast.lane.b32.xlu0 %v325, 256
    %v328 = vpop.permute.xlu0 %327
    %s330 = sor.u32 256, 8
    %331 = vbcast.lane.b32.xlu0 %v325, %s330
    %v332 = vpop.permute.xlu0 %331
    %v333 = vlaneseq
    %v334 = vshrl.u32 %v333, 7
    %v335 = vsub.s32 0, %v334
    %v336 = vrot.slane %v59, %v335
    %338 = vbcast.lane.b32.xlu0 %v336, 256
    %v339 = vpop.permute.xlu0 %338
    %s341 = sor.u32 256, 8
    %342 = vbcast.lane.b32.xlu0 %v336, %s341
    %v343 = vpop.permute.xlu0 %342
    %v344 = vlaneseq
    %v345 = vshrl.u32 %v344, 7
    %v346 = vsub.s32 1, %v345
    %v347 = vrot.slane %v59, %v346
    %349 = vbcast.lane.b32.xlu0 %v347, 256
    %v350 = vpop.permute.xlu0 %349
    %s352 = sor.u32 256, 8
    %353 = vbcast.lane.b32.xlu0 %v347, %s352
    %v354 = vpop.permute.xlu0 %353
    %v355 = vlaneseq
    %v356 = vshrl.u32 %v355, 7
    %v357 = vsub.s32 2, %v356
    %v358 = vrot.slane %v59, %v357
    %360 = vbcast.lane.b32.xlu0 %v358, 256
    %v361 = vpop.permute.xlu0 %360
    %s363 = sor.u32 256, 8
    %364 = vbcast.lane.b32.xlu0 %v358, %s363
    %v365 = vpop.permute.xlu0 %364
    %v366 = vlaneseq
    %v367 = vshrl.u32 %v366, 7
    %v368 = vsub.s32 3, %v367
    %v369 = vrot.slane %v59, %v368
    %371 = vbcast.lane.b32.xlu0 %v369, 256
    %v372 = vpop.permute.xlu0 %371
    %s374 = sor.u32 256, 8
    %375 = vbcast.lane.b32.xlu0 %v369, %s374
    %v376 = vpop.permute.xlu0 %375
    %v377 = vlaneseq
    %v378 = vshrl.u32 %v377, 7
    %v379 = vsub.s32 4, %v378
    %v380 = vrot.slane %v59, %v379
    %382 = vbcast.lane.b32.xlu0 %v380, 256
    %v383 = vpop.permute.xlu0 %382
    %s385 = sor.u32 256, 8
    %386 = vbcast.lane.b32.xlu0 %v380, %s385
    %v387 = vpop.permute.xlu0 %386
    %v388 = vlaneseq
    %v389 = vshrl.u32 %v388, 7
    %v390 = vsub.s32 5, %v389
    %v391 = vrot.slane %v59, %v390
    %393 = vbcast.lane.b32.xlu0 %v391, 256
    %v394 = vpop.permute.xlu0 %393
    %s396 = sor.u32 256, 8
    %397 = vbcast.lane.b32.xlu0 %v391, %s396
    %v398 = vpop.permute.xlu0 %397
    %v399 = vlaneseq
    %v400 = vshrl.u32 %v399, 7
    %v401 = vsub.s32 6, %v400
    %v402 = vrot.slane %v59, %v401
    %404 = vbcast.lane.b32.xlu0 %v402, 256
    %v405 = vpop.permute.xlu0 %404
    %s407 = sor.u32 256, 8
    %408 = vbcast.lane.b32.xlu0 %v402, %s407
    %v409 = vpop.permute.xlu0 %408
    %v410 = vlaneseq
    %v411 = vshrl.u32 %v410, 7
    %v412 = vsub.s32 7, %v411
    %v413 = vrot.slane %v59, %v412
    %415 = vbcast.lane.b32.xlu0 %v413, 256
    %v416 = vpop.permute.xlu0 %415
    %s418 = sor.u32 256, 8
    %419 = vbcast.lane.b32.xlu0 %v413, %s418
    %v420 = vpop.permute.xlu0 %419
    %v421 = vlaneseq
    %v422 = vshrl.u32 %v421, 7
    %v423 = vsub.s32 0, %v422
    %v424 = vrot.slane %v60, %v423
    %426 = vbcast.lane.b32.xlu0 %v424, 256
    %v427 = vpop.permute.xlu0 %426
    %s429 = sor.u32 256, 8
    %430 = vbcast.lane.b32.xlu0 %v424, %s429
    %v431 = vpop.permute.xlu0 %430
    %v432 = vlaneseq
    %v433 = vshrl.u32 %v432, 7
    %v434 = vsub.s32 1, %v433
    %v435 = vrot.slane %v60, %v434
    %437 = vbcast.lane.b32.xlu0 %v435, 256
    %v438 = vpop.permute.xlu0 %437
    %s440 = sor.u32 256, 8
    %441 = vbcast.lane.b32.xlu0 %v435, %s440
    %v442 = vpop.permute.xlu0 %441
    %v443 = vlaneseq
    %v444 = vshrl.u32 %v443, 7
    %v445 = vsub.s32 2, %v444
    %v446 = vrot.slane %v60, %v445
    %448 = vbcast.lane.b32.xlu0 %v446, 256
    %v449 = vpop.permute.xlu0 %448
    %s451 = sor.u32 256, 8
    %452 = vbcast.lane.b32.xlu0 %v446, %s451
    %v453 = vpop.permute.xlu0 %452
    %v454 = vlaneseq
    %v455 = vshrl.u32 %v454, 7
    %v456 = vsub.s32 3, %v455
    %v457 = vrot.slane %v60, %v456
    %459 = vbcast.lane.b32.xlu0 %v457, 256
    %v460 = vpop.permute.xlu0 %459
    %s462 = sor.u32 256, 8
    %463 = vbcast.lane.b32.xlu0 %v457, %s462
    %v464 = vpop.permute.xlu0 %463
    %v465 = vlaneseq
    %v466 = vshrl.u32 %v465, 7
    %v467 = vsub.s32 4, %v466
    %v468 = vrot.slane %v60, %v467
    %470 = vbcast.lane.b32.xlu0 %v468, 256
    %v471 = vpop.permute.xlu0 %470
    %s473 = sor.u32 256, 8
    %474 = vbcast.lane.b32.xlu0 %v468, %s473
    %v475 = vpop.permute.xlu0 %474
    %v476 = vlaneseq
    %v477 = vshrl.u32 %v476, 7
    %v478 = vsub.s32 5, %v477
    %v479 = vrot.slane %v60, %v478
    %481 = vbcast.lane.b32.xlu0 %v479, 256
    %v482 = vpop.permute.xlu0 %481
    %s484 = sor.u32 256, 8
    %485 = vbcast.lane.b32.xlu0 %v479, %s484
    %v486 = vpop.permute.xlu0 %485
    %v487 = vlaneseq
    %v488 = vshrl.u32 %v487, 7
    %v489 = vsub.s32 6, %v488
    %v490 = vrot.slane %v60, %v489
    %492 = vbcast.lane.b32.xlu0 %v490, 256
    %v493 = vpop.permute.xlu0 %492
    %s495 = sor.u32 256, 8
    %496 = vbcast.lane.b32.xlu0 %v490, %s495
    %v497 = vpop.permute.xlu0 %496
    %v498 = vlaneseq
    %v499 = vshrl.u32 %v498, 7
    %v500 = vsub.s32 7, %v499
    %v501 = vrot.slane %v60, %v500
    %503 = vbcast.lane.b32.xlu0 %v501, 256
    %v504 = vpop.permute.xlu0 %503
    %s506 = sor.u32 256, 8
    %507 = vbcast.lane.b32.xlu0 %v501, %s506
    %v508 = vpop.permute.xlu0 %507
    %v509 = vlaneseq
    %v510 = vshrl.u32 %v509, 7
    %v511 = vsub.s32 0, %v510
    %v512 = vrot.slane %v61, %v511
    %514 = vbcast.lane.b32.xlu0 %v512, 256
    %v515 = vpop.permute.xlu0 %514
    %s517 = sor.u32 256, 8
    %518 = vbcast.lane.b32.xlu0 %v512, %s517
    %v519 = vpop.permute.xlu0 %518
    %v520 = vlaneseq
    %v521 = vshrl.u32 %v520, 7
    %v522 = vsub.s32 1, %v521
    %v523 = vrot.slane %v61, %v522
    %525 = vbcast.lane.b32.xlu0 %v523, 256
    %v526 = vpop.permute.xlu0 %525
    %s528 = sor.u32 256, 8
    %529 = vbcast.lane.b32.xlu0 %v523, %s528
    %v530 = vpop.permute.xlu0 %529
    %v531 = vlaneseq
    %v532 = vshrl.u32 %v531, 7
    %v533 = vsub.s32 2, %v532
    %v534 = vrot.slane %v61, %v533
    %536 = vbcast.lane.b32.xlu0 %v534, 256
    %v537 = vpop.permute.xlu0 %536
    %s539 = sor.u32 256, 8
    %540 = vbcast.lane.b32.xlu0 %v534, %s539
    %v541 = vpop.permute.xlu0 %540
    %v542 = vlaneseq
    %v543 = vshrl.u32 %v542, 7
    %v544 = vsub.s32 3, %v543
    %v545 = vrot.slane %v61, %v544
    %547 = vbcast.lane.b32.xlu0 %v545, 256
    %v548 = vpop.permute.xlu0 %547
    %s550 = sor.u32 256, 8
    %551 = vbcast.lane.b32.xlu0 %v545, %s550
    %v552 = vpop.permute.xlu0 %551
    %v553 = vlaneseq
    %v554 = vshrl.u32 %v553, 7
    %v555 = vsub.s32 4, %v554
    %v556 = vrot.slane %v61, %v555
    %558 = vbcast.lane.b32.xlu0 %v556, 256
    %v559 = vpop.permute.xlu0 %558
    %s561 = sor.u32 256, 8
    %562 = vbcast.lane.b32.xlu0 %v556, %s561
    %v563 = vpop.permute.xlu0 %562
    %v564 = vlaneseq
    %v565 = vshrl.u32 %v564, 7
    %v566 = vsub.s32 5, %v565
    %v567 = vrot.slane %v61, %v566
    %569 = vbcast.lane.b32.xlu0 %v567, 256
    %v570 = vpop.permute.xlu0 %569
    %s572 = sor.u32 256, 8
    %573 = vbcast.lane.b32.xlu0 %v567, %s572
    %v574 = vpop.permute.xlu0 %573
    %v575 = vlaneseq
    %v576 = vshrl.u32 %v575, 7
    %v577 = vsub.s32 6, %v576
    %v578 = vrot.slane %v61, %v577
    %580 = vbcast.lane.b32.xlu0 %v578, 256
    %v581 = vpop.permute.xlu0 %580
    %s583 = sor.u32 256, 8
    %584 = vbcast.lane.b32.xlu0 %v578, %s583
    %v585 = vpop.permute.xlu0 %584
    %v586 = vlaneseq
    %v587 = vshrl.u32 %v586, 7
    %v588 = vsub.s32 7, %v587
    %v589 = vrot.slane %v61, %v588
    %591 = vbcast.lane.b32.xlu0 %v589, 256
    %v592 = vpop.permute.xlu0 %591
    %s594 = sor.u32 256, 8
    %595 = vbcast.lane.b32.xlu0 %v589, %s594
    %v596 = vpop.permute.xlu0 %595
    %v597 = vlaneseq
    %v598 = vshrl.u32 %v597, 7
    %v599 = vsub.s32 0, %v598
    %v600 = vrot.slane %v62, %v599
    %602 = vbcast.lane.b32.xlu0 %v600, 256
    %v603 = vpop.permute.xlu0 %602
    %s605 = sor.u32 256, 8
    %606 = vbcast.lane.b32.xlu0 %v600, %s605
    %v607 = vpop.permute.xlu0 %606
    %v608 = vlaneseq
    %v609 = vshrl.u32 %v608, 7
    %v610 = vsub.s32 1, %v609
    %v611 = vrot.slane %v62, %v610
    %613 = vbcast.lane.b32.xlu0 %v611, 256
    %v614 = vpop.permute.xlu0 %613
    %s616 = sor.u32 256, 8
    %617 = vbcast.lane.b32.xlu0 %v611, %s616
    %v618 = vpop.permute.xlu0 %617
    %v619 = vlaneseq
    %v620 = vshrl.u32 %v619, 7
    %v621 = vsub.s32 2, %v620
    %v622 = vrot.slane %v62, %v621
    %624 = vbcast.lane.b32.xlu0 %v622, 256
    %v625 = vpop.permute.xlu0 %624
    %s627 = sor.u32 256, 8
    %628 = vbcast.lane.b32.xlu0 %v622, %s627
    %v629 = vpop.permute.xlu0 %628
    %v630 = vlaneseq
    %v631 = vshrl.u32 %v630, 7
    %v632 = vsub.s32 3, %v631
    %v633 = vrot.slane %v62, %v632
    %635 = vbcast.lane.b32.xlu0 %v633, 256
    %v636 = vpop.permute.xlu0 %635
    %s638 = sor.u32 256, 8
    %639 = vbcast.lane.b32.xlu0 %v633, %s638
    %v640 = vpop.permute.xlu0 %639
    %v641 = vlaneseq
    %v642 = vshrl.u32 %v641, 7
    %v643 = vsub.s32 4, %v642
    %v644 = vrot.slane %v62, %v643
    %646 = vbcast.lane.b32.xlu0 %v644, 256
    %v647 = vpop.permute.xlu0 %646
    %s649 = sor.u32 256, 8
    %650 = vbcast.lane.b32.xlu0 %v644, %s649
    %v651 = vpop.permute.xlu0 %650
    %v652 = vlaneseq
    %v653 = vshrl.u32 %v652, 7
    %v654 = vsub.s32 5, %v653
    %v655 = vrot.slane %v62, %v654
    %657 = vbcast.lane.b32.xlu0 %v655, 256
    %v658 = vpop.permute.xlu0 %657
    %s660 = sor.u32 256, 8
    %661 = vbcast.lane.b32.xlu0 %v655, %s660
    %v662 = vpop.permute.xlu0 %661
    %v663 = vlaneseq
    %v664 = vshrl.u32 %v663, 7
    %v665 = vsub.s32 6, %v664
    %v666 = vrot.slane %v62, %v665
    %668 = vbcast.lane.b32.xlu0 %v666, 256
    %v669 = vpop.permute.xlu0 %668
    %s671 = sor.u32 256, 8
    %672 = vbcast.lane.b32.xlu0 %v666, %s671
    %v673 = vpop.permute.xlu0 %672
    %v674 = vlaneseq
    %v675 = vshrl.u32 %v674, 7
    %v676 = vsub.s32 7, %v675
    %v677 = vrot.slane %v62, %v676
    %679 = vbcast.lane.b32.xlu0 %v677, 256
    %v680 = vpop.permute.xlu0 %679
    %s682 = sor.u32 256, 8
    %683 = vbcast.lane.b32.xlu0 %v677, %s682
    %v684 = vpop.permute.xlu0 %683
    %v685 = vlaneseq
    %v686 = vshrl.u32 %v685, 7
    %v687 = vsub.s32 0, %v686
    %v688 = vrot.slane %v63, %v687
    %690 = vbcast.lane.b32.xlu0 %v688, 256
    %v691 = vpop.permute.xlu0 %690
    %s693 = sor.u32 256, 8
    %694 = vbcast.lane.b32.xlu0 %v688, %s693
    %v695 = vpop.permute.xlu0 %694
    %v696 = vlaneseq
    %v697 = vshrl.u32 %v696, 7
    %v698 = vsub.s32 1, %v697
    %v699 = vrot.slane %v63, %v698
    %701 = vbcast.lane.b32.xlu0 %v699, 256
    %v702 = vpop.permute.xlu0 %701
    %s704 = sor.u32 256, 8
    %705 = vbcast.lane.b32.xlu0 %v699, %s704
    %v706 = vpop.permute.xlu0 %705
    %v707 = vlaneseq
    %v708 = vshrl.u32 %v707, 7
    %v709 = vsub.s32 2, %v708
    %v710 = vrot.slane %v63, %v709
    %712 = vbcast.lane.b32.xlu0 %v710, 256
    %v713 = vpop.permute.xlu0 %712
    %s715 = sor.u32 256, 8
    %716 = vbcast.lane.b32.xlu0 %v710, %s715
    %v717 = vpop.permute.xlu0 %716
    %v718 = vlaneseq
    %v719 = vshrl.u32 %v718, 7
    %v720 = vsub.s32 3, %v719
    %v721 = vrot.slane %v63, %v720
    %723 = vbcast.lane.b32.xlu0 %v721, 256
    %v724 = vpop.permute.xlu0 %723
    %s726 = sor.u32 256, 8
    %727 = vbcast.lane.b32.xlu0 %v721, %s726
    %v728 = vpop.permute.xlu0 %727
    %v729 = vlaneseq
    %v730 = vshrl.u32 %v729, 7
    %v731 = vsub.s32 4, %v730
    %v732 = vrot.slane %v63, %v731
    %734 = vbcast.lane.b32.xlu0 %v732, 256
    %v735 = vpop.permute.xlu0 %734
    %s737 = sor.u32 256, 8
    %738 = vbcast.lane.b32.xlu0 %v732, %s737
    %v739 = vpop.permute.xlu0 %738
    %v740 = vlaneseq
    %v741 = vshrl.u32 %v740, 7
    %v742 = vsub.s32 5, %v741
    %v743 = vrot.slane %v63, %v742
    %745 = vbcast.lane.b32.xlu0 %v743, 256
    %v746 = vpop.permute.xlu0 %745
    %s748 = sor.u32 256, 8
    %749 = vbcast.lane.b32.xlu0 %v743, %s748
    %v750 = vpop.permute.xlu0 %749
    %v751 = vlaneseq
    %v752 = vshrl.u32 %v751, 7
    %v753 = vsub.s32 6, %v752
    %v754 = vrot.slane %v63, %v753
    %756 = vbcast.lane.b32.xlu0 %v754, 256
    %v757 = vpop.permute.xlu0 %756
    %s759 = sor.u32 256, 8
    %760 = vbcast.lane.b32.xlu0 %v754, %s759
    %v761 = vpop.permute.xlu0 %760
    %v762 = vlaneseq
    %v763 = vshrl.u32 %v762, 7
    %v764 = vsub.s32 7, %v763
    %v765 = vrot.slane %v63, %v764
    %767 = vbcast.lane.b32.xlu0 %v765, 256
    %v768 = vpop.permute.xlu0 %767
    %s770 = sor.u32 256, 8
    %771 = vbcast.lane.b32.xlu0 %v765, %s770
    %v772 = vpop.permute.xlu0 %771
    %vm773 = vcmp.eq.s32.totalorder %v75, %v65
    %vm774 = vcmp.eq.s32.totalorder %v75, %v66
    %vm775 = vcmp.eq.s32.totalorder %v75, %v67
    %vm776 = vcmp.eq.s32.totalorder %v75, %v68
    %vm777 = vcmp.eq.s32.totalorder %v79, %v65
    %vm778 = vcmp.eq.s32.totalorder %v79, %v66
    %vm779 = vcmp.eq.s32.totalorder %v79, %v67
    %vm780 = vcmp.eq.s32.totalorder %v79, %v68
    %vm781 = vcmp.eq.s32.totalorder %v86, %v65
    %vm782 = vcmp.eq.s32.totalorder %v86, %v66
    %vm783 = vcmp.eq.s32.totalorder %v86, %v67
    %vm784 = vcmp.eq.s32.totalorder %v86, %v68
    %vm785 = vcmp.eq.s32.totalorder %v90, %v65
    %vm786 = vcmp.eq.s32.totalorder %v90, %v66
    %vm787 = vcmp.eq.s32.totalorder %v90, %v67
    %vm788 = vcmp.eq.s32.totalorder %v90, %v68
    %vm789 = vcmp.eq.s32.totalorder %v97, %v65
    %vm790 = vcmp.eq.s32.totalorder %v97, %v66
    %vm791 = vcmp.eq.s32.totalorder %v97, %v67
    %vm792 = vcmp.eq.s32.totalorder %v97, %v68
    %vm793 = vcmp.eq.s32.totalorder %v101, %v65
    %vm794 = vcmp.eq.s32.totalorder %v101, %v66
    %vm795 = vcmp.eq.s32.totalorder %v101, %v67
    %vm796 = vcmp.eq.s32.totalorder %v101, %v68
    %vm797 = vcmp.eq.s32.totalorder %v108, %v65
    %vm798 = vcmp.eq.s32.totalorder %v108, %v66
    %vm799 = vcmp.eq.s32.totalorder %v108, %v67
    %vm800 = vcmp.eq.s32.totalorder %v108, %v68
    %vm801 = vcmp.eq.s32.totalorder %v112, %v65
    %vm802 = vcmp.eq.s32.totalorder %v112, %v66
    %vm803 = vcmp.eq.s32.totalorder %v112, %v67
    %vm804 = vcmp.eq.s32.totalorder %v112, %v68
    %vm805 = vcmp.eq.s32.totalorder %v119, %v65
    %vm806 = vcmp.eq.s32.totalorder %v119, %v66
    %vm807 = vcmp.eq.s32.totalorder %v119, %v67
    %vm808 = vcmp.eq.s32.totalorder %v119, %v68
    %vm809 = vcmp.eq.s32.totalorder %v123, %v65
    %vm810 = vcmp.eq.s32.totalorder %v123, %v66
    %vm811 = vcmp.eq.s32.totalorder %v123, %v67
    %vm812 = vcmp.eq.s32.totalorder %v123, %v68
    %vm813 = vcmp.eq.s32.totalorder %v130, %v65
    %vm814 = vcmp.eq.s32.totalorder %v130, %v66
    %vm815 = vcmp.eq.s32.totalorder %v130, %v67
    %vm816 = vcmp.eq.s32.totalorder %v130, %v68
    %vm817 = vcmp.eq.s32.totalorder %v134, %v65
    %vm818 = vcmp.eq.s32.totalorder %v134, %v66
    %vm819 = vcmp.eq.s32.totalorder %v134, %v67
    %vm820 = vcmp.eq.s32.totalorder %v134, %v68
    %vm821 = vcmp.eq.s32.totalorder %v141, %v65
    %vm822 = vcmp.eq.s32.totalorder %v141, %v66
    %vm823 = vcmp.eq.s32.totalorder %v141, %v67
    %vm824 = vcmp.eq.s32.totalorder %v141, %v68
    %vm825 = vcmp.eq.s32.totalorder %v145, %v65
    %vm826 = vcmp.eq.s32.totalorder %v145, %v66
    %vm827 = vcmp.eq.s32.totalorder %v145, %v67
    %vm828 = vcmp.eq.s32.totalorder %v145, %v68
    %vm829 = vcmp.eq.s32.totalorder %v152, %v65
    %vm830 = vcmp.eq.s32.totalorder %v152, %v66
    %vm831 = vcmp.eq.s32.totalorder %v152, %v67
    %vm832 = vcmp.eq.s32.totalorder %v152, %v68
    %vm833 = vcmp.eq.s32.totalorder %v156, %v65
    %vm834 = vcmp.eq.s32.totalorder %v156, %v66
    %vm835 = vcmp.eq.s32.totalorder %v156, %v67
    %vm836 = vcmp.eq.s32.totalorder %v156, %v68
    %vm837 = vcmp.eq.s32.totalorder %v163, %v65
    %vm838 = vcmp.eq.s32.totalorder %v163, %v66
    %vm839 = vcmp.eq.s32.totalorder %v163, %v67
    %vm840 = vcmp.eq.s32.totalorder %v163, %v68
    %vm841 = vcmp.eq.s32.totalorder %v167, %v65
    %vm842 = vcmp.eq.s32.totalorder %v167, %v66
    %vm843 = vcmp.eq.s32.totalorder %v167, %v67
    %vm844 = vcmp.eq.s32.totalorder %v167, %v68
    %vm845 = vcmp.eq.s32.totalorder %v174, %v65
    %vm846 = vcmp.eq.s32.totalorder %v174, %v66
    %vm847 = vcmp.eq.s32.totalorder %v174, %v67
    %vm848 = vcmp.eq.s32.totalorder %v174, %v68
    %vm849 = vcmp.eq.s32.totalorder %v178, %v65
    %vm850 = vcmp.eq.s32.totalorder %v178, %v66
    %vm851 = vcmp.eq.s32.totalorder %v178, %v67
    %vm852 = vcmp.eq.s32.totalorder %v178, %v68
    %vm853 = vcmp.eq.s32.totalorder %v185, %v65
    %vm854 = vcmp.eq.s32.totalorder %v185, %v66
    %vm855 = vcmp.eq.s32.totalorder %v185, %v67
    %vm856 = vcmp.eq.s32.totalorder %v185, %v68
    %vm857 = vcmp.eq.s32.totalorder %v189, %v65
    %vm858 = vcmp.eq.s32.totalorder %v189, %v66
    %vm859 = vcmp.eq.s32.totalorder %v189, %v67
    %vm860 = vcmp.eq.s32.totalorder %v189, %v68
    %vm861 = vcmp.eq.s32.totalorder %v196, %v65
    %vm862 = vcmp.eq.s32.totalorder %v196, %v66
    %vm863 = vcmp.eq.s32.totalorder %v196, %v67
    %vm864 = vcmp.eq.s32.totalorder %v196, %v68
    %vm865 = vcmp.eq.s32.totalorder %v200, %v65
    %vm866 = vcmp.eq.s32.totalorder %v200, %v66
    %vm867 = vcmp.eq.s32.totalorder %v200, %v67
    %vm868 = vcmp.eq.s32.totalorder %v200, %v68
    %vm869 = vcmp.eq.s32.totalorder %v207, %v65
    %vm870 = vcmp.eq.s32.totalorder %v207, %v66
    %vm871 = vcmp.eq.s32.totalorder %v207, %v67
    %vm872 = vcmp.eq.s32.totalorder %v207, %v68
    %vm873 = vcmp.eq.s32.totalorder %v211, %v65
    %vm874 = vcmp.eq.s32.totalorder %v211, %v66
    %vm875 = vcmp.eq.s32.totalorder %v211, %v67
    %vm876 = vcmp.eq.s32.totalorder %v211, %v68
    %vm877 = vcmp.eq.s32.totalorder %v218, %v65
    %vm878 = vcmp.eq.s32.totalorder %v218, %v66
    %vm879 = vcmp.eq.s32.totalorder %v218, %v67
    %vm880 = vcmp.eq.s32.totalorder %v218, %v68
    %vm881 = vcmp.eq.s32.totalorder %v222, %v65
    %vm882 = vcmp.eq.s32.totalorder %v222, %v66
    %vm883 = vcmp.eq.s32.totalorder %v222, %v67
    %vm884 = vcmp.eq.s32.totalorder %v222, %v68
    %vm885 = vcmp.eq.s32.totalorder %v229, %v65
    %vm886 = vcmp.eq.s32.totalorder %v229, %v66
    %vm887 = vcmp.eq.s32.totalorder %v229, %v67
    %vm888 = vcmp.eq.s32.totalorder %v229, %v68
    %vm889 = vcmp.eq.s32.totalorder %v233, %v65
    %vm890 = vcmp.eq.s32.totalorder %v233, %v66
    %vm891 = vcmp.eq.s32.totalorder %v233, %v67
    %vm892 = vcmp.eq.s32.totalorder %v233, %v68
    %vm893 = vcmp.eq.s32.totalorder %v240, %v65
    %vm894 = vcmp.eq.s32.totalorder %v240, %v66
    %vm895 = vcmp.eq.s32.totalorder %v240, %v67
    %vm896 = vcmp.eq.s32.totalorder %v240, %v68
    %vm897 = vcmp.eq.s32.totalorder %v244, %v65
    %vm898 = vcmp.eq.s32.totalorder %v244, %v66
    %vm899 = vcmp.eq.s32.totalorder %v244, %v67
    %vm900 = vcmp.eq.s32.totalorder %v244, %v68
    %vm901 = vcmp.eq.s32.totalorder %v251, %v65
    %vm902 = vcmp.eq.s32.totalorder %v251, %v66
    %vm903 = vcmp.eq.s32.totalorder %v251, %v67
    %vm904 = vcmp.eq.s32.totalorder %v251, %v68
    %vm905 = vcmp.eq.s32.totalorder %v255, %v65
    %vm906 = vcmp.eq.s32.totalorder %v255, %v66
    %vm907 = vcmp.eq.s32.totalorder %v255, %v67
    %vm908 = vcmp.eq.s32.totalorder %v255, %v68
    %vm909 = vcmp.eq.s32.totalorder %v262, %v65
    %vm910 = vcmp.eq.s32.totalorder %v262, %v66
    %vm911 = vcmp.eq.s32.totalorder %v262, %v67
    %vm912 = vcmp.eq.s32.totalorder %v262, %v68
    %vm913 = vcmp.eq.s32.totalorder %v266, %v65
    %vm914 = vcmp.eq.s32.totalorder %v266, %v66
    %vm915 = vcmp.eq.s32.totalorder %v266, %v67
    %vm916 = vcmp.eq.s32.totalorder %v266, %v68
    %vm917 = vcmp.eq.s32.totalorder %v273, %v65
    %vm918 = vcmp.eq.s32.totalorder %v273, %v66
    %vm919 = vcmp.eq.s32.totalorder %v273, %v67
    %vm920 = vcmp.eq.s32.totalorder %v273, %v68
    %vm921 = vcmp.eq.s32.totalorder %v277, %v65
    %vm922 = vcmp.eq.s32.totalorder %v277, %v66
    %vm923 = vcmp.eq.s32.totalorder %v277, %v67
    %vm924 = vcmp.eq.s32.totalorder %v277, %v68
    %vm925 = vcmp.eq.s32.totalorder %v284, %v65
    %vm926 = vcmp.eq.s32.totalorder %v284, %v66
    %vm927 = vcmp.eq.s32.totalorder %v284, %v67
    %vm928 = vcmp.eq.s32.totalorder %v284, %v68
    %vm929 = vcmp.eq.s32.totalorder %v288, %v65
    %vm930 = vcmp.eq.s32.totalorder %v288, %v66
    %vm931 = vcmp.eq.s32.totalorder %v288, %v67
    %vm932 = vcmp.eq.s32.totalorder %v288, %v68
    %vm933 = vcmp.eq.s32.totalorder %v295, %v65
    %vm934 = vcmp.eq.s32.totalorder %v295, %v66
    %vm935 = vcmp.eq.s32.totalorder %v295, %v67
    %vm936 = vcmp.eq.s32.totalorder %v295, %v68
    %vm937 = vcmp.eq.s32.totalorder %v299, %v65
    %vm938 = vcmp.eq.s32.totalorder %v299, %v66
    %vm939 = vcmp.eq.s32.totalorder %v299, %v67
    %vm940 = vcmp.eq.s32.totalorder %v299, %v68
    %vm941 = vcmp.eq.s32.totalorder %v306, %v65
    %vm942 = vcmp.eq.s32.totalorder %v306, %v66
    %vm943 = vcmp.eq.s32.totalorder %v306, %v67
    %vm944 = vcmp.eq.s32.totalorder %v306, %v68
    %vm945 = vcmp.eq.s32.totalorder %v310, %v65
    %vm946 = vcmp.eq.s32.totalorder %v310, %v66
    %vm947 = vcmp.eq.s32.totalorder %v310, %v67
    %vm948 = vcmp.eq.s32.totalorder %v310, %v68
    %vm949 = vcmp.eq.s32.totalorder %v317, %v65
    %vm950 = vcmp.eq.s32.totalorder %v317, %v66
    %vm951 = vcmp.eq.s32.totalorder %v317, %v67
    %vm952 = vcmp.eq.s32.totalorder %v317, %v68
    %vm953 = vcmp.eq.s32.totalorder %v321, %v65
    %vm954 = vcmp.eq.s32.totalorder %v321, %v66
    %vm955 = vcmp.eq.s32.totalorder %v321, %v67
    %vm956 = vcmp.eq.s32.totalorder %v321, %v68
    %vm957 = vcmp.eq.s32.totalorder %v328, %v65
    %vm958 = vcmp.eq.s32.totalorder %v328, %v66
    %vm959 = vcmp.eq.s32.totalorder %v328, %v67
    %vm960 = vcmp.eq.s32.totalorder %v328, %v68
    %vm961 = vcmp.eq.s32.totalorder %v332, %v65
    %vm962 = vcmp.eq.s32.totalorder %v332, %v66
    %vm963 = vcmp.eq.s32.totalorder %v332, %v67
    %vm964 = vcmp.eq.s32.totalorder %v332, %v68
    %vm965 = vcmp.eq.s32.totalorder %v339, %v65
    %vm966 = vcmp.eq.s32.totalorder %v339, %v66
    %vm967 = vcmp.eq.s32.totalorder %v339, %v67
    %vm968 = vcmp.eq.s32.totalorder %v339, %v68
    %vm969 = vcmp.eq.s32.totalorder %v343, %v65
    %vm970 = vcmp.eq.s32.totalorder %v343, %v66
    %vm971 = vcmp.eq.s32.totalorder %v343, %v67
    %vm972 = vcmp.eq.s32.totalorder %v343, %v68
    %vm973 = vcmp.eq.s32.totalorder %v350, %v65
    %vm974 = vcmp.eq.s32.totalorder %v350, %v66
    %vm975 = vcmp.eq.s32.totalorder %v350, %v67
    %vm976 = vcmp.eq.s32.totalorder %v350, %v68
    %vm977 = vcmp.eq.s32.totalorder %v354, %v65
    %vm978 = vcmp.eq.s32.totalorder %v354, %v66
    %vm979 = vcmp.eq.s32.totalorder %v354, %v67
    %vm980 = vcmp.eq.s32.totalorder %v354, %v68
    %vm981 = vcmp.eq.s32.totalorder %v361, %v65
    %vm982 = vcmp.eq.s32.totalorder %v361, %v66
    %vm983 = vcmp.eq.s32.totalorder %v361, %v67
    %vm984 = vcmp.eq.s32.totalorder %v361, %v68
    %vm985 = vcmp.eq.s32.totalorder %v365, %v65
    %vm986 = vcmp.eq.s32.totalorder %v365, %v66
    %vm987 = vcmp.eq.s32.totalorder %v365, %v67
    %vm988 = vcmp.eq.s32.totalorder %v365, %v68
    %vm989 = vcmp.eq.s32.totalorder %v372, %v65
    %vm990 = vcmp.eq.s32.totalorder %v372, %v66
    %vm991 = vcmp.eq.s32.totalorder %v372, %v67
    %vm992 = vcmp.eq.s32.totalorder %v372, %v68
    %vm993 = vcmp.eq.s32.totalorder %v376, %v65
    %vm994 = vcmp.eq.s32.totalorder %v376, %v66
    %vm995 = vcmp.eq.s32.totalorder %v376, %v67
    %vm996 = vcmp.eq.s32.totalorder %v376, %v68
    %vm997 = vcmp.eq.s32.totalorder %v383, %v65
    %vm998 = vcmp.eq.s32.totalorder %v383, %v66
    %vm999 = vcmp.eq.s32.totalorder %v383, %v67
    %vm1000 = vcmp.eq.s32.totalorder %v383, %v68
    %vm1001 = vcmp.eq.s32.totalorder %v387, %v65
    %vm1002 = vcmp.eq.s32.totalorder %v387, %v66
    %vm1003 = vcmp.eq.s32.totalorder %v387, %v67
    %vm1004 = vcmp.eq.s32.totalorder %v387, %v68
    %vm1005 = vcmp.eq.s32.totalorder %v394, %v65
    %vm1006 = vcmp.eq.s32.totalorder %v394, %v66
    %vm1007 = vcmp.eq.s32.totalorder %v394, %v67
    %vm1008 = vcmp.eq.s32.totalorder %v394, %v68
    %vm1009 = vcmp.eq.s32.totalorder %v398, %v65
    %vm1010 = vcmp.eq.s32.totalorder %v398, %v66
    %vm1011 = vcmp.eq.s32.totalorder %v398, %v67
    %vm1012 = vcmp.eq.s32.totalorder %v398, %v68
    %vm1013 = vcmp.eq.s32.totalorder %v405, %v65
    %vm1014 = vcmp.eq.s32.totalorder %v405, %v66
    %vm1015 = vcmp.eq.s32.totalorder %v405, %v67
    %vm1016 = vcmp.eq.s32.totalorder %v405, %v68
    %vm1017 = vcmp.eq.s32.totalorder %v409, %v65
    %vm1018 = vcmp.eq.s32.totalorder %v409, %v66
    %vm1019 = vcmp.eq.s32.totalorder %v409, %v67
    %vm1020 = vcmp.eq.s32.totalorder %v409, %v68
    %vm1021 = vcmp.eq.s32.totalorder %v416, %v65
    %vm1022 = vcmp.eq.s32.totalorder %v416, %v66
    %vm1023 = vcmp.eq.s32.totalorder %v416, %v67
    %vm1024 = vcmp.eq.s32.totalorder %v416, %v68
    %vm1025 = vcmp.eq.s32.totalorder %v420, %v65
    %vm1026 = vcmp.eq.s32.totalorder %v420, %v66
    %vm1027 = vcmp.eq.s32.totalorder %v420, %v67
    %vm1028 = vcmp.eq.s32.totalorder %v420, %v68
    %vm1029 = vcmp.eq.s32.totalorder %v427, %v65
    %vm1030 = vcmp.eq.s32.totalorder %v427, %v66
    %vm1031 = vcmp.eq.s32.totalorder %v427, %v67
    %vm1032 = vcmp.eq.s32.totalorder %v427, %v68
    %vm1033 = vcmp.eq.s32.totalorder %v431, %v65
    %vm1034 = vcmp.eq.s32.totalorder %v431, %v66
    %vm1035 = vcmp.eq.s32.totalorder %v431, %v67
    %vm1036 = vcmp.eq.s32.totalorder %v431, %v68
    %vm1037 = vcmp.eq.s32.totalorder %v438, %v65
    %vm1038 = vcmp.eq.s32.totalorder %v438, %v66
    %vm1039 = vcmp.eq.s32.totalorder %v438, %v67
    %vm1040 = vcmp.eq.s32.totalorder %v438, %v68
    %vm1041 = vcmp.eq.s32.totalorder %v442, %v65
    %vm1042 = vcmp.eq.s32.totalorder %v442, %v66
    %vm1043 = vcmp.eq.s32.totalorder %v442, %v67
    %vm1044 = vcmp.eq.s32.totalorder %v442, %v68
    %vm1045 = vcmp.eq.s32.totalorder %v449, %v65
    %vm1046 = vcmp.eq.s32.totalorder %v449, %v66
    %vm1047 = vcmp.eq.s32.totalorder %v449, %v67
    %vm1048 = vcmp.eq.s32.totalorder %v449, %v68
    %vm1049 = vcmp.eq.s32.totalorder %v453, %v65
    %vm1050 = vcmp.eq.s32.totalorder %v453, %v66
    %vm1051 = vcmp.eq.s32.totalorder %v453, %v67
    %vm1052 = vcmp.eq.s32.totalorder %v453, %v68
    %vm1053 = vcmp.eq.s32.totalorder %v460, %v65
    %vm1054 = vcmp.eq.s32.totalorder %v460, %v66
    %vm1055 = vcmp.eq.s32.totalorder %v460, %v67
    %vm1056 = vcmp.eq.s32.totalorder %v460, %v68
    %vm1057 = vcmp.eq.s32.totalorder %v464, %v65
    %vm1058 = vcmp.eq.s32.totalorder %v464, %v66
    %vm1059 = vcmp.eq.s32.totalorder %v464, %v67
    %vm1060 = vcmp.eq.s32.totalorder %v464, %v68
    %vm1061 = vcmp.eq.s32.totalorder %v471, %v65
    %vm1062 = vcmp.eq.s32.totalorder %v471, %v66
    %vm1063 = vcmp.eq.s32.totalorder %v471, %v67
    %vm1064 = vcmp.eq.s32.totalorder %v471, %v68
    %vm1065 = vcmp.eq.s32.totalorder %v475, %v65
    %vm1066 = vcmp.eq.s32.totalorder %v475, %v66
    %vm1067 = vcmp.eq.s32.totalorder %v475, %v67
    %vm1068 = vcmp.eq.s32.totalorder %v475, %v68
    %vm1069 = vcmp.eq.s32.totalorder %v482, %v65
    %vm1070 = vcmp.eq.s32.totalorder %v482, %v66
    %vm1071 = vcmp.eq.s32.totalorder %v482, %v67
    %vm1072 = vcmp.eq.s32.totalorder %v482, %v68
    %vm1073 = vcmp.eq.s32.totalorder %v486, %v65
    %vm1074 = vcmp.eq.s32.totalorder %v486, %v66
    %vm1075 = vcmp.eq.s32.totalorder %v486, %v67
    %vm1076 = vcmp.eq.s32.totalorder %v486, %v68
    %vm1077 = vcmp.eq.s32.totalorder %v493, %v65
    %vm1078 = vcmp.eq.s32.totalorder %v493, %v66
    %vm1079 = vcmp.eq.s32.totalorder %v493, %v67
    %vm1080 = vcmp.eq.s32.totalorder %v493, %v68
    %vm1081 = vcmp.eq.s32.totalorder %v497, %v65
    %vm1082 = vcmp.eq.s32.totalorder %v497, %v66
    %vm1083 = vcmp.eq.s32.totalorder %v497, %v67
    %vm1084 = vcmp.eq.s32.totalorder %v497, %v68
    %vm1085 = vcmp.eq.s32.totalorder %v504, %v65
    %vm1086 = vcmp.eq.s32.totalorder %v504, %v66
    %vm1087 = vcmp.eq.s32.totalorder %v504, %v67
    %vm1088 = vcmp.eq.s32.totalorder %v504, %v68
    %vm1089 = vcmp.eq.s32.totalorder %v508, %v65
    %vm1090 = vcmp.eq.s32.totalorder %v508, %v66
    %vm1091 = vcmp.eq.s32.totalorder %v508, %v67
    %vm1092 = vcmp.eq.s32.totalorder %v508, %v68
    %vm1093 = vcmp.eq.s32.totalorder %v515, %v65
    %vm1094 = vcmp.eq.s32.totalorder %v515, %v66
    %vm1095 = vcmp.eq.s32.totalorder %v515, %v67
    %vm1096 = vcmp.eq.s32.totalorder %v515, %v68
    %vm1097 = vcmp.eq.s32.totalorder %v519, %v65
    %vm1098 = vcmp.eq.s32.totalorder %v519, %v66
    %vm1099 = vcmp.eq.s32.totalorder %v519, %v67
    %vm1100 = vcmp.eq.s32.totalorder %v519, %v68
    %vm1101 = vcmp.eq.s32.totalorder %v526, %v65
    %vm1102 = vcmp.eq.s32.totalorder %v526, %v66
    %vm1103 = vcmp.eq.s32.totalorder %v526, %v67
    %vm1104 = vcmp.eq.s32.totalorder %v526, %v68
    %vm1105 = vcmp.eq.s32.totalorder %v530, %v65
    %vm1106 = vcmp.eq.s32.totalorder %v530, %v66
    %vm1107 = vcmp.eq.s32.totalorder %v530, %v67
    %vm1108 = vcmp.eq.s32.totalorder %v530, %v68
    %vm1109 = vcmp.eq.s32.totalorder %v537, %v65
    %vm1110 = vcmp.eq.s32.totalorder %v537, %v66
    %vm1111 = vcmp.eq.s32.totalorder %v537, %v67
    %vm1112 = vcmp.eq.s32.totalorder %v537, %v68
    %vm1113 = vcmp.eq.s32.totalorder %v541, %v65
    %vm1114 = vcmp.eq.s32.totalorder %v541, %v66
    %vm1115 = vcmp.eq.s32.totalorder %v541, %v67
    %vm1116 = vcmp.eq.s32.totalorder %v541, %v68
    %vm1117 = vcmp.eq.s32.totalorder %v548, %v65
    %vm1118 = vcmp.eq.s32.totalorder %v548, %v66
    %vm1119 = vcmp.eq.s32.totalorder %v548, %v67
    %vm1120 = vcmp.eq.s32.totalorder %v548, %v68
    %vm1121 = vcmp.eq.s32.totalorder %v552, %v65
    %vm1122 = vcmp.eq.s32.totalorder %v552, %v66
    %vm1123 = vcmp.eq.s32.totalorder %v552, %v67
    %vm1124 = vcmp.eq.s32.totalorder %v552, %v68
    %vm1125 = vcmp.eq.s32.totalorder %v559, %v65
    %vm1126 = vcmp.eq.s32.totalorder %v559, %v66
    %vm1127 = vcmp.eq.s32.totalorder %v559, %v67
    %vm1128 = vcmp.eq.s32.totalorder %v559, %v68
    %vm1129 = vcmp.eq.s32.totalorder %v563, %v65
    %vm1130 = vcmp.eq.s32.totalorder %v563, %v66
    %vm1131 = vcmp.eq.s32.totalorder %v563, %v67
    %vm1132 = vcmp.eq.s32.totalorder %v563, %v68
    %vm1133 = vcmp.eq.s32.totalorder %v570, %v65
    %vm1134 = vcmp.eq.s32.totalorder %v570, %v66
    %vm1135 = vcmp.eq.s32.totalorder %v570, %v67
    %vm1136 = vcmp.eq.s32.totalorder %v570, %v68
    %vm1137 = vcmp.eq.s32.totalorder %v574, %v65
    %vm1138 = vcmp.eq.s32.totalorder %v574, %v66
    %vm1139 = vcmp.eq.s32.totalorder %v574, %v67
    %vm1140 = vcmp.eq.s32.totalorder %v574, %v68
    %vm1141 = vcmp.eq.s32.totalorder %v581, %v65
    %vm1142 = vcmp.eq.s32.totalorder %v581, %v66
    %vm1143 = vcmp.eq.s32.totalorder %v581, %v67
    %vm1144 = vcmp.eq.s32.totalorder %v581, %v68
    %vm1145 = vcmp.eq.s32.totalorder %v585, %v65
    %vm1146 = vcmp.eq.s32.totalorder %v585, %v66
    %vm1147 = vcmp.eq.s32.totalorder %v585, %v67
    %vm1148 = vcmp.eq.s32.totalorder %v585, %v68
    %vm1149 = vcmp.eq.s32.totalorder %v592, %v65
    %vm1150 = vcmp.eq.s32.totalorder %v592, %v66
    %vm1151 = vcmp.eq.s32.totalorder %v592, %v67
    %vm1152 = vcmp.eq.s32.totalorder %v592, %v68
    %vm1153 = vcmp.eq.s32.totalorder %v596, %v65
    %vm1154 = vcmp.eq.s32.totalorder %v596, %v66
    %vm1155 = vcmp.eq.s32.totalorder %v596, %v67
    %vm1156 = vcmp.eq.s32.totalorder %v596, %v68
    %vm1157 = vcmp.eq.s32.totalorder %v603, %v65
    %vm1158 = vcmp.eq.s32.totalorder %v603, %v66
    %vm1159 = vcmp.eq.s32.totalorder %v603, %v67
    %vm1160 = vcmp.eq.s32.totalorder %v603, %v68
    %vm1161 = vcmp.eq.s32.totalorder %v607, %v65
    %vm1162 = vcmp.eq.s32.totalorder %v607, %v66
    %vm1163 = vcmp.eq.s32.totalorder %v607, %v67
    %vm1164 = vcmp.eq.s32.totalorder %v607, %v68
    %vm1165 = vcmp.eq.s32.totalorder %v614, %v65
    %vm1166 = vcmp.eq.s32.totalorder %v614, %v66
    %vm1167 = vcmp.eq.s32.totalorder %v614, %v67
    %vm1168 = vcmp.eq.s32.totalorder %v614, %v68
    %vm1169 = vcmp.eq.s32.totalorder %v618, %v65
    %vm1170 = vcmp.eq.s32.totalorder %v618, %v66
    %vm1171 = vcmp.eq.s32.totalorder %v618, %v67
    %vm1172 = vcmp.eq.s32.totalorder %v618, %v68
    %vm1173 = vcmp.eq.s32.totalorder %v625, %v65
    %vm1174 = vcmp.eq.s32.totalorder %v625, %v66
    %vm1175 = vcmp.eq.s32.totalorder %v625, %v67
    %vm1176 = vcmp.eq.s32.totalorder %v625, %v68
    %vm1177 = vcmp.eq.s32.totalorder %v629, %v65
    %vm1178 = vcmp.eq.s32.totalorder %v629, %v66
    %vm1179 = vcmp.eq.s32.totalorder %v629, %v67
    %vm1180 = vcmp.eq.s32.totalorder %v629, %v68
    %vm1181 = vcmp.eq.s32.totalorder %v636, %v65
    %vm1182 = vcmp.eq.s32.totalorder %v636, %v66
    %vm1183 = vcmp.eq.s32.totalorder %v636, %v67
    %vm1184 = vcmp.eq.s32.totalorder %v636, %v68
    %vm1185 = vcmp.eq.s32.totalorder %v640, %v65
    %vm1186 = vcmp.eq.s32.totalorder %v640, %v66
    %vm1187 = vcmp.eq.s32.totalorder %v640, %v67
    %vm1188 = vcmp.eq.s32.totalorder %v640, %v68
    %vm1189 = vcmp.eq.s32.totalorder %v647, %v65
    %vm1190 = vcmp.eq.s32.totalorder %v647, %v66
    %vm1191 = vcmp.eq.s32.totalorder %v647, %v67
    %vm1192 = vcmp.eq.s32.totalorder %v647, %v68
    %vm1193 = vcmp.eq.s32.totalorder %v651, %v65
    %vm1194 = vcmp.eq.s32.totalorder %v651, %v66
    %vm1195 = vcmp.eq.s32.totalorder %v651, %v67
    %vm1196 = vcmp.eq.s32.totalorder %v651, %v68
    %vm1197 = vcmp.eq.s32.totalorder %v658, %v65
    %vm1198 = vcmp.eq.s32.totalorder %v658, %v66
    %vm1199 = vcmp.eq.s32.totalorder %v658, %v67
    %vm1200 = vcmp.eq.s32.totalorder %v658, %v68
    %vm1201 = vcmp.eq.s32.totalorder %v662, %v65
    %vm1202 = vcmp.eq.s32.totalorder %v662, %v66
    %vm1203 = vcmp.eq.s32.totalorder %v662, %v67
    %vm1204 = vcmp.eq.s32.totalorder %v662, %v68
    %vm1205 = vcmp.eq.s32.totalorder %v669, %v65
    %vm1206 = vcmp.eq.s32.totalorder %v669, %v66
    %vm1207 = vcmp.eq.s32.totalorder %v669, %v67
    %vm1208 = vcmp.eq.s32.totalorder %v669, %v68
    %vm1209 = vcmp.eq.s32.totalorder %v673, %v65
    %vm1210 = vcmp.eq.s32.totalorder %v673, %v66
    %vm1211 = vcmp.eq.s32.totalorder %v673, %v67
    %vm1212 = vcmp.eq.s32.totalorder %v673, %v68
    %vm1213 = vcmp.eq.s32.totalorder %v680, %v65
    %vm1214 = vcmp.eq.s32.totalorder %v680, %v66
    %vm1215 = vcmp.eq.s32.totalorder %v680, %v67
    %vm1216 = vcmp.eq.s32.totalorder %v680, %v68
    %vm1217 = vcmp.eq.s32.totalorder %v684, %v65
    %vm1218 = vcmp.eq.s32.totalorder %v684, %v66
    %vm1219 = vcmp.eq.s32.totalorder %v684, %v67
    %vm1220 = vcmp.eq.s32.totalorder %v684, %v68
    %vm1221 = vcmp.eq.s32.totalorder %v691, %v65
    %vm1222 = vcmp.eq.s32.totalorder %v691, %v66
    %vm1223 = vcmp.eq.s32.totalorder %v691, %v67
    %vm1224 = vcmp.eq.s32.totalorder %v691, %v68
    %vm1225 = vcmp.eq.s32.totalorder %v695, %v65
    %vm1226 = vcmp.eq.s32.totalorder %v695, %v66
    %vm1227 = vcmp.eq.s32.totalorder %v695, %v67
    %vm1228 = vcmp.eq.s32.totalorder %v695, %v68
    %vm1229 = vcmp.eq.s32.totalorder %v702, %v65
    %vm1230 = vcmp.eq.s32.totalorder %v702, %v66
    %vm1231 = vcmp.eq.s32.totalorder %v702, %v67
    %vm1232 = vcmp.eq.s32.totalorder %v702, %v68
    %vm1233 = vcmp.eq.s32.totalorder %v706, %v65
    %vm1234 = vcmp.eq.s32.totalorder %v706, %v66
    %vm1235 = vcmp.eq.s32.totalorder %v706, %v67
    %vm1236 = vcmp.eq.s32.totalorder %v706, %v68
    %vm1237 = vcmp.eq.s32.totalorder %v713, %v65
    %vm1238 = vcmp.eq.s32.totalorder %v713, %v66
    %vm1239 = vcmp.eq.s32.totalorder %v713, %v67
    %vm1240 = vcmp.eq.s32.totalorder %v713, %v68
    %vm1241 = vcmp.eq.s32.totalorder %v717, %v65
    %vm1242 = vcmp.eq.s32.totalorder %v717, %v66
    %vm1243 = vcmp.eq.s32.totalorder %v717, %v67
    %vm1244 = vcmp.eq.s32.totalorder %v717, %v68
    %vm1245 = vcmp.eq.s32.totalorder %v724, %v65
    %vm1246 = vcmp.eq.s32.totalorder %v724, %v66
    %vm1247 = vcmp.eq.s32.totalorder %v724, %v67
    %vm1248 = vcmp.eq.s32.totalorder %v724, %v68
    %vm1249 = vcmp.eq.s32.totalorder %v728, %v65
    %vm1250 = vcmp.eq.s32.totalorder %v728, %v66
    %vm1251 = vcmp.eq.s32.totalorder %v728, %v67
    %vm1252 = vcmp.eq.s32.totalorder %v728, %v68
    %vm1253 = vcmp.eq.s32.totalorder %v735, %v65
    %vm1254 = vcmp.eq.s32.totalorder %v735, %v66
    %vm1255 = vcmp.eq.s32.totalorder %v735, %v67
    %vm1256 = vcmp.eq.s32.totalorder %v735, %v68
    %vm1257 = vcmp.eq.s32.totalorder %v739, %v65
    %vm1258 = vcmp.eq.s32.totalorder %v739, %v66
    %vm1259 = vcmp.eq.s32.totalorder %v739, %v67
    %vm1260 = vcmp.eq.s32.totalorder %v739, %v68
    %vm1261 = vcmp.eq.s32.totalorder %v746, %v65
    %vm1262 = vcmp.eq.s32.totalorder %v746, %v66
    %vm1263 = vcmp.eq.s32.totalorder %v746, %v67
    %vm1264 = vcmp.eq.s32.totalorder %v746, %v68
    %vm1265 = vcmp.eq.s32.totalorder %v750, %v65
    %vm1266 = vcmp.eq.s32.totalorder %v750, %v66
    %vm1267 = vcmp.eq.s32.totalorder %v750, %v67
    %vm1268 = vcmp.eq.s32.totalorder %v750, %v68
    %vm1269 = vcmp.eq.s32.totalorder %v757, %v65
    %vm1270 = vcmp.eq.s32.totalorder %v757, %v66
    %vm1271 = vcmp.eq.s32.totalorder %v757, %v67
    %vm1272 = vcmp.eq.s32.totalorder %v757, %v68
    %vm1273 = vcmp.eq.s32.totalorder %v761, %v65
    %vm1274 = vcmp.eq.s32.totalorder %v761, %v66
    %vm1275 = vcmp.eq.s32.totalorder %v761, %v67
    %vm1276 = vcmp.eq.s32.totalorder %v761, %v68
    %vm1277 = vcmp.eq.s32.totalorder %v768, %v65
    %vm1278 = vcmp.eq.s32.totalorder %v768, %v66
    %vm1279 = vcmp.eq.s32.totalorder %v768, %v67
    %vm1280 = vcmp.eq.s32.totalorder %v768, %v68
    %vm1281 = vcmp.eq.s32.totalorder %v772, %v65
    %vm1282 = vcmp.eq.s32.totalorder %v772, %v66
    %vm1283 = vcmp.eq.s32.totalorder %v772, %v67
    %vm1284 = vcmp.eq.s32.totalorder %v772, %v68
    %v1285 = vsel %vm773, 1, 0
    %v1286 = vsel %vm774, 1, 0
    %v1287 = vsel %vm775, 1, 0
    %v1288 = vsel %vm776, 1, 0
    %v1289 = vsel %vm777, 1, 0
    %v1290 = vsel %vm778, 1, 0
    %v1291 = vsel %vm779, 1, 0
    %v1292 = vsel %vm780, 1, 0
    %v1293 = vsel %vm781, 1, 0
    %v1294 = vsel %vm782, 1, 0
    %v1295 = vsel %vm783, 1, 0
    %v1296 = vsel %vm784, 1, 0
    %v1297 = vsel %vm785, 1, 0
    %v1298 = vsel %vm786, 1, 0
    %v1299 = vsel %vm787, 1, 0
    %v1300 = vsel %vm788, 1, 0
    %v1301 = vsel %vm789, 1, 0
    %v1302 = vsel %vm790, 1, 0
    %v1303 = vsel %vm791, 1, 0
    %v1304 = vsel %vm792, 1, 0
    %v1305 = vsel %vm793, 1, 0
    %v1306 = vsel %vm794, 1, 0
    %v1307 = vsel %vm795, 1, 0
    %v1308 = vsel %vm796, 1, 0
    %v1309 = vsel %vm797, 1, 0
    %v1310 = vsel %vm798, 1, 0
    %v1311 = vsel %vm799, 1, 0
    %v1312 = vsel %vm800, 1, 0
    %v1313 = vsel %vm801, 1, 0
    %v1314 = vsel %vm802, 1, 0
    %v1315 = vsel %vm803, 1, 0
    %v1316 = vsel %vm804, 1, 0
    %v1317 = vsel %vm805, 1, 0
    %v1318 = vsel %vm806, 1, 0
    %v1319 = vsel %vm807, 1, 0
    %v1320 = vsel %vm808, 1, 0
    %v1321 = vsel %vm809, 1, 0
    %v1322 = vsel %vm810, 1, 0
    %v1323 = vsel %vm811, 1, 0
    %v1324 = vsel %vm812, 1, 0
    %v1325 = vsel %vm813, 1, 0
    %v1326 = vsel %vm814, 1, 0
    %v1327 = vsel %vm815, 1, 0
    %v1328 = vsel %vm816, 1, 0
    %v1329 = vsel %vm817, 1, 0
    %v1330 = vsel %vm818, 1, 0
    %v1331 = vsel %vm819, 1, 0
    %v1332 = vsel %vm820, 1, 0
    %v1333 = vsel %vm821, 1, 0
    %v1334 = vsel %vm822, 1, 0
    %v1335 = vsel %vm823, 1, 0
    %v1336 = vsel %vm824, 1, 0
    %v1337 = vsel %vm825, 1, 0
    %v1338 = vsel %vm826, 1, 0
    %v1339 = vsel %vm827, 1, 0
    %v1340 = vsel %vm828, 1, 0
    %v1341 = vsel %vm829, 1, 0
    %v1342 = vsel %vm830, 1, 0
    %v1343 = vsel %vm831, 1, 0
    %v1344 = vsel %vm832, 1, 0
    %v1345 = vsel %vm833, 1, 0
    %v1346 = vsel %vm834, 1, 0
    %v1347 = vsel %vm835, 1, 0
    %v1348 = vsel %vm836, 1, 0
    %v1349 = vsel %vm837, 1, 0
    %v1350 = vsel %vm838, 1, 0
    %v1351 = vsel %vm839, 1, 0
    %v1352 = vsel %vm840, 1, 0
    %v1353 = vsel %vm841, 1, 0
    %v1354 = vsel %vm842, 1, 0
    %v1355 = vsel %vm843, 1, 0
    %v1356 = vsel %vm844, 1, 0
    %v1357 = vsel %vm845, 1, 0
    %v1358 = vsel %vm846, 1, 0
    %v1359 = vsel %vm847, 1, 0
    %v1360 = vsel %vm848, 1, 0
    %v1361 = vsel %vm849, 1, 0
    %v1362 = vsel %vm850, 1, 0
    %v1363 = vsel %vm851, 1, 0
    %v1364 = vsel %vm852, 1, 0
    %v1365 = vsel %vm853, 1, 0
    %v1366 = vsel %vm854, 1, 0
    %v1367 = vsel %vm855, 1, 0
    %v1368 = vsel %vm856, 1, 0
    %v1369 = vsel %vm857, 1, 0
    %v1370 = vsel %vm858, 1, 0
    %v1371 = vsel %vm859, 1, 0
    %v1372 = vsel %vm860, 1, 0
    %v1373 = vsel %vm861, 1, 0
    %v1374 = vsel %vm862, 1, 0
    %v1375 = vsel %vm863, 1, 0
    %v1376 = vsel %vm864, 1, 0
    %v1377 = vsel %vm865, 1, 0
    %v1378 = vsel %vm866, 1, 0
    %v1379 = vsel %vm867, 1, 0
    %v1380 = vsel %vm868, 1, 0
    %v1381 = vsel %vm869, 1, 0
    %v1382 = vsel %vm870, 1, 0
    %v1383 = vsel %vm871, 1, 0
    %v1384 = vsel %vm872, 1, 0
    %v1385 = vsel %vm873, 1, 0
    %v1386 = vsel %vm874, 1, 0
    %v1387 = vsel %vm875, 1, 0
    %v1388 = vsel %vm876, 1, 0
    %v1389 = vsel %vm877, 1, 0
    %v1390 = vsel %vm878, 1, 0
    %v1391 = vsel %vm879, 1, 0
    %v1392 = vsel %vm880, 1, 0
    %v1393 = vsel %vm881, 1, 0
    %v1394 = vsel %vm882, 1, 0
    %v1395 = vsel %vm883, 1, 0
    %v1396 = vsel %vm884, 1, 0
    %v1397 = vsel %vm885, 1, 0
    %v1398 = vsel %vm886, 1, 0
    %v1399 = vsel %vm887, 1, 0
    %v1400 = vsel %vm888, 1, 0
    %v1401 = vsel %vm889, 1, 0
    %v1402 = vsel %vm890, 1, 0
    %v1403 = vsel %vm891, 1, 0
    %v1404 = vsel %vm892, 1, 0
    %v1405 = vsel %vm893, 1, 0
    %v1406 = vsel %vm894, 1, 0
    %v1407 = vsel %vm895, 1, 0
    %v1408 = vsel %vm896, 1, 0
    %v1409 = vsel %vm897, 1, 0
    %v1410 = vsel %vm898, 1, 0
    %v1411 = vsel %vm899, 1, 0
    %v1412 = vsel %vm900, 1, 0
    %v1413 = vsel %vm901, 1, 0
    %v1414 = vsel %vm902, 1, 0
    %v1415 = vsel %vm903, 1, 0
    %v1416 = vsel %vm904, 1, 0
    %v1417 = vsel %vm905, 1, 0
    %v1418 = vsel %vm906, 1, 0
    %v1419 = vsel %vm907, 1, 0
    %v1420 = vsel %vm908, 1, 0
    %v1421 = vsel %vm909, 1, 0
    %v1422 = vsel %vm910, 1, 0
    %v1423 = vsel %vm911, 1, 0
    %v1424 = vsel %vm912, 1, 0
    %v1425 = vsel %vm913, 1, 0
    %v1426 = vsel %vm914, 1, 0
    %v1427 = vsel %vm915, 1, 0
    %v1428 = vsel %vm916, 1, 0
    %v1429 = vsel %vm917, 1, 0
    %v1430 = vsel %vm918, 1, 0
    %v1431 = vsel %vm919, 1, 0
    %v1432 = vsel %vm920, 1, 0
    %v1433 = vsel %vm921, 1, 0
    %v1434 = vsel %vm922, 1, 0
    %v1435 = vsel %vm923, 1, 0
    %v1436 = vsel %vm924, 1, 0
    %v1437 = vsel %vm925, 1, 0
    %v1438 = vsel %vm926, 1, 0
    %v1439 = vsel %vm927, 1, 0
    %v1440 = vsel %vm928, 1, 0
    %v1441 = vsel %vm929, 1, 0
    %v1442 = vsel %vm930, 1, 0
    %v1443 = vsel %vm931, 1, 0
    %v1444 = vsel %vm932, 1, 0
    %v1445 = vsel %vm933, 1, 0
    %v1446 = vsel %vm934, 1, 0
    %v1447 = vsel %vm935, 1, 0
    %v1448 = vsel %vm936, 1, 0
    %v1449 = vsel %vm937, 1, 0
    %v1450 = vsel %vm938, 1, 0
    %v1451 = vsel %vm939, 1, 0
    %v1452 = vsel %vm940, 1, 0
    %v1453 = vsel %vm941, 1, 0
    %v1454 = vsel %vm942, 1, 0
    %v1455 = vsel %vm943, 1, 0
    %v1456 = vsel %vm944, 1, 0
    %v1457 = vsel %vm945, 1, 0
    %v1458 = vsel %vm946, 1, 0
    %v1459 = vsel %vm947, 1, 0
    %v1460 = vsel %vm948, 1, 0
    %v1461 = vsel %vm949, 1, 0
    %v1462 = vsel %vm950, 1, 0
    %v1463 = vsel %vm951, 1, 0
    %v1464 = vsel %vm952, 1, 0
    %v1465 = vsel %vm953, 1, 0
    %v1466 = vsel %vm954, 1, 0
    %v1467 = vsel %vm955, 1, 0
    %v1468 = vsel %vm956, 1, 0
    %v1469 = vsel %vm957, 1, 0
    %v1470 = vsel %vm958, 1, 0
    %v1471 = vsel %vm959, 1, 0
    %v1472 = vsel %vm960, 1, 0
    %v1473 = vsel %vm961, 1, 0
    %v1474 = vsel %vm962, 1, 0
    %v1475 = vsel %vm963, 1, 0
    %v1476 = vsel %vm964, 1, 0
    %v1477 = vsel %vm965, 1, 0
    %v1478 = vsel %vm966, 1, 0
    %v1479 = vsel %vm967, 1, 0
    %v1480 = vsel %vm968, 1, 0
    %v1481 = vsel %vm969, 1, 0
    %v1482 = vsel %vm970, 1, 0
    %v1483 = vsel %vm971, 1, 0
    %v1484 = vsel %vm972, 1, 0
    %v1485 = vsel %vm973, 1, 0
    %v1486 = vsel %vm974, 1, 0
    %v1487 = vsel %vm975, 1, 0
    %v1488 = vsel %vm976, 1, 0
    %v1489 = vsel %vm977, 1, 0
    %v1490 = vsel %vm978, 1, 0
    %v1491 = vsel %vm979, 1, 0
    %v1492 = vsel %vm980, 1, 0
    %v1493 = vsel %vm981, 1, 0
    %v1494 = vsel %vm982, 1, 0
    %v1495 = vsel %vm983, 1, 0
    %v1496 = vsel %vm984, 1, 0
    %v1497 = vsel %vm985, 1, 0
    %v1498 = vsel %vm986, 1, 0
    %v1499 = vsel %vm987, 1, 0
    %v1500 = vsel %vm988, 1, 0
    %v1501 = vsel %vm989, 1, 0
    %v1502 = vsel %vm990, 1, 0
    %v1503 = vsel %vm991, 1, 0
    %v1504 = vsel %vm992, 1, 0
    %v1505 = vsel %vm993, 1, 0
    %v1506 = vsel %vm994, 1, 0
    %v1507 = vsel %vm995, 1, 0
    %v1508 = vsel %vm996, 1, 0
    %v1509 = vsel %vm997, 1, 0
    %v1510 = vsel %vm998, 1, 0
    %v1511 = vsel %vm999, 1, 0
    %v1512 = vsel %vm1000, 1, 0
    %v1513 = vsel %vm1001, 1, 0
    %v1514 = vsel %vm1002, 1, 0
    %v1515 = vsel %vm1003, 1, 0
    %v1516 = vsel %vm1004, 1, 0
    %v1517 = vsel %vm1005, 1, 0
    %v1518 = vsel %vm1006, 1, 0
    %v1519 = vsel %vm1007, 1, 0
    %v1520 = vsel %vm1008, 1, 0
    %v1521 = vsel %vm1009, 1, 0
    %v1522 = vsel %vm1010, 1, 0
    %v1523 = vsel %vm1011, 1, 0
    %v1524 = vsel %vm1012, 1, 0
    %v1525 = vsel %vm1013, 1, 0
    %v1526 = vsel %vm1014, 1, 0
    %v1527 = vsel %vm1015, 1, 0
    %v1528 = vsel %vm1016, 1, 0
    %v1529 = vsel %vm1017, 1, 0
    %v1530 = vsel %vm1018, 1, 0
    %v1531 = vsel %vm1019, 1, 0
    %v1532 = vsel %vm1020, 1, 0
    %v1533 = vsel %vm1021, 1, 0
    %v1534 = vsel %vm1022, 1, 0
    %v1535 = vsel %vm1023, 1, 0
    %v1536 = vsel %vm1024, 1, 0
    %v1537 = vsel %vm1025, 1, 0
    %v1538 = vsel %vm1026, 1, 0
    %v1539 = vsel %vm1027, 1, 0
    %v1540 = vsel %vm1028, 1, 0
    %v1541 = vsel %vm1029, 1, 0
    %v1542 = vsel %vm1030, 1, 0
    %v1543 = vsel %vm1031, 1, 0
    %v1544 = vsel %vm1032, 1, 0
    %v1545 = vsel %vm1033, 1, 0
    %v1546 = vsel %vm1034, 1, 0
    %v1547 = vsel %vm1035, 1, 0
    %v1548 = vsel %vm1036, 1, 0
    %v1549 = vsel %vm1037, 1, 0
    %v1550 = vsel %vm1038, 1, 0
    %v1551 = vsel %vm1039, 1, 0
    %v1552 = vsel %vm1040, 1, 0
    %v1553 = vsel %vm1041, 1, 0
    %v1554 = vsel %vm1042, 1, 0
    %v1555 = vsel %vm1043, 1, 0
    %v1556 = vsel %vm1044, 1, 0
    %v1557 = vsel %vm1045, 1, 0
    %v1558 = vsel %vm1046, 1, 0
    %v1559 = vsel %vm1047, 1, 0
    %v1560 = vsel %vm1048, 1, 0
    %v1561 = vsel %vm1049, 1, 0
    %v1562 = vsel %vm1050, 1, 0
    %v1563 = vsel %vm1051, 1, 0
    %v1564 = vsel %vm1052, 1, 0
    %v1565 = vsel %vm1053, 1, 0
    %v1566 = vsel %vm1054, 1, 0
    %v1567 = vsel %vm1055, 1, 0
    %v1568 = vsel %vm1056, 1, 0
    %v1569 = vsel %vm1057, 1, 0
    %v1570 = vsel %vm1058, 1, 0
    %v1571 = vsel %vm1059, 1, 0
    %v1572 = vsel %vm1060, 1, 0
    %v1573 = vsel %vm1061, 1, 0
    %v1574 = vsel %vm1062, 1, 0
    %v1575 = vsel %vm1063, 1, 0
    %v1576 = vsel %vm1064, 1, 0
    %v1577 = vsel %vm1065, 1, 0
    %v1578 = vsel %vm1066, 1, 0
    %v1579 = vsel %vm1067, 1, 0
    %v1580 = vsel %vm1068, 1, 0
    %v1581 = vsel %vm1069, 1, 0
    %v1582 = vsel %vm1070, 1, 0
    %v1583 = vsel %vm1071, 1, 0
    %v1584 = vsel %vm1072, 1, 0
    %v1585 = vsel %vm1073, 1, 0
    %v1586 = vsel %vm1074, 1, 0
    %v1587 = vsel %vm1075, 1, 0
    %v1588 = vsel %vm1076, 1, 0
    %v1589 = vsel %vm1077, 1, 0
    %v1590 = vsel %vm1078, 1, 0
    %v1591 = vsel %vm1079, 1, 0
    %v1592 = vsel %vm1080, 1, 0
    %v1593 = vsel %vm1081, 1, 0
    %v1594 = vsel %vm1082, 1, 0
    %v1595 = vsel %vm1083, 1, 0
    %v1596 = vsel %vm1084, 1, 0
    %v1597 = vsel %vm1085, 1, 0
    %v1598 = vsel %vm1086, 1, 0
    %v1599 = vsel %vm1087, 1, 0
    %v1600 = vsel %vm1088, 1, 0
    %v1601 = vsel %vm1089, 1, 0
    %v1602 = vsel %vm1090, 1, 0
    %v1603 = vsel %vm1091, 1, 0
    %v1604 = vsel %vm1092, 1, 0
    %v1605 = vsel %vm1093, 1, 0
    %v1606 = vsel %vm1094, 1, 0
    %v1607 = vsel %vm1095, 1, 0
    %v1608 = vsel %vm1096, 1, 0
    %v1609 = vsel %vm1097, 1, 0
    %v1610 = vsel %vm1098, 1, 0
    %v1611 = vsel %vm1099, 1, 0
    %v1612 = vsel %vm1100, 1, 0
    %v1613 = vsel %vm1101, 1, 0
    %v1614 = vsel %vm1102, 1, 0
    %v1615 = vsel %vm1103, 1, 0
    %v1616 = vsel %vm1104, 1, 0
    %v1617 = vsel %vm1105, 1, 0
    %v1618 = vsel %vm1106, 1, 0
    %v1619 = vsel %vm1107, 1, 0
    %v1620 = vsel %vm1108, 1, 0
    %v1621 = vsel %vm1109, 1, 0
    %v1622 = vsel %vm1110, 1, 0
    %v1623 = vsel %vm1111, 1, 0
    %v1624 = vsel %vm1112, 1, 0
    %v1625 = vsel %vm1113, 1, 0
    %v1626 = vsel %vm1114, 1, 0
    %v1627 = vsel %vm1115, 1, 0
    %v1628 = vsel %vm1116, 1, 0
    %v1629 = vsel %vm1117, 1, 0
    %v1630 = vsel %vm1118, 1, 0
    %v1631 = vsel %vm1119, 1, 0
    %v1632 = vsel %vm1120, 1, 0
    %v1633 = vsel %vm1121, 1, 0
    %v1634 = vsel %vm1122, 1, 0
    %v1635 = vsel %vm1123, 1, 0
    %v1636 = vsel %vm1124, 1, 0
    %v1637 = vsel %vm1125, 1, 0
    %v1638 = vsel %vm1126, 1, 0
    %v1639 = vsel %vm1127, 1, 0
    %v1640 = vsel %vm1128, 1, 0
    %v1641 = vsel %vm1129, 1, 0
    %v1642 = vsel %vm1130, 1, 0
    %v1643 = vsel %vm1131, 1, 0
    %v1644 = vsel %vm1132, 1, 0
    %v1645 = vsel %vm1133, 1, 0
    %v1646 = vsel %vm1134, 1, 0
    %v1647 = vsel %vm1135, 1, 0
    %v1648 = vsel %vm1136, 1, 0
    %v1649 = vsel %vm1137, 1, 0
    %v1650 = vsel %vm1138, 1, 0
    %v1651 = vsel %vm1139, 1, 0
    %v1652 = vsel %vm1140, 1, 0
    %v1653 = vsel %vm1141, 1, 0
    %v1654 = vsel %vm1142, 1, 0
    %v1655 = vsel %vm1143, 1, 0
    %v1656 = vsel %vm1144, 1, 0
    %v1657 = vsel %vm1145, 1, 0
    %v1658 = vsel %vm1146, 1, 0
    %v1659 = vsel %vm1147, 1, 0
    %v1660 = vsel %vm1148, 1, 0
    %v1661 = vsel %vm1149, 1, 0
    %v1662 = vsel %vm1150, 1, 0
    %v1663 = vsel %vm1151, 1, 0
    %v1664 = vsel %vm1152, 1, 0
    %v1665 = vsel %vm1153, 1, 0
    %v1666 = vsel %vm1154, 1, 0
    %v1667 = vsel %vm1155, 1, 0
    %v1668 = vsel %vm1156, 1, 0
    %v1669 = vsel %vm1157, 1, 0
    %v1670 = vsel %vm1158, 1, 0
    %v1671 = vsel %vm1159, 1, 0
    %v1672 = vsel %vm1160, 1, 0
    %v1673 = vsel %vm1161, 1, 0
    %v1674 = vsel %vm1162, 1, 0
    %v1675 = vsel %vm1163, 1, 0
    %v1676 = vsel %vm1164, 1, 0
    %v1677 = vsel %vm1165, 1, 0
    %v1678 = vsel %vm1166, 1, 0
    %v1679 = vsel %vm1167, 1, 0
    %v1680 = vsel %vm1168, 1, 0
    %v1681 = vsel %vm1169, 1, 0
    %v1682 = vsel %vm1170, 1, 0
    %v1683 = vsel %vm1171, 1, 0
    %v1684 = vsel %vm1172, 1, 0
    %v1685 = vsel %vm1173, 1, 0
    %v1686 = vsel %vm1174, 1, 0
    %v1687 = vsel %vm1175, 1, 0
    %v1688 = vsel %vm1176, 1, 0
    %v1689 = vsel %vm1177, 1, 0
    %v1690 = vsel %vm1178, 1, 0
    %v1691 = vsel %vm1179, 1, 0
    %v1692 = vsel %vm1180, 1, 0
    %v1693 = vsel %vm1181, 1, 0
    %v1694 = vsel %vm1182, 1, 0
    %v1695 = vsel %vm1183, 1, 0
    %v1696 = vsel %vm1184, 1, 0
    %v1697 = vsel %vm1185, 1, 0
    %v1698 = vsel %vm1186, 1, 0
    %v1699 = vsel %vm1187, 1, 0
    %v1700 = vsel %vm1188, 1, 0
    %v1701 = vsel %vm1189, 1, 0
    %v1702 = vsel %vm1190, 1, 0
    %v1703 = vsel %vm1191, 1, 0
    %v1704 = vsel %vm1192, 1, 0
    %v1705 = vsel %vm1193, 1, 0
    %v1706 = vsel %vm1194, 1, 0
    %v1707 = vsel %vm1195, 1, 0
    %v1708 = vsel %vm1196, 1, 0
    %v1709 = vsel %vm1197, 1, 0
    %v1710 = vsel %vm1198, 1, 0
    %v1711 = vsel %vm1199, 1, 0
    %v1712 = vsel %vm1200, 1, 0
    %v1713 = vsel %vm1201, 1, 0
    %v1714 = vsel %vm1202, 1, 0
    %v1715 = vsel %vm1203, 1, 0
    %v1716 = vsel %vm1204, 1, 0
    %v1717 = vsel %vm1205, 1, 0
    %v1718 = vsel %vm1206, 1, 0
    %v1719 = vsel %vm1207, 1, 0
    %v1720 = vsel %vm1208, 1, 0
    %v1721 = vsel %vm1209, 1, 0
    %v1722 = vsel %vm1210, 1, 0
    %v1723 = vsel %vm1211, 1, 0
    %v1724 = vsel %vm1212, 1, 0
    %v1725 = vsel %vm1213, 1, 0
    %v1726 = vsel %vm1214, 1, 0
    %v1727 = vsel %vm1215, 1, 0
    %v1728 = vsel %vm1216, 1, 0
    %v1729 = vsel %vm1217, 1, 0
    %v1730 = vsel %vm1218, 1, 0
    %v1731 = vsel %vm1219, 1, 0
    %v1732 = vsel %vm1220, 1, 0
    %v1733 = vsel %vm1221, 1, 0
    %v1734 = vsel %vm1222, 1, 0
    %v1735 = vsel %vm1223, 1, 0
    %v1736 = vsel %vm1224, 1, 0
    %v1737 = vsel %vm1225, 1, 0
    %v1738 = vsel %vm1226, 1, 0
    %v1739 = vsel %vm1227, 1, 0
    %v1740 = vsel %vm1228, 1, 0
    %v1741 = vsel %vm1229, 1, 0
    %v1742 = vsel %vm1230, 1, 0
    %v1743 = vsel %vm1231, 1, 0
    %v1744 = vsel %vm1232, 1, 0
    %v1745 = vsel %vm1233, 1, 0
    %v1746 = vsel %vm1234, 1, 0
    %v1747 = vsel %vm1235, 1, 0
    %v1748 = vsel %vm1236, 1, 0
    %v1749 = vsel %vm1237, 1, 0
    %v1750 = vsel %vm1238, 1, 0
    %v1751 = vsel %vm1239, 1, 0
    %v1752 = vsel %vm1240, 1, 0
    %v1753 = vsel %vm1241, 1, 0
    %v1754 = vsel %vm1242, 1, 0
    %v1755 = vsel %vm1243, 1, 0
    %v1756 = vsel %vm1244, 1, 0
    %v1757 = vsel %vm1245, 1, 0
    %v1758 = vsel %vm1246, 1, 0
    %v1759 = vsel %vm1247, 1, 0
    %v1760 = vsel %vm1248, 1, 0
    %v1761 = vsel %vm1249, 1, 0
    %v1762 = vsel %vm1250, 1, 0
    %v1763 = vsel %vm1251, 1, 0
    %v1764 = vsel %vm1252, 1, 0
    %v1765 = vsel %vm1253, 1, 0
    %v1766 = vsel %vm1254, 1, 0
    %v1767 = vsel %vm1255, 1, 0
    %v1768 = vsel %vm1256, 1, 0
    %v1769 = vsel %vm1257, 1, 0
    %v1770 = vsel %vm1258, 1, 0
    %v1771 = vsel %vm1259, 1, 0
    %v1772 = vsel %vm1260, 1, 0
    %v1773 = vsel %vm1261, 1, 0
    %v1774 = vsel %vm1262, 1, 0
    %v1775 = vsel %vm1263, 1, 0
    %v1776 = vsel %vm1264, 1, 0
    %v1777 = vsel %vm1265, 1, 0
    %v1778 = vsel %vm1266, 1, 0
    %v1779 = vsel %vm1267, 1, 0
    %v1780 = vsel %vm1268, 1, 0
    %v1781 = vsel %vm1269, 1, 0
    %v1782 = vsel %vm1270, 1, 0
    %v1783 = vsel %vm1271, 1, 0
    %v1784 = vsel %vm1272, 1, 0
    %v1785 = vsel %vm1273, 1, 0
    %v1786 = vsel %vm1274, 1, 0
    %v1787 = vsel %vm1275, 1, 0
    %v1788 = vsel %vm1276, 1, 0
    %v1789 = vsel %vm1277, 1, 0
    %v1790 = vsel %vm1278, 1, 0
    %v1791 = vsel %vm1279, 1, 0
    %v1792 = vsel %vm1280, 1, 0
    %v1793 = vsel %vm1281, 1, 0
    %v1794 = vsel %vm1282, 1, 0
    %v1795 = vsel %vm1283, 1, 0
    %v1796 = vsel %vm1284, 1, 0
    %v1797 = vcvt.s32.f32 %v1285
    %v1798 = vcvt.s32.f32 %v1286
    %v1799 = vcvt.s32.f32 %v1287
    %v1800 = vcvt.s32.f32 %v1288
    %v1801 = vcvt.s32.f32 %v1289
    %v1802 = vcvt.s32.f32 %v1290
    %v1803 = vcvt.s32.f32 %v1291
    %v1804 = vcvt.s32.f32 %v1292
    %v1805 = vcvt.s32.f32 %v1293
    %v1806 = vcvt.s32.f32 %v1294
    %v1807 = vcvt.s32.f32 %v1295
    %v1808 = vcvt.s32.f32 %v1296
    %v1809 = vcvt.s32.f32 %v1297
    %v1810 = vcvt.s32.f32 %v1298
    %v1811 = vcvt.s32.f32 %v1299
    %v1812 = vcvt.s32.f32 %v1300
    %v1813 = vcvt.s32.f32 %v1301
    %v1814 = vcvt.s32.f32 %v1302
    %v1815 = vcvt.s32.f32 %v1303
    %v1816 = vcvt.s32.f32 %v1304
    %v1817 = vcvt.s32.f32 %v1305
    %v1818 = vcvt.s32.f32 %v1306
    %v1819 = vcvt.s32.f32 %v1307
    %v1820 = vcvt.s32.f32 %v1308
    %v1821 = vcvt.s32.f32 %v1309
    %v1822 = vcvt.s32.f32 %v1310
    %v1823 = vcvt.s32.f32 %v1311
    %v1824 = vcvt.s32.f32 %v1312
    %v1825 = vcvt.s32.f32 %v1313
    %v1826 = vcvt.s32.f32 %v1314
    %v1827 = vcvt.s32.f32 %v1315
    %v1828 = vcvt.s32.f32 %v1316
    %v1829 = vcvt.s32.f32 %v1317
    %v1830 = vcvt.s32.f32 %v1318
    %v1831 = vcvt.s32.f32 %v1319
    %v1832 = vcvt.s32.f32 %v1320
    %v1833 = vcvt.s32.f32 %v1321
    %v1834 = vcvt.s32.f32 %v1322
    %v1835 = vcvt.s32.f32 %v1323
    %v1836 = vcvt.s32.f32 %v1324
    %v1837 = vcvt.s32.f32 %v1325
    %v1838 = vcvt.s32.f32 %v1326
    %v1839 = vcvt.s32.f32 %v1327
    %v1840 = vcvt.s32.f32 %v1328
    %v1841 = vcvt.s32.f32 %v1329
    %v1842 = vcvt.s32.f32 %v1330
    %v1843 = vcvt.s32.f32 %v1331
    %v1844 = vcvt.s32.f32 %v1332
    %v1845 = vcvt.s32.f32 %v1333
    %v1846 = vcvt.s32.f32 %v1334
    %v1847 = vcvt.s32.f32 %v1335
    %v1848 = vcvt.s32.f32 %v1336
    %v1849 = vcvt.s32.f32 %v1337
    %v1850 = vcvt.s32.f32 %v1338
    %v1851 = vcvt.s32.f32 %v1339
    %v1852 = vcvt.s32.f32 %v1340
    %v1853 = vcvt.s32.f32 %v1341
    %v1854 = vcvt.s32.f32 %v1342
    %v1855 = vcvt.s32.f32 %v1343
    %v1856 = vcvt.s32.f32 %v1344
    %v1857 = vcvt.s32.f32 %v1345
    %v1858 = vcvt.s32.f32 %v1346
    %v1859 = vcvt.s32.f32 %v1347
    %v1860 = vcvt.s32.f32 %v1348
    %v1861 = vcvt.s32.f32 %v1349
    %v1862 = vcvt.s32.f32 %v1350
    %v1863 = vcvt.s32.f32 %v1351
    %v1864 = vcvt.s32.f32 %v1352
    %v1865 = vcvt.s32.f32 %v1353
    %v1866 = vcvt.s32.f32 %v1354
    %v1867 = vcvt.s32.f32 %v1355
    %v1868 = vcvt.s32.f32 %v1356
    %v1869 = vcvt.s32.f32 %v1357
    %v1870 = vcvt.s32.f32 %v1358
    %v1871 = vcvt.s32.f32 %v1359
    %v1872 = vcvt.s32.f32 %v1360
    %v1873 = vcvt.s32.f32 %v1361
    %v1874 = vcvt.s32.f32 %v1362
    %v1875 = vcvt.s32.f32 %v1363
    %v1876 = vcvt.s32.f32 %v1364
    %v1877 = vcvt.s32.f32 %v1365
    %v1878 = vcvt.s32.f32 %v1366
    %v1879 = vcvt.s32.f32 %v1367
    %v1880 = vcvt.s32.f32 %v1368
    %v1881 = vcvt.s32.f32 %v1369
    %v1882 = vcvt.s32.f32 %v1370
    %v1883 = vcvt.s32.f32 %v1371
    %v1884 = vcvt.s32.f32 %v1372
    %v1885 = vcvt.s32.f32 %v1373
    %v1886 = vcvt.s32.f32 %v1374
    %v1887 = vcvt.s32.f32 %v1375
    %v1888 = vcvt.s32.f32 %v1376
    %v1889 = vcvt.s32.f32 %v1377
    %v1890 = vcvt.s32.f32 %v1378
    %v1891 = vcvt.s32.f32 %v1379
    %v1892 = vcvt.s32.f32 %v1380
    %v1893 = vcvt.s32.f32 %v1381
    %v1894 = vcvt.s32.f32 %v1382
    %v1895 = vcvt.s32.f32 %v1383
    %v1896 = vcvt.s32.f32 %v1384
    %v1897 = vcvt.s32.f32 %v1385
    %v1898 = vcvt.s32.f32 %v1386
    %v1899 = vcvt.s32.f32 %v1387
    %v1900 = vcvt.s32.f32 %v1388
    %v1901 = vcvt.s32.f32 %v1389
    %v1902 = vcvt.s32.f32 %v1390
    %v1903 = vcvt.s32.f32 %v1391
    %v1904 = vcvt.s32.f32 %v1392
    %v1905 = vcvt.s32.f32 %v1393
    %v1906 = vcvt.s32.f32 %v1394
    %v1907 = vcvt.s32.f32 %v1395
    %v1908 = vcvt.s32.f32 %v1396
    %v1909 = vcvt.s32.f32 %v1397
    %v1910 = vcvt.s32.f32 %v1398
    %v1911 = vcvt.s32.f32 %v1399
    %v1912 = vcvt.s32.f32 %v1400
    %v1913 = vcvt.s32.f32 %v1401
    %v1914 = vcvt.s32.f32 %v1402
    %v1915 = vcvt.s32.f32 %v1403
    %v1916 = vcvt.s32.f32 %v1404
    %v1917 = vcvt.s32.f32 %v1405
    %v1918 = vcvt.s32.f32 %v1406
    %v1919 = vcvt.s32.f32 %v1407
    %v1920 = vcvt.s32.f32 %v1408
    %v1921 = vcvt.s32.f32 %v1409
    %v1922 = vcvt.s32.f32 %v1410
    %v1923 = vcvt.s32.f32 %v1411
    %v1924 = vcvt.s32.f32 %v1412
    %v1925 = vcvt.s32.f32 %v1413
    %v1926 = vcvt.s32.f32 %v1414
    %v1927 = vcvt.s32.f32 %v1415
    %v1928 = vcvt.s32.f32 %v1416
    %v1929 = vcvt.s32.f32 %v1417
    %v1930 = vcvt.s32.f32 %v1418
    %v1931 = vcvt.s32.f32 %v1419
    %v1932 = vcvt.s32.f32 %v1420
    %v1933 = vcvt.s32.f32 %v1421
    %v1934 = vcvt.s32.f32 %v1422
    %v1935 = vcvt.s32.f32 %v1423
    %v1936 = vcvt.s32.f32 %v1424
    %v1937 = vcvt.s32.f32 %v1425
    %v1938 = vcvt.s32.f32 %v1426
    %v1939 = vcvt.s32.f32 %v1427
    %v1940 = vcvt.s32.f32 %v1428
    %v1941 = vcvt.s32.f32 %v1429
    %v1942 = vcvt.s32.f32 %v1430
    %v1943 = vcvt.s32.f32 %v1431
    %v1944 = vcvt.s32.f32 %v1432
    %v1945 = vcvt.s32.f32 %v1433
    %v1946 = vcvt.s32.f32 %v1434
    %v1947 = vcvt.s32.f32 %v1435
    %v1948 = vcvt.s32.f32 %v1436
    %v1949 = vcvt.s32.f32 %v1437
    %v1950 = vcvt.s32.f32 %v1438
    %v1951 = vcvt.s32.f32 %v1439
    %v1952 = vcvt.s32.f32 %v1440
    %v1953 = vcvt.s32.f32 %v1441
    %v1954 = vcvt.s32.f32 %v1442
    %v1955 = vcvt.s32.f32 %v1443
    %v1956 = vcvt.s32.f32 %v1444
    %v1957 = vcvt.s32.f32 %v1445
    %v1958 = vcvt.s32.f32 %v1446
    %v1959 = vcvt.s32.f32 %v1447
    %v1960 = vcvt.s32.f32 %v1448
    %v1961 = vcvt.s32.f32 %v1449
    %v1962 = vcvt.s32.f32 %v1450
    %v1963 = vcvt.s32.f32 %v1451
    %v1964 = vcvt.s32.f32 %v1452
    %v1965 = vcvt.s32.f32 %v1453
    %v1966 = vcvt.s32.f32 %v1454
    %v1967 = vcvt.s32.f32 %v1455
    %v1968 = vcvt.s32.f32 %v1456
    %v1969 = vcvt.s32.f32 %v1457
    %v1970 = vcvt.s32.f32 %v1458
    %v1971 = vcvt.s32.f32 %v1459
    %v1972 = vcvt.s32.f32 %v1460
    %v1973 = vcvt.s32.f32 %v1461
    %v1974 = vcvt.s32.f32 %v1462
    %v1975 = vcvt.s32.f32 %v1463
    %v1976 = vcvt.s32.f32 %v1464
    %v1977 = vcvt.s32.f32 %v1465
    %v1978 = vcvt.s32.f32 %v1466
    %v1979 = vcvt.s32.f32 %v1467
    %v1980 = vcvt.s32.f32 %v1468
    %v1981 = vcvt.s32.f32 %v1469
    %v1982 = vcvt.s32.f32 %v1470
    %v1983 = vcvt.s32.f32 %v1471
    %v1984 = vcvt.s32.f32 %v1472
    %v1985 = vcvt.s32.f32 %v1473
    %v1986 = vcvt.s32.f32 %v1474
    %v1987 = vcvt.s32.f32 %v1475
    %v1988 = vcvt.s32.f32 %v1476
    %v1989 = vcvt.s32.f32 %v1477
    %v1990 = vcvt.s32.f32 %v1478
    %v1991 = vcvt.s32.f32 %v1479
    %v1992 = vcvt.s32.f32 %v1480
    %v1993 = vcvt.s32.f32 %v1481
    %v1994 = vcvt.s32.f32 %v1482
    %v1995 = vcvt.s32.f32 %v1483
    %v1996 = vcvt.s32.f32 %v1484
    %v1997 = vcvt.s32.f32 %v1485
    %v1998 = vcvt.s32.f32 %v1486
    %v1999 = vcvt.s32.f32 %v1487
    %v2000 = vcvt.s32.f32 %v1488
    %v2001 = vcvt.s32.f32 %v1489
    %v2002 = vcvt.s32.f32 %v1490
    %v2003 = vcvt.s32.f32 %v1491
    %v2004 = vcvt.s32.f32 %v1492
    %v2005 = vcvt.s32.f32 %v1493
    %v2006 = vcvt.s32.f32 %v1494
    %v2007 = vcvt.s32.f32 %v1495
    %v2008 = vcvt.s32.f32 %v1496
    %v2009 = vcvt.s32.f32 %v1497
    %v2010 = vcvt.s32.f32 %v1498
    %v2011 = vcvt.s32.f32 %v1499
    %v2012 = vcvt.s32.f32 %v1500
    %v2013 = vcvt.s32.f32 %v1501
    %v2014 = vcvt.s32.f32 %v1502
    %v2015 = vcvt.s32.f32 %v1503
    %v2016 = vcvt.s32.f32 %v1504
    %v2017 = vcvt.s32.f32 %v1505
    %v2018 = vcvt.s32.f32 %v1506
    %v2019 = vcvt.s32.f32 %v1507
    %v2020 = vcvt.s32.f32 %v1508
    %v2021 = vcvt.s32.f32 %v1509
    %v2022 = vcvt.s32.f32 %v1510
    %v2023 = vcvt.s32.f32 %v1511
    %v2024 = vcvt.s32.f32 %v1512
    %v2025 = vcvt.s32.f32 %v1513
    %v2026 = vcvt.s32.f32 %v1514
    %v2027 = vcvt.s32.f32 %v1515
    %v2028 = vcvt.s32.f32 %v1516
    %v2029 = vcvt.s32.f32 %v1517
    %v2030 = vcvt.s32.f32 %v1518
    %v2031 = vcvt.s32.f32 %v1519
    %v2032 = vcvt.s32.f32 %v1520
    %v2033 = vcvt.s32.f32 %v1521
    %v2034 = vcvt.s32.f32 %v1522
    %v2035 = vcvt.s32.f32 %v1523
    %v2036 = vcvt.s32.f32 %v1524
    %v2037 = vcvt.s32.f32 %v1525
    %v2038 = vcvt.s32.f32 %v1526
    %v2039 = vcvt.s32.f32 %v1527
    %v2040 = vcvt.s32.f32 %v1528
    %v2041 = vcvt.s32.f32 %v1529
    %v2042 = vcvt.s32.f32 %v1530
    %v2043 = vcvt.s32.f32 %v1531
    %v2044 = vcvt.s32.f32 %v1532
    %v2045 = vcvt.s32.f32 %v1533
    %v2046 = vcvt.s32.f32 %v1534
    %v2047 = vcvt.s32.f32 %v1535
    %v2048 = vcvt.s32.f32 %v1536
    %v2049 = vcvt.s32.f32 %v1537
    %v2050 = vcvt.s32.f32 %v1538
    %v2051 = vcvt.s32.f32 %v1539
    %v2052 = vcvt.s32.f32 %v1540
    %v2053 = vcvt.s32.f32 %v1541
    %v2054 = vcvt.s32.f32 %v1542
    %v2055 = vcvt.s32.f32 %v1543
    %v2056 = vcvt.s32.f32 %v1544
    %v2057 = vcvt.s32.f32 %v1545
    %v2058 = vcvt.s32.f32 %v1546
    %v2059 = vcvt.s32.f32 %v1547
    %v2060 = vcvt.s32.f32 %v1548
    %v2061 = vcvt.s32.f32 %v1549
    %v2062 = vcvt.s32.f32 %v1550
    %v2063 = vcvt.s32.f32 %v1551
    %v2064 = vcvt.s32.f32 %v1552
    %v2065 = vcvt.s32.f32 %v1553
    %v2066 = vcvt.s32.f32 %v1554
    %v2067 = vcvt.s32.f32 %v1555
    %v2068 = vcvt.s32.f32 %v1556
    %v2069 = vcvt.s32.f32 %v1557
    %v2070 = vcvt.s32.f32 %v1558
    %v2071 = vcvt.s32.f32 %v1559
    %v2072 = vcvt.s32.f32 %v1560
    %v2073 = vcvt.s32.f32 %v1561
    %v2074 = vcvt.s32.f32 %v1562
    %v2075 = vcvt.s32.f32 %v1563
    %v2076 = vcvt.s32.f32 %v1564
    %v2077 = vcvt.s32.f32 %v1565
    %v2078 = vcvt.s32.f32 %v1566
    %v2079 = vcvt.s32.f32 %v1567
    %v2080 = vcvt.s32.f32 %v1568
    %v2081 = vcvt.s32.f32 %v1569
    %v2082 = vcvt.s32.f32 %v1570
    %v2083 = vcvt.s32.f32 %v1571
    %v2084 = vcvt.s32.f32 %v1572
    %v2085 = vcvt.s32.f32 %v1573
    %v2086 = vcvt.s32.f32 %v1574
    %v2087 = vcvt.s32.f32 %v1575
    %v2088 = vcvt.s32.f32 %v1576
    %v2089 = vcvt.s32.f32 %v1577
    %v2090 = vcvt.s32.f32 %v1578
    %v2091 = vcvt.s32.f32 %v1579
    %v2092 = vcvt.s32.f32 %v1580
    %v2093 = vcvt.s32.f32 %v1581
    %v2094 = vcvt.s32.f32 %v1582
    %v2095 = vcvt.s32.f32 %v1583
    %v2096 = vcvt.s32.f32 %v1584
    %v2097 = vcvt.s32.f32 %v1585
    %v2098 = vcvt.s32.f32 %v1586
    %v2099 = vcvt.s32.f32 %v1587
    %v2100 = vcvt.s32.f32 %v1588
    %v2101 = vcvt.s32.f32 %v1589
    %v2102 = vcvt.s32.f32 %v1590
    %v2103 = vcvt.s32.f32 %v1591
    %v2104 = vcvt.s32.f32 %v1592
    %v2105 = vcvt.s32.f32 %v1593
    %v2106 = vcvt.s32.f32 %v1594
    %v2107 = vcvt.s32.f32 %v1595
    %v2108 = vcvt.s32.f32 %v1596
    %v2109 = vcvt.s32.f32 %v1597
    %v2110 = vcvt.s32.f32 %v1598
    %v2111 = vcvt.s32.f32 %v1599
    %v2112 = vcvt.s32.f32 %v1600
    %v2113 = vcvt.s32.f32 %v1601
    %v2114 = vcvt.s32.f32 %v1602
    %v2115 = vcvt.s32.f32 %v1603
    %v2116 = vcvt.s32.f32 %v1604
    %v2117 = vcvt.s32.f32 %v1605
    %v2118 = vcvt.s32.f32 %v1606
    %v2119 = vcvt.s32.f32 %v1607
    %v2120 = vcvt.s32.f32 %v1608
    %v2121 = vcvt.s32.f32 %v1609
    %v2122 = vcvt.s32.f32 %v1610
    %v2123 = vcvt.s32.f32 %v1611
    %v2124 = vcvt.s32.f32 %v1612
    %v2125 = vcvt.s32.f32 %v1613
    %v2126 = vcvt.s32.f32 %v1614
    %v2127 = vcvt.s32.f32 %v1615
    %v2128 = vcvt.s32.f32 %v1616
    %v2129 = vcvt.s32.f32 %v1617
    %v2130 = vcvt.s32.f32 %v1618
    %v2131 = vcvt.s32.f32 %v1619
    %v2132 = vcvt.s32.f32 %v1620
    %v2133 = vcvt.s32.f32 %v1621
    %v2134 = vcvt.s32.f32 %v1622
    %v2135 = vcvt.s32.f32 %v1623
    %v2136 = vcvt.s32.f32 %v1624
    %v2137 = vcvt.s32.f32 %v1625
    %v2138 = vcvt.s32.f32 %v1626
    %v2139 = vcvt.s32.f32 %v1627
    %v2140 = vcvt.s32.f32 %v1628
    %v2141 = vcvt.s32.f32 %v1629
    %v2142 = vcvt.s32.f32 %v1630
    %v2143 = vcvt.s32.f32 %v1631
    %v2144 = vcvt.s32.f32 %v1632
    %v2145 = vcvt.s32.f32 %v1633
    %v2146 = vcvt.s32.f32 %v1634
    %v2147 = vcvt.s32.f32 %v1635
    %v2148 = vcvt.s32.f32 %v1636
    %v2149 = vcvt.s32.f32 %v1637
    %v2150 = vcvt.s32.f32 %v1638
    %v2151 = vcvt.s32.f32 %v1639
    %v2152 = vcvt.s32.f32 %v1640
    %v2153 = vcvt.s32.f32 %v1641
    %v2154 = vcvt.s32.f32 %v1642
    %v2155 = vcvt.s32.f32 %v1643
    %v2156 = vcvt.s32.f32 %v1644
    %v2157 = vcvt.s32.f32 %v1645
    %v2158 = vcvt.s32.f32 %v1646
    %v2159 = vcvt.s32.f32 %v1647
    %v2160 = vcvt.s32.f32 %v1648
    %v2161 = vcvt.s32.f32 %v1649
    %v2162 = vcvt.s32.f32 %v1650
    %v2163 = vcvt.s32.f32 %v1651
    %v2164 = vcvt.s32.f32 %v1652
    %v2165 = vcvt.s32.f32 %v1653
    %v2166 = vcvt.s32.f32 %v1654
    %v2167 = vcvt.s32.f32 %v1655
    %v2168 = vcvt.s32.f32 %v1656
    %v2169 = vcvt.s32.f32 %v1657
    %v2170 = vcvt.s32.f32 %v1658
    %v2171 = vcvt.s32.f32 %v1659
    %v2172 = vcvt.s32.f32 %v1660
    %v2173 = vcvt.s32.f32 %v1661
    %v2174 = vcvt.s32.f32 %v1662
    %v2175 = vcvt.s32.f32 %v1663
    %v2176 = vcvt.s32.f32 %v1664
    %v2177 = vcvt.s32.f32 %v1665
    %v2178 = vcvt.s32.f32 %v1666
    %v2179 = vcvt.s32.f32 %v1667
    %v2180 = vcvt.s32.f32 %v1668
    %v2181 = vcvt.s32.f32 %v1669
    %v2182 = vcvt.s32.f32 %v1670
    %v2183 = vcvt.s32.f32 %v1671
    %v2184 = vcvt.s32.f32 %v1672
    %v2185 = vcvt.s32.f32 %v1673
    %v2186 = vcvt.s32.f32 %v1674
    %v2187 = vcvt.s32.f32 %v1675
    %v2188 = vcvt.s32.f32 %v1676
    %v2189 = vcvt.s32.f32 %v1677
    %v2190 = vcvt.s32.f32 %v1678
    %v2191 = vcvt.s32.f32 %v1679
    %v2192 = vcvt.s32.f32 %v1680
    %v2193 = vcvt.s32.f32 %v1681
    %v2194 = vcvt.s32.f32 %v1682
    %v2195 = vcvt.s32.f32 %v1683
    %v2196 = vcvt.s32.f32 %v1684
    %v2197 = vcvt.s32.f32 %v1685
    %v2198 = vcvt.s32.f32 %v1686
    %v2199 = vcvt.s32.f32 %v1687
    %v2200 = vcvt.s32.f32 %v1688
    %v2201 = vcvt.s32.f32 %v1689
    %v2202 = vcvt.s32.f32 %v1690
    %v2203 = vcvt.s32.f32 %v1691
    %v2204 = vcvt.s32.f32 %v1692
    %v2205 = vcvt.s32.f32 %v1693
    %v2206 = vcvt.s32.f32 %v1694
    %v2207 = vcvt.s32.f32 %v1695
    %v2208 = vcvt.s32.f32 %v1696
    %v2209 = vcvt.s32.f32 %v1697
    %v2210 = vcvt.s32.f32 %v1698
    %v2211 = vcvt.s32.f32 %v1699
    %v2212 = vcvt.s32.f32 %v1700
    %v2213 = vcvt.s32.f32 %v1701
    %v2214 = vcvt.s32.f32 %v1702
    %v2215 = vcvt.s32.f32 %v1703
    %v2216 = vcvt.s32.f32 %v1704
    %v2217 = vcvt.s32.f32 %v1705
    %v2218 = vcvt.s32.f32 %v1706
    %v2219 = vcvt.s32.f32 %v1707
    %v2220 = vcvt.s32.f32 %v1708
    %v2221 = vcvt.s32.f32 %v1709
    %v2222 = vcvt.s32.f32 %v1710
    %v2223 = vcvt.s32.f32 %v1711
    %v2224 = vcvt.s32.f32 %v1712
    %v2225 = vcvt.s32.f32 %v1713
    %v2226 = vcvt.s32.f32 %v1714
    %v2227 = vcvt.s32.f32 %v1715
    %v2228 = vcvt.s32.f32 %v1716
    %v2229 = vcvt.s32.f32 %v1717
    %v2230 = vcvt.s32.f32 %v1718
    %v2231 = vcvt.s32.f32 %v1719
    %v2232 = vcvt.s32.f32 %v1720
    %v2233 = vcvt.s32.f32 %v1721
    %v2234 = vcvt.s32.f32 %v1722
    %v2235 = vcvt.s32.f32 %v1723
    %v2236 = vcvt.s32.f32 %v1724
    %v2237 = vcvt.s32.f32 %v1725
    %v2238 = vcvt.s32.f32 %v1726
    %v2239 = vcvt.s32.f32 %v1727
    %v2240 = vcvt.s32.f32 %v1728
    %v2241 = vcvt.s32.f32 %v1729
    %v2242 = vcvt.s32.f32 %v1730
    %v2243 = vcvt.s32.f32 %v1731
    %v2244 = vcvt.s32.f32 %v1732
    %v2245 = vcvt.s32.f32 %v1733
    %v2246 = vcvt.s32.f32 %v1734
    %v2247 = vcvt.s32.f32 %v1735
    %v2248 = vcvt.s32.f32 %v1736
    %v2249 = vcvt.s32.f32 %v1737
    %v2250 = vcvt.s32.f32 %v1738
    %v2251 = vcvt.s32.f32 %v1739
    %v2252 = vcvt.s32.f32 %v1740
    %v2253 = vcvt.s32.f32 %v1741
    %v2254 = vcvt.s32.f32 %v1742
    %v2255 = vcvt.s32.f32 %v1743
    %v2256 = vcvt.s32.f32 %v1744
    %v2257 = vcvt.s32.f32 %v1745
    %v2258 = vcvt.s32.f32 %v1746
    %v2259 = vcvt.s32.f32 %v1747
    %v2260 = vcvt.s32.f32 %v1748
    %v2261 = vcvt.s32.f32 %v1749
    %v2262 = vcvt.s32.f32 %v1750
    %v2263 = vcvt.s32.f32 %v1751
    %v2264 = vcvt.s32.f32 %v1752
    %v2265 = vcvt.s32.f32 %v1753
    %v2266 = vcvt.s32.f32 %v1754
    %v2267 = vcvt.s32.f32 %v1755
    %v2268 = vcvt.s32.f32 %v1756
    %v2269 = vcvt.s32.f32 %v1757
    %v2270 = vcvt.s32.f32 %v1758
    %v2271 = vcvt.s32.f32 %v1759
    %v2272 = vcvt.s32.f32 %v1760
    %v2273 = vcvt.s32.f32 %v1761
    %v2274 = vcvt.s32.f32 %v1762
    %v2275 = vcvt.s32.f32 %v1763
    %v2276 = vcvt.s32.f32 %v1764
    %v2277 = vcvt.s32.f32 %v1765
    %v2278 = vcvt.s32.f32 %v1766
    %v2279 = vcvt.s32.f32 %v1767
    %v2280 = vcvt.s32.f32 %v1768
    %v2281 = vcvt.s32.f32 %v1769
    %v2282 = vcvt.s32.f32 %v1770
    %v2283 = vcvt.s32.f32 %v1771
    %v2284 = vcvt.s32.f32 %v1772
    %v2285 = vcvt.s32.f32 %v1773
    %v2286 = vcvt.s32.f32 %v1774
    %v2287 = vcvt.s32.f32 %v1775
    %v2288 = vcvt.s32.f32 %v1776
    %v2289 = vcvt.s32.f32 %v1777
    %v2290 = vcvt.s32.f32 %v1778
    %v2291 = vcvt.s32.f32 %v1779
    %v2292 = vcvt.s32.f32 %v1780
    %v2293 = vcvt.s32.f32 %v1781
    %v2294 = vcvt.s32.f32 %v1782
    %v2295 = vcvt.s32.f32 %v1783
    %v2296 = vcvt.s32.f32 %v1784
    %v2297 = vcvt.s32.f32 %v1785
    %v2298 = vcvt.s32.f32 %v1786
    %v2299 = vcvt.s32.f32 %v1787
    %v2300 = vcvt.s32.f32 %v1788
    %v2301 = vcvt.s32.f32 %v1789
    %v2302 = vcvt.s32.f32 %v1790
    %v2303 = vcvt.s32.f32 %v1791
    %v2304 = vcvt.s32.f32 %v1792
    %v2305 = vcvt.s32.f32 %v1793
    %v2306 = vcvt.s32.f32 %v1794
    %v2307 = vcvt.s32.f32 %v1795
    %v2308 = vcvt.s32.f32 %v1796
    %v2309 = vadd.f32 %v1797, %v1801
    %v2310 = vrot.slane %v2309, 4
    %v2311 = vadd.f32 %v2309, %v2310
    %v2312 = vrot.slane %v2311, 2
    %v2313 = vadd.f32 %v2311, %v2312
    %v2314 = vrot.slane %v2313, 1
    %v2315 = vadd.f32 %v2313, %v2314
    %v2316 = vadd.f32 %v1798, %v1802
    %v2317 = vrot.slane %v2316, 4
    %v2318 = vadd.f32 %v2316, %v2317
    %v2319 = vrot.slane %v2318, 2
    %v2320 = vadd.f32 %v2318, %v2319
    %v2321 = vrot.slane %v2320, 1
    %v2322 = vadd.f32 %v2320, %v2321
    %v2323 = vadd.f32 %v1799, %v1803
    %v2324 = vrot.slane %v2323, 4
    %v2325 = vadd.f32 %v2323, %v2324
    %v2326 = vrot.slane %v2325, 2
    %v2327 = vadd.f32 %v2325, %v2326
    %v2328 = vrot.slane %v2327, 1
    %v2329 = vadd.f32 %v2327, %v2328
    %v2330 = vadd.f32 %v1800, %v1804
    %v2331 = vrot.slane %v2330, 4
    %v2332 = vadd.f32 %v2330, %v2331
    %v2333 = vrot.slane %v2332, 2
    %v2334 = vadd.f32 %v2332, %v2333
    %v2335 = vrot.slane %v2334, 1
    %v2336 = vadd.f32 %v2334, %v2335
    %v2337 = vadd.f32 %v1805, %v1809
    %v2338 = vrot.slane %v2337, 4
    %v2339 = vadd.f32 %v2337, %v2338
    %v2340 = vrot.slane %v2339, 2
    %v2341 = vadd.f32 %v2339, %v2340
    %v2342 = vrot.slane %v2341, 1
    %v2343 = vadd.f32 %v2341, %v2342
    %v2344 = vadd.f32 %v1806, %v1810
    %v2345 = vrot.slane %v2344, 4
    %v2346 = vadd.f32 %v2344, %v2345
    %v2347 = vrot.slane %v2346, 2
    %v2348 = vadd.f32 %v2346, %v2347
    %v2349 = vrot.slane %v2348, 1
    %v2350 = vadd.f32 %v2348, %v2349
    %v2351 = vadd.f32 %v1807, %v1811
    %v2352 = vrot.slane %v2351, 4
    %v2353 = vadd.f32 %v2351, %v2352
    %v2354 = vrot.slane %v2353, 2
    %v2355 = vadd.f32 %v2353, %v2354
    %v2356 = vrot.slane %v2355, 1
    %v2357 = vadd.f32 %v2355, %v2356
    %v2358 = vadd.f32 %v1808, %v1812
    %v2359 = vrot.slane %v2358, 4
    %v2360 = vadd.f32 %v2358, %v2359
    %v2361 = vrot.slane %v2360, 2
    %v2362 = vadd.f32 %v2360, %v2361
    %v2363 = vrot.slane %v2362, 1
    %v2364 = vadd.f32 %v2362, %v2363
    %v2365 = vadd.f32 %v1813, %v1817
    %v2366 = vrot.slane %v2365, 4
    %v2367 = vadd.f32 %v2365, %v2366
    %v2368 = vrot.slane %v2367, 2
    %v2369 = vadd.f32 %v2367, %v2368
    %v2370 = vrot.slane %v2369, 1
    %v2371 = vadd.f32 %v2369, %v2370
    %v2372 = vadd.f32 %v1814, %v1818
    %v2373 = vrot.slane %v2372, 4
    %v2374 = vadd.f32 %v2372, %v2373
    %v2375 = vrot.slane %v2374, 2
    %v2376 = vadd.f32 %v2374, %v2375
    %v2377 = vrot.slane %v2376, 1
    %v2378 = vadd.f32 %v2376, %v2377
    %v2379 = vadd.f32 %v1815, %v1819
    %v2380 = vrot.slane %v2379, 4
    %v2381 = vadd.f32 %v2379, %v2380
    %v2382 = vrot.slane %v2381, 2
    %v2383 = vadd.f32 %v2381, %v2382
    %v2384 = vrot.slane %v2383, 1
    %v2385 = vadd.f32 %v2383, %v2384
    %v2386 = vadd.f32 %v1816, %v1820
    %v2387 = vrot.slane %v2386, 4
    %v2388 = vadd.f32 %v2386, %v2387
    %v2389 = vrot.slane %v2388, 2
    %v2390 = vadd.f32 %v2388, %v2389
    %v2391 = vrot.slane %v2390, 1
    %v2392 = vadd.f32 %v2390, %v2391
    %v2393 = vadd.f32 %v1821, %v1825
    %v2394 = vrot.slane %v2393, 4
    %v2395 = vadd.f32 %v2393, %v2394
    %v2396 = vrot.slane %v2395, 2
    %v2397 = vadd.f32 %v2395, %v2396
    %v2398 = vrot.slane %v2397, 1
    %v2399 = vadd.f32 %v2397, %v2398
    %v2400 = vadd.f32 %v1822, %v1826
    %v2401 = vrot.slane %v2400, 4
    %v2402 = vadd.f32 %v2400, %v2401
    %v2403 = vrot.slane %v2402, 2
    %v2404 = vadd.f32 %v2402, %v2403
    %v2405 = vrot.slane %v2404, 1
    %v2406 = vadd.f32 %v2404, %v2405
    %v2407 = vadd.f32 %v1823, %v1827
    %v2408 = vrot.slane %v2407, 4
    %v2409 = vadd.f32 %v2407, %v2408
    %v2410 = vrot.slane %v2409, 2
    %v2411 = vadd.f32 %v2409, %v2410
    %v2412 = vrot.slane %v2411, 1
    %v2413 = vadd.f32 %v2411, %v2412
    %v2414 = vadd.f32 %v1824, %v1828
    %v2415 = vrot.slane %v2414, 4
    %v2416 = vadd.f32 %v2414, %v2415
    %v2417 = vrot.slane %v2416, 2
    %v2418 = vadd.f32 %v2416, %v2417
    %v2419 = vrot.slane %v2418, 1
    %v2420 = vadd.f32 %v2418, %v2419
    %v2421 = vadd.f32 %v1829, %v1833
    %v2422 = vrot.slane %v2421, 4
    %v2423 = vadd.f32 %v2421, %v2422
    %v2424 = vrot.slane %v2423, 2
    %v2425 = vadd.f32 %v2423, %v2424
    %v2426 = vrot.slane %v2425, 1
    %v2427 = vadd.f32 %v2425, %v2426
    %v2428 = vadd.f32 %v1830, %v1834
    %v2429 = vrot.slane %v2428, 4
    %v2430 = vadd.f32 %v2428, %v2429
    %v2431 = vrot.slane %v2430, 2
    %v2432 = vadd.f32 %v2430, %v2431
    %v2433 = vrot.slane %v2432, 1
    %v2434 = vadd.f32 %v2432, %v2433
    %v2435 = vadd.f32 %v1831, %v1835
    %v2436 = vrot.slane %v2435, 4
    %v2437 = vadd.f32 %v2435, %v2436
    %v2438 = vrot.slane %v2437, 2
    %v2439 = vadd.f32 %v2437, %v2438
    %v2440 = vrot.slane %v2439, 1
    %v2441 = vadd.f32 %v2439, %v2440
    %v2442 = vadd.f32 %v1832, %v1836
    %v2443 = vrot.slane %v2442, 4
    %v2444 = vadd.f32 %v2442, %v2443
    %v2445 = vrot.slane %v2444, 2
    %v2446 = vadd.f32 %v2444, %v2445
    %v2447 = vrot.slane %v2446, 1
    %v2448 = vadd.f32 %v2446, %v2447
    %v2449 = vadd.f32 %v1837, %v1841
    %v2450 = vrot.slane %v2449, 4
    %v2451 = vadd.f32 %v2449, %v2450
    %v2452 = vrot.slane %v2451, 2
    %v2453 = vadd.f32 %v2451, %v2452
    %v2454 = vrot.slane %v2453, 1
    %v2455 = vadd.f32 %v2453, %v2454
    %v2456 = vadd.f32 %v1838, %v1842
    %v2457 = vrot.slane %v2456, 4
    %v2458 = vadd.f32 %v2456, %v2457
    %v2459 = vrot.slane %v2458, 2
    %v2460 = vadd.f32 %v2458, %v2459
    %v2461 = vrot.slane %v2460, 1
    %v2462 = vadd.f32 %v2460, %v2461
    %v2463 = vadd.f32 %v1839, %v1843
    %v2464 = vrot.slane %v2463, 4
    %v2465 = vadd.f32 %v2463, %v2464
    %v2466 = vrot.slane %v2465, 2
    %v2467 = vadd.f32 %v2465, %v2466
    %v2468 = vrot.slane %v2467, 1
    %v2469 = vadd.f32 %v2467, %v2468
    %v2470 = vadd.f32 %v1840, %v1844
    %v2471 = vrot.slane %v2470, 4
    %v2472 = vadd.f32 %v2470, %v2471
    %v2473 = vrot.slane %v2472, 2
    %v2474 = vadd.f32 %v2472, %v2473
    %v2475 = vrot.slane %v2474, 1
    %v2476 = vadd.f32 %v2474, %v2475
    %v2477 = vadd.f32 %v1845, %v1849
    %v2478 = vrot.slane %v2477, 4
    %v2479 = vadd.f32 %v2477, %v2478
    %v2480 = vrot.slane %v2479, 2
    %v2481 = vadd.f32 %v2479, %v2480
    %v2482 = vrot.slane %v2481, 1
    %v2483 = vadd.f32 %v2481, %v2482
    %v2484 = vadd.f32 %v1846, %v1850
    %v2485 = vrot.slane %v2484, 4
    %v2486 = vadd.f32 %v2484, %v2485
    %v2487 = vrot.slane %v2486, 2
    %v2488 = vadd.f32 %v2486, %v2487
    %v2489 = vrot.slane %v2488, 1
    %v2490 = vadd.f32 %v2488, %v2489
    %v2491 = vadd.f32 %v1847, %v1851
    %v2492 = vrot.slane %v2491, 4
    %v2493 = vadd.f32 %v2491, %v2492
    %v2494 = vrot.slane %v2493, 2
    %v2495 = vadd.f32 %v2493, %v2494
    %v2496 = vrot.slane %v2495, 1
    %v2497 = vadd.f32 %v2495, %v2496
    %v2498 = vadd.f32 %v1848, %v1852
    %v2499 = vrot.slane %v2498, 4
    %v2500 = vadd.f32 %v2498, %v2499
    %v2501 = vrot.slane %v2500, 2
    %v2502 = vadd.f32 %v2500, %v2501
    %v2503 = vrot.slane %v2502, 1
    %v2504 = vadd.f32 %v2502, %v2503
    %v2505 = vadd.f32 %v1853, %v1857
    %v2506 = vrot.slane %v2505, 4
    %v2507 = vadd.f32 %v2505, %v2506
    %v2508 = vrot.slane %v2507, 2
    %v2509 = vadd.f32 %v2507, %v2508
    %v2510 = vrot.slane %v2509, 1
    %v2511 = vadd.f32 %v2509, %v2510
    %v2512 = vadd.f32 %v1854, %v1858
    %v2513 = vrot.slane %v2512, 4
    %v2514 = vadd.f32 %v2512, %v2513
    %v2515 = vrot.slane %v2514, 2
    %v2516 = vadd.f32 %v2514, %v2515
    %v2517 = vrot.slane %v2516, 1
    %v2518 = vadd.f32 %v2516, %v2517
    %v2519 = vadd.f32 %v1855, %v1859
    %v2520 = vrot.slane %v2519, 4
    %v2521 = vadd.f32 %v2519, %v2520
    %v2522 = vrot.slane %v2521, 2
    %v2523 = vadd.f32 %v2521, %v2522
    %v2524 = vrot.slane %v2523, 1
    %v2525 = vadd.f32 %v2523, %v2524
    %v2526 = vadd.f32 %v1856, %v1860
    %v2527 = vrot.slane %v2526, 4
    %v2528 = vadd.f32 %v2526, %v2527
    %v2529 = vrot.slane %v2528, 2
    %v2530 = vadd.f32 %v2528, %v2529
    %v2531 = vrot.slane %v2530, 1
    %v2532 = vadd.f32 %v2530, %v2531
    %v2533 = vadd.f32 %v1861, %v1865
    %v2534 = vrot.slane %v2533, 4
    %v2535 = vadd.f32 %v2533, %v2534
    %v2536 = vrot.slane %v2535, 2
    %v2537 = vadd.f32 %v2535, %v2536
    %v2538 = vrot.slane %v2537, 1
    %v2539 = vadd.f32 %v2537, %v2538
    %v2540 = vadd.f32 %v1862, %v1866
    %v2541 = vrot.slane %v2540, 4
    %v2542 = vadd.f32 %v2540, %v2541
    %v2543 = vrot.slane %v2542, 2
    %v2544 = vadd.f32 %v2542, %v2543
    %v2545 = vrot.slane %v2544, 1
    %v2546 = vadd.f32 %v2544, %v2545
    %v2547 = vadd.f32 %v1863, %v1867
    %v2548 = vrot.slane %v2547, 4
    %v2549 = vadd.f32 %v2547, %v2548
    %v2550 = vrot.slane %v2549, 2
    %v2551 = vadd.f32 %v2549, %v2550
    %v2552 = vrot.slane %v2551, 1
    %v2553 = vadd.f32 %v2551, %v2552
    %v2554 = vadd.f32 %v1864, %v1868
    %v2555 = vrot.slane %v2554, 4
    %v2556 = vadd.f32 %v2554, %v2555
    %v2557 = vrot.slane %v2556, 2
    %v2558 = vadd.f32 %v2556, %v2557
    %v2559 = vrot.slane %v2558, 1
    %v2560 = vadd.f32 %v2558, %v2559
    %v2561 = vadd.f32 %v1869, %v1873
    %v2562 = vrot.slane %v2561, 4
    %v2563 = vadd.f32 %v2561, %v2562
    %v2564 = vrot.slane %v2563, 2
    %v2565 = vadd.f32 %v2563, %v2564
    %v2566 = vrot.slane %v2565, 1
    %v2567 = vadd.f32 %v2565, %v2566
    %v2568 = vadd.f32 %v1870, %v1874
    %v2569 = vrot.slane %v2568, 4
    %v2570 = vadd.f32 %v2568, %v2569
    %v2571 = vrot.slane %v2570, 2
    %v2572 = vadd.f32 %v2570, %v2571
    %v2573 = vrot.slane %v2572, 1
    %v2574 = vadd.f32 %v2572, %v2573
    %v2575 = vadd.f32 %v1871, %v1875
    %v2576 = vrot.slane %v2575, 4
    %v2577 = vadd.f32 %v2575, %v2576
    %v2578 = vrot.slane %v2577, 2
    %v2579 = vadd.f32 %v2577, %v2578
    %v2580 = vrot.slane %v2579, 1
    %v2581 = vadd.f32 %v2579, %v2580
    %v2582 = vadd.f32 %v1872, %v1876
    %v2583 = vrot.slane %v2582, 4
    %v2584 = vadd.f32 %v2582, %v2583
    %v2585 = vrot.slane %v2584, 2
    %v2586 = vadd.f32 %v2584, %v2585
    %v2587 = vrot.slane %v2586, 1
    %v2588 = vadd.f32 %v2586, %v2587
    %v2589 = vadd.f32 %v1877, %v1881
    %v2590 = vrot.slane %v2589, 4
    %v2591 = vadd.f32 %v2589, %v2590
    %v2592 = vrot.slane %v2591, 2
    %v2593 = vadd.f32 %v2591, %v2592
    %v2594 = vrot.slane %v2593, 1
    %v2595 = vadd.f32 %v2593, %v2594
    %v2596 = vadd.f32 %v1878, %v1882
    %v2597 = vrot.slane %v2596, 4
    %v2598 = vadd.f32 %v2596, %v2597
    %v2599 = vrot.slane %v2598, 2
    %v2600 = vadd.f32 %v2598, %v2599
    %v2601 = vrot.slane %v2600, 1
    %v2602 = vadd.f32 %v2600, %v2601
    %v2603 = vadd.f32 %v1879, %v1883
    %v2604 = vrot.slane %v2603, 4
    %v2605 = vadd.f32 %v2603, %v2604
    %v2606 = vrot.slane %v2605, 2
    %v2607 = vadd.f32 %v2605, %v2606
    %v2608 = vrot.slane %v2607, 1
    %v2609 = vadd.f32 %v2607, %v2608
    %v2610 = vadd.f32 %v1880, %v1884
    %v2611 = vrot.slane %v2610, 4
    %v2612 = vadd.f32 %v2610, %v2611
    %v2613 = vrot.slane %v2612, 2
    %v2614 = vadd.f32 %v2612, %v2613
    %v2615 = vrot.slane %v2614, 1
    %v2616 = vadd.f32 %v2614, %v2615
    %v2617 = vadd.f32 %v1885, %v1889
    %v2618 = vrot.slane %v2617, 4
    %v2619 = vadd.f32 %v2617, %v2618
    %v2620 = vrot.slane %v2619, 2
    %v2621 = vadd.f32 %v2619, %v2620
    %v2622 = vrot.slane %v2621, 1
    %v2623 = vadd.f32 %v2621, %v2622
    %v2624 = vadd.f32 %v1886, %v1890
    %v2625 = vrot.slane %v2624, 4
    %v2626 = vadd.f32 %v2624, %v2625
    %v2627 = vrot.slane %v2626, 2
    %v2628 = vadd.f32 %v2626, %v2627
    %v2629 = vrot.slane %v2628, 1
    %v2630 = vadd.f32 %v2628, %v2629
    %v2631 = vadd.f32 %v1887, %v1891
    %v2632 = vrot.slane %v2631, 4
    %v2633 = vadd.f32 %v2631, %v2632
    %v2634 = vrot.slane %v2633, 2
    %v2635 = vadd.f32 %v2633, %v2634
    %v2636 = vrot.slane %v2635, 1
    %v2637 = vadd.f32 %v2635, %v2636
    %v2638 = vadd.f32 %v1888, %v1892
    %v2639 = vrot.slane %v2638, 4
    %v2640 = vadd.f32 %v2638, %v2639
    %v2641 = vrot.slane %v2640, 2
    %v2642 = vadd.f32 %v2640, %v2641
    %v2643 = vrot.slane %v2642, 1
    %v2644 = vadd.f32 %v2642, %v2643
    %v2645 = vadd.f32 %v1893, %v1897
    %v2646 = vrot.slane %v2645, 4
    %v2647 = vadd.f32 %v2645, %v2646
    %v2648 = vrot.slane %v2647, 2
    %v2649 = vadd.f32 %v2647, %v2648
    %v2650 = vrot.slane %v2649, 1
    %v2651 = vadd.f32 %v2649, %v2650
    %v2652 = vadd.f32 %v1894, %v1898
    %v2653 = vrot.slane %v2652, 4
    %v2654 = vadd.f32 %v2652, %v2653
    %v2655 = vrot.slane %v2654, 2
    %v2656 = vadd.f32 %v2654, %v2655
    %v2657 = vrot.slane %v2656, 1
    %v2658 = vadd.f32 %v2656, %v2657
    %v2659 = vadd.f32 %v1895, %v1899
    %v2660 = vrot.slane %v2659, 4
    %v2661 = vadd.f32 %v2659, %v2660
    %v2662 = vrot.slane %v2661, 2
    %v2663 = vadd.f32 %v2661, %v2662
    %v2664 = vrot.slane %v2663, 1
    %v2665 = vadd.f32 %v2663, %v2664
    %v2666 = vadd.f32 %v1896, %v1900
    %v2667 = vrot.slane %v2666, 4
    %v2668 = vadd.f32 %v2666, %v2667
    %v2669 = vrot.slane %v2668, 2
    %v2670 = vadd.f32 %v2668, %v2669
    %v2671 = vrot.slane %v2670, 1
    %v2672 = vadd.f32 %v2670, %v2671
    %v2673 = vadd.f32 %v1901, %v1905
    %v2674 = vrot.slane %v2673, 4
    %v2675 = vadd.f32 %v2673, %v2674
    %v2676 = vrot.slane %v2675, 2
    %v2677 = vadd.f32 %v2675, %v2676
    %v2678 = vrot.slane %v2677, 1
    %v2679 = vadd.f32 %v2677, %v2678
    %v2680 = vadd.f32 %v1902, %v1906
    %v2681 = vrot.slane %v2680, 4
    %v2682 = vadd.f32 %v2680, %v2681
    %v2683 = vrot.slane %v2682, 2
    %v2684 = vadd.f32 %v2682, %v2683
    %v2685 = vrot.slane %v2684, 1
    %v2686 = vadd.f32 %v2684, %v2685
    %v2687 = vadd.f32 %v1903, %v1907
    %v2688 = vrot.slane %v2687, 4
    %v2689 = vadd.f32 %v2687, %v2688
    %v2690 = vrot.slane %v2689, 2
    %v2691 = vadd.f32 %v2689, %v2690
    %v2692 = vrot.slane %v2691, 1
    %v2693 = vadd.f32 %v2691, %v2692
    %v2694 = vadd.f32 %v1904, %v1908
    %v2695 = vrot.slane %v2694, 4
    %v2696 = vadd.f32 %v2694, %v2695
    %v2697 = vrot.slane %v2696, 2
    %v2698 = vadd.f32 %v2696, %v2697
    %v2699 = vrot.slane %v2698, 1
    %v2700 = vadd.f32 %v2698, %v2699
    %v2701 = vadd.f32 %v1909, %v1913
    %v2702 = vrot.slane %v2701, 4
    %v2703 = vadd.f32 %v2701, %v2702
    %v2704 = vrot.slane %v2703, 2
    %v2705 = vadd.f32 %v2703, %v2704
    %v2706 = vrot.slane %v2705, 1
    %v2707 = vadd.f32 %v2705, %v2706
    %v2708 = vadd.f32 %v1910, %v1914
    %v2709 = vrot.slane %v2708, 4
    %v2710 = vadd.f32 %v2708, %v2709
    %v2711 = vrot.slane %v2710, 2
    %v2712 = vadd.f32 %v2710, %v2711
    %v2713 = vrot.slane %v2712, 1
    %v2714 = vadd.f32 %v2712, %v2713
    %v2715 = vadd.f32 %v1911, %v1915
    %v2716 = vrot.slane %v2715, 4
    %v2717 = vadd.f32 %v2715, %v2716
    %v2718 = vrot.slane %v2717, 2
    %v2719 = vadd.f32 %v2717, %v2718
    %v2720 = vrot.slane %v2719, 1
    %v2721 = vadd.f32 %v2719, %v2720
    %v2722 = vadd.f32 %v1912, %v1916
    %v2723 = vrot.slane %v2722, 4
    %v2724 = vadd.f32 %v2722, %v2723
    %v2725 = vrot.slane %v2724, 2
    %v2726 = vadd.f32 %v2724, %v2725
    %v2727 = vrot.slane %v2726, 1
    %v2728 = vadd.f32 %v2726, %v2727
    %v2729 = vadd.f32 %v1917, %v1921
    %v2730 = vrot.slane %v2729, 4
    %v2731 = vadd.f32 %v2729, %v2730
    %v2732 = vrot.slane %v2731, 2
    %v2733 = vadd.f32 %v2731, %v2732
    %v2734 = vrot.slane %v2733, 1
    %v2735 = vadd.f32 %v2733, %v2734
    %v2736 = vadd.f32 %v1918, %v1922
    %v2737 = vrot.slane %v2736, 4
    %v2738 = vadd.f32 %v2736, %v2737
    %v2739 = vrot.slane %v2738, 2
    %v2740 = vadd.f32 %v2738, %v2739
    %v2741 = vrot.slane %v2740, 1
    %v2742 = vadd.f32 %v2740, %v2741
    %v2743 = vadd.f32 %v1919, %v1923
    %v2744 = vrot.slane %v2743, 4
    %v2745 = vadd.f32 %v2743, %v2744
    %v2746 = vrot.slane %v2745, 2
    %v2747 = vadd.f32 %v2745, %v2746
    %v2748 = vrot.slane %v2747, 1
    %v2749 = vadd.f32 %v2747, %v2748
    %v2750 = vadd.f32 %v1920, %v1924
    %v2751 = vrot.slane %v2750, 4
    %v2752 = vadd.f32 %v2750, %v2751
    %v2753 = vrot.slane %v2752, 2
    %v2754 = vadd.f32 %v2752, %v2753
    %v2755 = vrot.slane %v2754, 1
    %v2756 = vadd.f32 %v2754, %v2755
    %v2757 = vadd.f32 %v1925, %v1929
    %v2758 = vrot.slane %v2757, 4
    %v2759 = vadd.f32 %v2757, %v2758
    %v2760 = vrot.slane %v2759, 2
    %v2761 = vadd.f32 %v2759, %v2760
    %v2762 = vrot.slane %v2761, 1
    %v2763 = vadd.f32 %v2761, %v2762
    %v2764 = vadd.f32 %v1926, %v1930
    %v2765 = vrot.slane %v2764, 4
    %v2766 = vadd.f32 %v2764, %v2765
    %v2767 = vrot.slane %v2766, 2
    %v2768 = vadd.f32 %v2766, %v2767
    %v2769 = vrot.slane %v2768, 1
    %v2770 = vadd.f32 %v2768, %v2769
    %v2771 = vadd.f32 %v1927, %v1931
    %v2772 = vrot.slane %v2771, 4
    %v2773 = vadd.f32 %v2771, %v2772
    %v2774 = vrot.slane %v2773, 2
    %v2775 = vadd.f32 %v2773, %v2774
    %v2776 = vrot.slane %v2775, 1
    %v2777 = vadd.f32 %v2775, %v2776
    %v2778 = vadd.f32 %v1928, %v1932
    %v2779 = vrot.slane %v2778, 4
    %v2780 = vadd.f32 %v2778, %v2779
    %v2781 = vrot.slane %v2780, 2
    %v2782 = vadd.f32 %v2780, %v2781
    %v2783 = vrot.slane %v2782, 1
    %v2784 = vadd.f32 %v2782, %v2783
    %v2785 = vadd.f32 %v1933, %v1937
    %v2786 = vrot.slane %v2785, 4
    %v2787 = vadd.f32 %v2785, %v2786
    %v2788 = vrot.slane %v2787, 2
    %v2789 = vadd.f32 %v2787, %v2788
    %v2790 = vrot.slane %v2789, 1
    %v2791 = vadd.f32 %v2789, %v2790
    %v2792 = vadd.f32 %v1934, %v1938
    %v2793 = vrot.slane %v2792, 4
    %v2794 = vadd.f32 %v2792, %v2793
    %v2795 = vrot.slane %v2794, 2
    %v2796 = vadd.f32 %v2794, %v2795
    %v2797 = vrot.slane %v2796, 1
    %v2798 = vadd.f32 %v2796, %v2797
    %v2799 = vadd.f32 %v1935, %v1939
    %v2800 = vrot.slane %v2799, 4
    %v2801 = vadd.f32 %v2799, %v2800
    %v2802 = vrot.slane %v2801, 2
    %v2803 = vadd.f32 %v2801, %v2802
    %v2804 = vrot.slane %v2803, 1
    %v2805 = vadd.f32 %v2803, %v2804
    %v2806 = vadd.f32 %v1936, %v1940
    %v2807 = vrot.slane %v2806, 4
    %v2808 = vadd.f32 %v2806, %v2807
    %v2809 = vrot.slane %v2808, 2
    %v2810 = vadd.f32 %v2808, %v2809
    %v2811 = vrot.slane %v2810, 1
    %v2812 = vadd.f32 %v2810, %v2811
    %v2813 = vadd.f32 %v1941, %v1945
    %v2814 = vrot.slane %v2813, 4
    %v2815 = vadd.f32 %v2813, %v2814
    %v2816 = vrot.slane %v2815, 2
    %v2817 = vadd.f32 %v2815, %v2816
    %v2818 = vrot.slane %v2817, 1
    %v2819 = vadd.f32 %v2817, %v2818
    %v2820 = vadd.f32 %v1942, %v1946
    %v2821 = vrot.slane %v2820, 4
    %v2822 = vadd.f32 %v2820, %v2821
    %v2823 = vrot.slane %v2822, 2
    %v2824 = vadd.f32 %v2822, %v2823
    %v2825 = vrot.slane %v2824, 1
    %v2826 = vadd.f32 %v2824, %v2825
    %v2827 = vadd.f32 %v1943, %v1947
    %v2828 = vrot.slane %v2827, 4
    %v2829 = vadd.f32 %v2827, %v2828
    %v2830 = vrot.slane %v2829, 2
    %v2831 = vadd.f32 %v2829, %v2830
    %v2832 = vrot.slane %v2831, 1
    %v2833 = vadd.f32 %v2831, %v2832
    %v2834 = vadd.f32 %v1944, %v1948
    %v2835 = vrot.slane %v2834, 4
    %v2836 = vadd.f32 %v2834, %v2835
    %v2837 = vrot.slane %v2836, 2
    %v2838 = vadd.f32 %v2836, %v2837
    %v2839 = vrot.slane %v2838, 1
    %v2840 = vadd.f32 %v2838, %v2839
    %v2841 = vadd.f32 %v1949, %v1953
    %v2842 = vrot.slane %v2841, 4
    %v2843 = vadd.f32 %v2841, %v2842
    %v2844 = vrot.slane %v2843, 2
    %v2845 = vadd.f32 %v2843, %v2844
    %v2846 = vrot.slane %v2845, 1
    %v2847 = vadd.f32 %v2845, %v2846
    %v2848 = vadd.f32 %v1950, %v1954
    %v2849 = vrot.slane %v2848, 4
    %v2850 = vadd.f32 %v2848, %v2849
    %v2851 = vrot.slane %v2850, 2
    %v2852 = vadd.f32 %v2850, %v2851
    %v2853 = vrot.slane %v2852, 1
    %v2854 = vadd.f32 %v2852, %v2853
    %v2855 = vadd.f32 %v1951, %v1955
    %v2856 = vrot.slane %v2855, 4
    %v2857 = vadd.f32 %v2855, %v2856
    %v2858 = vrot.slane %v2857, 2
    %v2859 = vadd.f32 %v2857, %v2858
    %v2860 = vrot.slane %v2859, 1
    %v2861 = vadd.f32 %v2859, %v2860
    %v2862 = vadd.f32 %v1952, %v1956
    %v2863 = vrot.slane %v2862, 4
    %v2864 = vadd.f32 %v2862, %v2863
    %v2865 = vrot.slane %v2864, 2
    %v2866 = vadd.f32 %v2864, %v2865
    %v2867 = vrot.slane %v2866, 1
    %v2868 = vadd.f32 %v2866, %v2867
    %v2869 = vadd.f32 %v1957, %v1961
    %v2870 = vrot.slane %v2869, 4
    %v2871 = vadd.f32 %v2869, %v2870
    %v2872 = vrot.slane %v2871, 2
    %v2873 = vadd.f32 %v2871, %v2872
    %v2874 = vrot.slane %v2873, 1
    %v2875 = vadd.f32 %v2873, %v2874
    %v2876 = vadd.f32 %v1958, %v1962
    %v2877 = vrot.slane %v2876, 4
    %v2878 = vadd.f32 %v2876, %v2877
    %v2879 = vrot.slane %v2878, 2
    %v2880 = vadd.f32 %v2878, %v2879
    %v2881 = vrot.slane %v2880, 1
    %v2882 = vadd.f32 %v2880, %v2881
    %v2883 = vadd.f32 %v1959, %v1963
    %v2884 = vrot.slane %v2883, 4
    %v2885 = vadd.f32 %v2883, %v2884
    %v2886 = vrot.slane %v2885, 2
    %v2887 = vadd.f32 %v2885, %v2886
    %v2888 = vrot.slane %v2887, 1
    %v2889 = vadd.f32 %v2887, %v2888
    %v2890 = vadd.f32 %v1960, %v1964
    %v2891 = vrot.slane %v2890, 4
    %v2892 = vadd.f32 %v2890, %v2891
    %v2893 = vrot.slane %v2892, 2
    %v2894 = vadd.f32 %v2892, %v2893
    %v2895 = vrot.slane %v2894, 1
    %v2896 = vadd.f32 %v2894, %v2895
    %v2897 = vadd.f32 %v1965, %v1969
    %v2898 = vrot.slane %v2897, 4
    %v2899 = vadd.f32 %v2897, %v2898
    %v2900 = vrot.slane %v2899, 2
    %v2901 = vadd.f32 %v2899, %v2900
    %v2902 = vrot.slane %v2901, 1
    %v2903 = vadd.f32 %v2901, %v2902
    %v2904 = vadd.f32 %v1966, %v1970
    %v2905 = vrot.slane %v2904, 4
    %v2906 = vadd.f32 %v2904, %v2905
    %v2907 = vrot.slane %v2906, 2
    %v2908 = vadd.f32 %v2906, %v2907
    %v2909 = vrot.slane %v2908, 1
    %v2910 = vadd.f32 %v2908, %v2909
    %v2911 = vadd.f32 %v1967, %v1971
    %v2912 = vrot.slane %v2911, 4
    %v2913 = vadd.f32 %v2911, %v2912
    %v2914 = vrot.slane %v2913, 2
    %v2915 = vadd.f32 %v2913, %v2914
    %v2916 = vrot.slane %v2915, 1
    %v2917 = vadd.f32 %v2915, %v2916
    %v2918 = vadd.f32 %v1968, %v1972
    %v2919 = vrot.slane %v2918, 4
    %v2920 = vadd.f32 %v2918, %v2919
    %v2921 = vrot.slane %v2920, 2
    %v2922 = vadd.f32 %v2920, %v2921
    %v2923 = vrot.slane %v2922, 1
    %v2924 = vadd.f32 %v2922, %v2923
    %v2925 = vadd.f32 %v1973, %v1977
    %v2926 = vrot.slane %v2925, 4
    %v2927 = vadd.f32 %v2925, %v2926
    %v2928 = vrot.slane %v2927, 2
    %v2929 = vadd.f32 %v2927, %v2928
    %v2930 = vrot.slane %v2929, 1
    %v2931 = vadd.f32 %v2929, %v2930
    %v2932 = vadd.f32 %v1974, %v1978
    %v2933 = vrot.slane %v2932, 4
    %v2934 = vadd.f32 %v2932, %v2933
    %v2935 = vrot.slane %v2934, 2
    %v2936 = vadd.f32 %v2934, %v2935
    %v2937 = vrot.slane %v2936, 1
    %v2938 = vadd.f32 %v2936, %v2937
    %v2939 = vadd.f32 %v1975, %v1979
    %v2940 = vrot.slane %v2939, 4
    %v2941 = vadd.f32 %v2939, %v2940
    %v2942 = vrot.slane %v2941, 2
    %v2943 = vadd.f32 %v2941, %v2942
    %v2944 = vrot.slane %v2943, 1
    %v2945 = vadd.f32 %v2943, %v2944
    %v2946 = vadd.f32 %v1976, %v1980
    %v2947 = vrot.slane %v2946, 4
    %v2948 = vadd.f32 %v2946, %v2947
    %v2949 = vrot.slane %v2948, 2
    %v2950 = vadd.f32 %v2948, %v2949
    %v2951 = vrot.slane %v2950, 1
    %v2952 = vadd.f32 %v2950, %v2951
    %v2953 = vadd.f32 %v1981, %v1985
    %v2954 = vrot.slane %v2953, 4
    %v2955 = vadd.f32 %v2953, %v2954
    %v2956 = vrot.slane %v2955, 2
    %v2957 = vadd.f32 %v2955, %v2956
    %v2958 = vrot.slane %v2957, 1
    %v2959 = vadd.f32 %v2957, %v2958
    %v2960 = vadd.f32 %v1982, %v1986
    %v2961 = vrot.slane %v2960, 4
    %v2962 = vadd.f32 %v2960, %v2961
    %v2963 = vrot.slane %v2962, 2
    %v2964 = vadd.f32 %v2962, %v2963
    %v2965 = vrot.slane %v2964, 1
    %v2966 = vadd.f32 %v2964, %v2965
    %v2967 = vadd.f32 %v1983, %v1987
    %v2968 = vrot.slane %v2967, 4
    %v2969 = vadd.f32 %v2967, %v2968
    %v2970 = vrot.slane %v2969, 2
    %v2971 = vadd.f32 %v2969, %v2970
    %v2972 = vrot.slane %v2971, 1
    %v2973 = vadd.f32 %v2971, %v2972
    %v2974 = vadd.f32 %v1984, %v1988
    %v2975 = vrot.slane %v2974, 4
    %v2976 = vadd.f32 %v2974, %v2975
    %v2977 = vrot.slane %v2976, 2
    %v2978 = vadd.f32 %v2976, %v2977
    %v2979 = vrot.slane %v2978, 1
    %v2980 = vadd.f32 %v2978, %v2979
    %v2981 = vadd.f32 %v1989, %v1993
    %v2982 = vrot.slane %v2981, 4
    %v2983 = vadd.f32 %v2981, %v2982
    %v2984 = vrot.slane %v2983, 2
    %v2985 = vadd.f32 %v2983, %v2984
    %v2986 = vrot.slane %v2985, 1
    %v2987 = vadd.f32 %v2985, %v2986
    %v2988 = vadd.f32 %v1990, %v1994
    %v2989 = vrot.slane %v2988, 4
    %v2990 = vadd.f32 %v2988, %v2989
    %v2991 = vrot.slane %v2990, 2
    %v2992 = vadd.f32 %v2990, %v2991
    %v2993 = vrot.slane %v2992, 1
    %v2994 = vadd.f32 %v2992, %v2993
    %v2995 = vadd.f32 %v1991, %v1995
    %v2996 = vrot.slane %v2995, 4
    %v2997 = vadd.f32 %v2995, %v2996
    %v2998 = vrot.slane %v2997, 2
    %v2999 = vadd.f32 %v2997, %v2998
    %v3000 = vrot.slane %v2999, 1
    %v3001 = vadd.f32 %v2999, %v3000
    %v3002 = vadd.f32 %v1992, %v1996
    %v3003 = vrot.slane %v3002, 4
    %v3004 = vadd.f32 %v3002, %v3003
    %v3005 = vrot.slane %v3004, 2
    %v3006 = vadd.f32 %v3004, %v3005
    %v3007 = vrot.slane %v3006, 1
    %v3008 = vadd.f32 %v3006, %v3007
    %v3009 = vadd.f32 %v1997, %v2001
    %v3010 = vrot.slane %v3009, 4
    %v3011 = vadd.f32 %v3009, %v3010
    %v3012 = vrot.slane %v3011, 2
    %v3013 = vadd.f32 %v3011, %v3012
    %v3014 = vrot.slane %v3013, 1
    %v3015 = vadd.f32 %v3013, %v3014
    %v3016 = vadd.f32 %v1998, %v2002
    %v3017 = vrot.slane %v3016, 4
    %v3018 = vadd.f32 %v3016, %v3017
    %v3019 = vrot.slane %v3018, 2
    %v3020 = vadd.f32 %v3018, %v3019
    %v3021 = vrot.slane %v3020, 1
    %v3022 = vadd.f32 %v3020, %v3021
    %v3023 = vadd.f32 %v1999, %v2003
    %v3024 = vrot.slane %v3023, 4
    %v3025 = vadd.f32 %v3023, %v3024
    %v3026 = vrot.slane %v3025, 2
    %v3027 = vadd.f32 %v3025, %v3026
    %v3028 = vrot.slane %v3027, 1
    %v3029 = vadd.f32 %v3027, %v3028
    %v3030 = vadd.f32 %v2000, %v2004
    %v3031 = vrot.slane %v3030, 4
    %v3032 = vadd.f32 %v3030, %v3031
    %v3033 = vrot.slane %v3032, 2
    %v3034 = vadd.f32 %v3032, %v3033
    %v3035 = vrot.slane %v3034, 1
    %v3036 = vadd.f32 %v3034, %v3035
    %v3037 = vadd.f32 %v2005, %v2009
    %v3038 = vrot.slane %v3037, 4
    %v3039 = vadd.f32 %v3037, %v3038
    %v3040 = vrot.slane %v3039, 2
    %v3041 = vadd.f32 %v3039, %v3040
    %v3042 = vrot.slane %v3041, 1
    %v3043 = vadd.f32 %v3041, %v3042
    %v3044 = vadd.f32 %v2006, %v2010
    %v3045 = vrot.slane %v3044, 4
    %v3046 = vadd.f32 %v3044, %v3045
    %v3047 = vrot.slane %v3046, 2
    %v3048 = vadd.f32 %v3046, %v3047
    %v3049 = vrot.slane %v3048, 1
    %v3050 = vadd.f32 %v3048, %v3049
    %v3051 = vadd.f32 %v2007, %v2011
    %v3052 = vrot.slane %v3051, 4
    %v3053 = vadd.f32 %v3051, %v3052
    %v3054 = vrot.slane %v3053, 2
    %v3055 = vadd.f32 %v3053, %v3054
    %v3056 = vrot.slane %v3055, 1
    %v3057 = vadd.f32 %v3055, %v3056
    %v3058 = vadd.f32 %v2008, %v2012
    %v3059 = vrot.slane %v3058, 4
    %v3060 = vadd.f32 %v3058, %v3059
    %v3061 = vrot.slane %v3060, 2
    %v3062 = vadd.f32 %v3060, %v3061
    %v3063 = vrot.slane %v3062, 1
    %v3064 = vadd.f32 %v3062, %v3063
    %v3065 = vadd.f32 %v2013, %v2017
    %v3066 = vrot.slane %v3065, 4
    %v3067 = vadd.f32 %v3065, %v3066
    %v3068 = vrot.slane %v3067, 2
    %v3069 = vadd.f32 %v3067, %v3068
    %v3070 = vrot.slane %v3069, 1
    %v3071 = vadd.f32 %v3069, %v3070
    %v3072 = vadd.f32 %v2014, %v2018
    %v3073 = vrot.slane %v3072, 4
    %v3074 = vadd.f32 %v3072, %v3073
    %v3075 = vrot.slane %v3074, 2
    %v3076 = vadd.f32 %v3074, %v3075
    %v3077 = vrot.slane %v3076, 1
    %v3078 = vadd.f32 %v3076, %v3077
    %v3079 = vadd.f32 %v2015, %v2019
    %v3080 = vrot.slane %v3079, 4
    %v3081 = vadd.f32 %v3079, %v3080
    %v3082 = vrot.slane %v3081, 2
    %v3083 = vadd.f32 %v3081, %v3082
    %v3084 = vrot.slane %v3083, 1
    %v3085 = vadd.f32 %v3083, %v3084
    %v3086 = vadd.f32 %v2016, %v2020
    %v3087 = vrot.slane %v3086, 4
    %v3088 = vadd.f32 %v3086, %v3087
    %v3089 = vrot.slane %v3088, 2
    %v3090 = vadd.f32 %v3088, %v3089
    %v3091 = vrot.slane %v3090, 1
    %v3092 = vadd.f32 %v3090, %v3091
    %v3093 = vadd.f32 %v2021, %v2025
    %v3094 = vrot.slane %v3093, 4
    %v3095 = vadd.f32 %v3093, %v3094
    %v3096 = vrot.slane %v3095, 2
    %v3097 = vadd.f32 %v3095, %v3096
    %v3098 = vrot.slane %v3097, 1
    %v3099 = vadd.f32 %v3097, %v3098
    %v3100 = vadd.f32 %v2022, %v2026
    %v3101 = vrot.slane %v3100, 4
    %v3102 = vadd.f32 %v3100, %v3101
    %v3103 = vrot.slane %v3102, 2
    %v3104 = vadd.f32 %v3102, %v3103
    %v3105 = vrot.slane %v3104, 1
    %v3106 = vadd.f32 %v3104, %v3105
    %v3107 = vadd.f32 %v2023, %v2027
    %v3108 = vrot.slane %v3107, 4
    %v3109 = vadd.f32 %v3107, %v3108
    %v3110 = vrot.slane %v3109, 2
    %v3111 = vadd.f32 %v3109, %v3110
    %v3112 = vrot.slane %v3111, 1
    %v3113 = vadd.f32 %v3111, %v3112
    %v3114 = vadd.f32 %v2024, %v2028
    %v3115 = vrot.slane %v3114, 4
    %v3116 = vadd.f32 %v3114, %v3115
    %v3117 = vrot.slane %v3116, 2
    %v3118 = vadd.f32 %v3116, %v3117
    %v3119 = vrot.slane %v3118, 1
    %v3120 = vadd.f32 %v3118, %v3119
    %v3121 = vadd.f32 %v2029, %v2033
    %v3122 = vrot.slane %v3121, 4
    %v3123 = vadd.f32 %v3121, %v3122
    %v3124 = vrot.slane %v3123, 2
    %v3125 = vadd.f32 %v3123, %v3124
    %v3126 = vrot.slane %v3125, 1
    %v3127 = vadd.f32 %v3125, %v3126
    %v3128 = vadd.f32 %v2030, %v2034
    %v3129 = vrot.slane %v3128, 4
    %v3130 = vadd.f32 %v3128, %v3129
    %v3131 = vrot.slane %v3130, 2
    %v3132 = vadd.f32 %v3130, %v3131
    %v3133 = vrot.slane %v3132, 1
    %v3134 = vadd.f32 %v3132, %v3133
    %v3135 = vadd.f32 %v2031, %v2035
    %v3136 = vrot.slane %v3135, 4
    %v3137 = vadd.f32 %v3135, %v3136
    %v3138 = vrot.slane %v3137, 2
    %v3139 = vadd.f32 %v3137, %v3138
    %v3140 = vrot.slane %v3139, 1
    %v3141 = vadd.f32 %v3139, %v3140
    %v3142 = vadd.f32 %v2032, %v2036
    %v3143 = vrot.slane %v3142, 4
    %v3144 = vadd.f32 %v3142, %v3143
    %v3145 = vrot.slane %v3144, 2
    %v3146 = vadd.f32 %v3144, %v3145
    %v3147 = vrot.slane %v3146, 1
    %v3148 = vadd.f32 %v3146, %v3147
    %v3149 = vadd.f32 %v2037, %v2041
    %v3150 = vrot.slane %v3149, 4
    %v3151 = vadd.f32 %v3149, %v3150
    %v3152 = vrot.slane %v3151, 2
    %v3153 = vadd.f32 %v3151, %v3152
    %v3154 = vrot.slane %v3153, 1
    %v3155 = vadd.f32 %v3153, %v3154
    %v3156 = vadd.f32 %v2038, %v2042
    %v3157 = vrot.slane %v3156, 4
    %v3158 = vadd.f32 %v3156, %v3157
    %v3159 = vrot.slane %v3158, 2
    %v3160 = vadd.f32 %v3158, %v3159
    %v3161 = vrot.slane %v3160, 1
    %v3162 = vadd.f32 %v3160, %v3161
    %v3163 = vadd.f32 %v2039, %v2043
    %v3164 = vrot.slane %v3163, 4
    %v3165 = vadd.f32 %v3163, %v3164
    %v3166 = vrot.slane %v3165, 2
    %v3167 = vadd.f32 %v3165, %v3166
    %v3168 = vrot.slane %v3167, 1
    %v3169 = vadd.f32 %v3167, %v3168
    %v3170 = vadd.f32 %v2040, %v2044
    %v3171 = vrot.slane %v3170, 4
    %v3172 = vadd.f32 %v3170, %v3171
    %v3173 = vrot.slane %v3172, 2
    %v3174 = vadd.f32 %v3172, %v3173
    %v3175 = vrot.slane %v3174, 1
    %v3176 = vadd.f32 %v3174, %v3175
    %v3177 = vadd.f32 %v2045, %v2049
    %v3178 = vrot.slane %v3177, 4
    %v3179 = vadd.f32 %v3177, %v3178
    %v3180 = vrot.slane %v3179, 2
    %v3181 = vadd.f32 %v3179, %v3180
    %v3182 = vrot.slane %v3181, 1
    %v3183 = vadd.f32 %v3181, %v3182
    %v3184 = vadd.f32 %v2046, %v2050
    %v3185 = vrot.slane %v3184, 4
    %v3186 = vadd.f32 %v3184, %v3185
    %v3187 = vrot.slane %v3186, 2
    %v3188 = vadd.f32 %v3186, %v3187
    %v3189 = vrot.slane %v3188, 1
    %v3190 = vadd.f32 %v3188, %v3189
    %v3191 = vadd.f32 %v2047, %v2051
    %v3192 = vrot.slane %v3191, 4
    %v3193 = vadd.f32 %v3191, %v3192
    %v3194 = vrot.slane %v3193, 2
    %v3195 = vadd.f32 %v3193, %v3194
    %v3196 = vrot.slane %v3195, 1
    %v3197 = vadd.f32 %v3195, %v3196
    %v3198 = vadd.f32 %v2048, %v2052
    %v3199 = vrot.slane %v3198, 4
    %v3200 = vadd.f32 %v3198, %v3199
    %v3201 = vrot.slane %v3200, 2
    %v3202 = vadd.f32 %v3200, %v3201
    %v3203 = vrot.slane %v3202, 1
    %v3204 = vadd.f32 %v3202, %v3203
    %v3205 = vadd.f32 %v2053, %v2057
    %v3206 = vrot.slane %v3205, 4
    %v3207 = vadd.f32 %v3205, %v3206
    %v3208 = vrot.slane %v3207, 2
    %v3209 = vadd.f32 %v3207, %v3208
    %v3210 = vrot.slane %v3209, 1
    %v3211 = vadd.f32 %v3209, %v3210
    %v3212 = vadd.f32 %v2054, %v2058
    %v3213 = vrot.slane %v3212, 4
    %v3214 = vadd.f32 %v3212, %v3213
    %v3215 = vrot.slane %v3214, 2
    %v3216 = vadd.f32 %v3214, %v3215
    %v3217 = vrot.slane %v3216, 1
    %v3218 = vadd.f32 %v3216, %v3217
    %v3219 = vadd.f32 %v2055, %v2059
    %v3220 = vrot.slane %v3219, 4
    %v3221 = vadd.f32 %v3219, %v3220
    %v3222 = vrot.slane %v3221, 2
    %v3223 = vadd.f32 %v3221, %v3222
    %v3224 = vrot.slane %v3223, 1
    %v3225 = vadd.f32 %v3223, %v3224
    %v3226 = vadd.f32 %v2056, %v2060
    %v3227 = vrot.slane %v3226, 4
    %v3228 = vadd.f32 %v3226, %v3227
    %v3229 = vrot.slane %v3228, 2
    %v3230 = vadd.f32 %v3228, %v3229
    %v3231 = vrot.slane %v3230, 1
    %v3232 = vadd.f32 %v3230, %v3231
    %v3233 = vadd.f32 %v2061, %v2065
    %v3234 = vrot.slane %v3233, 4
    %v3235 = vadd.f32 %v3233, %v3234
    %v3236 = vrot.slane %v3235, 2
    %v3237 = vadd.f32 %v3235, %v3236
    %v3238 = vrot.slane %v3237, 1
    %v3239 = vadd.f32 %v3237, %v3238
    %v3240 = vadd.f32 %v2062, %v2066
    %v3241 = vrot.slane %v3240, 4
    %v3242 = vadd.f32 %v3240, %v3241
    %v3243 = vrot.slane %v3242, 2
    %v3244 = vadd.f32 %v3242, %v3243
    %v3245 = vrot.slane %v3244, 1
    %v3246 = vadd.f32 %v3244, %v3245
    %v3247 = vadd.f32 %v2063, %v2067
    %v3248 = vrot.slane %v3247, 4
    %v3249 = vadd.f32 %v3247, %v3248
    %v3250 = vrot.slane %v3249, 2
    %v3251 = vadd.f32 %v3249, %v3250
    %v3252 = vrot.slane %v3251, 1
    %v3253 = vadd.f32 %v3251, %v3252
    %v3254 = vadd.f32 %v2064, %v2068
    %v3255 = vrot.slane %v3254, 4
    %v3256 = vadd.f32 %v3254, %v3255
    %v3257 = vrot.slane %v3256, 2
    %v3258 = vadd.f32 %v3256, %v3257
    %v3259 = vrot.slane %v3258, 1
    %v3260 = vadd.f32 %v3258, %v3259
    %v3261 = vadd.f32 %v2069, %v2073
    %v3262 = vrot.slane %v3261, 4
    %v3263 = vadd.f32 %v3261, %v3262
    %v3264 = vrot.slane %v3263, 2
    %v3265 = vadd.f32 %v3263, %v3264
    %v3266 = vrot.slane %v3265, 1
    %v3267 = vadd.f32 %v3265, %v3266
    %v3268 = vadd.f32 %v2070, %v2074
    %v3269 = vrot.slane %v3268, 4
    %v3270 = vadd.f32 %v3268, %v3269
    %v3271 = vrot.slane %v3270, 2
    %v3272 = vadd.f32 %v3270, %v3271
    %v3273 = vrot.slane %v3272, 1
    %v3274 = vadd.f32 %v3272, %v3273
    %v3275 = vadd.f32 %v2071, %v2075
    %v3276 = vrot.slane %v3275, 4
    %v3277 = vadd.f32 %v3275, %v3276
    %v3278 = vrot.slane %v3277, 2
    %v3279 = vadd.f32 %v3277, %v3278
    %v3280 = vrot.slane %v3279, 1
    %v3281 = vadd.f32 %v3279, %v3280
    %v3282 = vadd.f32 %v2072, %v2076
    %v3283 = vrot.slane %v3282, 4
    %v3284 = vadd.f32 %v3282, %v3283
    %v3285 = vrot.slane %v3284, 2
    %v3286 = vadd.f32 %v3284, %v3285
    %v3287 = vrot.slane %v3286, 1
    %v3288 = vadd.f32 %v3286, %v3287
    %v3289 = vadd.f32 %v2077, %v2081
    %v3290 = vrot.slane %v3289, 4
    %v3291 = vadd.f32 %v3289, %v3290
    %v3292 = vrot.slane %v3291, 2
    %v3293 = vadd.f32 %v3291, %v3292
    %v3294 = vrot.slane %v3293, 1
    %v3295 = vadd.f32 %v3293, %v3294
    %v3296 = vadd.f32 %v2078, %v2082
    %v3297 = vrot.slane %v3296, 4
    %v3298 = vadd.f32 %v3296, %v3297
    %v3299 = vrot.slane %v3298, 2
    %v3300 = vadd.f32 %v3298, %v3299
    %v3301 = vrot.slane %v3300, 1
    %v3302 = vadd.f32 %v3300, %v3301
    %v3303 = vadd.f32 %v2079, %v2083
    %v3304 = vrot.slane %v3303, 4
    %v3305 = vadd.f32 %v3303, %v3304
    %v3306 = vrot.slane %v3305, 2
    %v3307 = vadd.f32 %v3305, %v3306
    %v3308 = vrot.slane %v3307, 1
    %v3309 = vadd.f32 %v3307, %v3308
    %v3310 = vadd.f32 %v2080, %v2084
    %v3311 = vrot.slane %v3310, 4
    %v3312 = vadd.f32 %v3310, %v3311
    %v3313 = vrot.slane %v3312, 2
    %v3314 = vadd.f32 %v3312, %v3313
    %v3315 = vrot.slane %v3314, 1
    %v3316 = vadd.f32 %v3314, %v3315
    %v3317 = vadd.f32 %v2085, %v2089
    %v3318 = vrot.slane %v3317, 4
    %v3319 = vadd.f32 %v3317, %v3318
    %v3320 = vrot.slane %v3319, 2
    %v3321 = vadd.f32 %v3319, %v3320
    %v3322 = vrot.slane %v3321, 1
    %v3323 = vadd.f32 %v3321, %v3322
    %v3324 = vadd.f32 %v2086, %v2090
    %v3325 = vrot.slane %v3324, 4
    %v3326 = vadd.f32 %v3324, %v3325
    %v3327 = vrot.slane %v3326, 2
    %v3328 = vadd.f32 %v3326, %v3327
    %v3329 = vrot.slane %v3328, 1
    %v3330 = vadd.f32 %v3328, %v3329
    %v3331 = vadd.f32 %v2087, %v2091
    %v3332 = vrot.slane %v3331, 4
    %v3333 = vadd.f32 %v3331, %v3332
    %v3334 = vrot.slane %v3333, 2
    %v3335 = vadd.f32 %v3333, %v3334
    %v3336 = vrot.slane %v3335, 1
    %v3337 = vadd.f32 %v3335, %v3336
    %v3338 = vadd.f32 %v2088, %v2092
    %v3339 = vrot.slane %v3338, 4
    %v3340 = vadd.f32 %v3338, %v3339
    %v3341 = vrot.slane %v3340, 2
    %v3342 = vadd.f32 %v3340, %v3341
    %v3343 = vrot.slane %v3342, 1
    %v3344 = vadd.f32 %v3342, %v3343
    %v3345 = vadd.f32 %v2093, %v2097
    %v3346 = vrot.slane %v3345, 4
    %v3347 = vadd.f32 %v3345, %v3346
    %v3348 = vrot.slane %v3347, 2
    %v3349 = vadd.f32 %v3347, %v3348
    %v3350 = vrot.slane %v3349, 1
    %v3351 = vadd.f32 %v3349, %v3350
    %v3352 = vadd.f32 %v2094, %v2098
    %v3353 = vrot.slane %v3352, 4
    %v3354 = vadd.f32 %v3352, %v3353
    %v3355 = vrot.slane %v3354, 2
    %v3356 = vadd.f32 %v3354, %v3355
    %v3357 = vrot.slane %v3356, 1
    %v3358 = vadd.f32 %v3356, %v3357
    %v3359 = vadd.f32 %v2095, %v2099
    %v3360 = vrot.slane %v3359, 4
    %v3361 = vadd.f32 %v3359, %v3360
    %v3362 = vrot.slane %v3361, 2
    %v3363 = vadd.f32 %v3361, %v3362
    %v3364 = vrot.slane %v3363, 1
    %v3365 = vadd.f32 %v3363, %v3364
    %v3366 = vadd.f32 %v2096, %v2100
    %v3367 = vrot.slane %v3366, 4
    %v3368 = vadd.f32 %v3366, %v3367
    %v3369 = vrot.slane %v3368, 2
    %v3370 = vadd.f32 %v3368, %v3369
    %v3371 = vrot.slane %v3370, 1
    %v3372 = vadd.f32 %v3370, %v3371
    %v3373 = vadd.f32 %v2101, %v2105
    %v3374 = vrot.slane %v3373, 4
    %v3375 = vadd.f32 %v3373, %v3374
    %v3376 = vrot.slane %v3375, 2
    %v3377 = vadd.f32 %v3375, %v3376
    %v3378 = vrot.slane %v3377, 1
    %v3379 = vadd.f32 %v3377, %v3378
    %v3380 = vadd.f32 %v2102, %v2106
    %v3381 = vrot.slane %v3380, 4
    %v3382 = vadd.f32 %v3380, %v3381
    %v3383 = vrot.slane %v3382, 2
    %v3384 = vadd.f32 %v3382, %v3383
    %v3385 = vrot.slane %v3384, 1
    %v3386 = vadd.f32 %v3384, %v3385
    %v3387 = vadd.f32 %v2103, %v2107
    %v3388 = vrot.slane %v3387, 4
    %v3389 = vadd.f32 %v3387, %v3388
    %v3390 = vrot.slane %v3389, 2
    %v3391 = vadd.f32 %v3389, %v3390
    %v3392 = vrot.slane %v3391, 1
    %v3393 = vadd.f32 %v3391, %v3392
    %v3394 = vadd.f32 %v2104, %v2108
    %v3395 = vrot.slane %v3394, 4
    %v3396 = vadd.f32 %v3394, %v3395
    %v3397 = vrot.slane %v3396, 2
    %v3398 = vadd.f32 %v3396, %v3397
    %v3399 = vrot.slane %v3398, 1
    %v3400 = vadd.f32 %v3398, %v3399
    %v3401 = vadd.f32 %v2109, %v2113
    %v3402 = vrot.slane %v3401, 4
    %v3403 = vadd.f32 %v3401, %v3402
    %v3404 = vrot.slane %v3403, 2
    %v3405 = vadd.f32 %v3403, %v3404
    %v3406 = vrot.slane %v3405, 1
    %v3407 = vadd.f32 %v3405, %v3406
    %v3408 = vadd.f32 %v2110, %v2114
    %v3409 = vrot.slane %v3408, 4
    %v3410 = vadd.f32 %v3408, %v3409
    %v3411 = vrot.slane %v3410, 2
    %v3412 = vadd.f32 %v3410, %v3411
    %v3413 = vrot.slane %v3412, 1
    %v3414 = vadd.f32 %v3412, %v3413
    %v3415 = vadd.f32 %v2111, %v2115
    %v3416 = vrot.slane %v3415, 4
    %v3417 = vadd.f32 %v3415, %v3416
    %v3418 = vrot.slane %v3417, 2
    %v3419 = vadd.f32 %v3417, %v3418
    %v3420 = vrot.slane %v3419, 1
    %v3421 = vadd.f32 %v3419, %v3420
    %v3422 = vadd.f32 %v2112, %v2116
    %v3423 = vrot.slane %v3422, 4
    %v3424 = vadd.f32 %v3422, %v3423
    %v3425 = vrot.slane %v3424, 2
    %v3426 = vadd.f32 %v3424, %v3425
    %v3427 = vrot.slane %v3426, 1
    %v3428 = vadd.f32 %v3426, %v3427
    %v3429 = vadd.f32 %v2117, %v2121
    %v3430 = vrot.slane %v3429, 4
    %v3431 = vadd.f32 %v3429, %v3430
    %v3432 = vrot.slane %v3431, 2
    %v3433 = vadd.f32 %v3431, %v3432
    %v3434 = vrot.slane %v3433, 1
    %v3435 = vadd.f32 %v3433, %v3434
    %v3436 = vadd.f32 %v2118, %v2122
    %v3437 = vrot.slane %v3436, 4
    %v3438 = vadd.f32 %v3436, %v3437
    %v3439 = vrot.slane %v3438, 2
    %v3440 = vadd.f32 %v3438, %v3439
    %v3441 = vrot.slane %v3440, 1
    %v3442 = vadd.f32 %v3440, %v3441
    %v3443 = vadd.f32 %v2119, %v2123
    %v3444 = vrot.slane %v3443, 4
    %v3445 = vadd.f32 %v3443, %v3444
    %v3446 = vrot.slane %v3445, 2
    %v3447 = vadd.f32 %v3445, %v3446
    %v3448 = vrot.slane %v3447, 1
    %v3449 = vadd.f32 %v3447, %v3448
    %v3450 = vadd.f32 %v2120, %v2124
    %v3451 = vrot.slane %v3450, 4
    %v3452 = vadd.f32 %v3450, %v3451
    %v3453 = vrot.slane %v3452, 2
    %v3454 = vadd.f32 %v3452, %v3453
    %v3455 = vrot.slane %v3454, 1
    %v3456 = vadd.f32 %v3454, %v3455
    %v3457 = vadd.f32 %v2125, %v2129
    %v3458 = vrot.slane %v3457, 4
    %v3459 = vadd.f32 %v3457, %v3458
    %v3460 = vrot.slane %v3459, 2
    %v3461 = vadd.f32 %v3459, %v3460
    %v3462 = vrot.slane %v3461, 1
    %v3463 = vadd.f32 %v3461, %v3462
    %v3464 = vadd.f32 %v2126, %v2130
    %v3465 = vrot.slane %v3464, 4
    %v3466 = vadd.f32 %v3464, %v3465
    %v3467 = vrot.slane %v3466, 2
    %v3468 = vadd.f32 %v3466, %v3467
    %v3469 = vrot.slane %v3468, 1
    %v3470 = vadd.f32 %v3468, %v3469
    %v3471 = vadd.f32 %v2127, %v2131
    %v3472 = vrot.slane %v3471, 4
    %v3473 = vadd.f32 %v3471, %v3472
    %v3474 = vrot.slane %v3473, 2
    %v3475 = vadd.f32 %v3473, %v3474
    %v3476 = vrot.slane %v3475, 1
    %v3477 = vadd.f32 %v3475, %v3476
    %v3478 = vadd.f32 %v2128, %v2132
    %v3479 = vrot.slane %v3478, 4
    %v3480 = vadd.f32 %v3478, %v3479
    %v3481 = vrot.slane %v3480, 2
    %v3482 = vadd.f32 %v3480, %v3481
    %v3483 = vrot.slane %v3482, 1
    %v3484 = vadd.f32 %v3482, %v3483
    %v3485 = vadd.f32 %v2133, %v2137
    %v3486 = vrot.slane %v3485, 4
    %v3487 = vadd.f32 %v3485, %v3486
    %v3488 = vrot.slane %v3487, 2
    %v3489 = vadd.f32 %v3487, %v3488
    %v3490 = vrot.slane %v3489, 1
    %v3491 = vadd.f32 %v3489, %v3490
    %v3492 = vadd.f32 %v2134, %v2138
    %v3493 = vrot.slane %v3492, 4
    %v3494 = vadd.f32 %v3492, %v3493
    %v3495 = vrot.slane %v3494, 2
    %v3496 = vadd.f32 %v3494, %v3495
    %v3497 = vrot.slane %v3496, 1
    %v3498 = vadd.f32 %v3496, %v3497
    %v3499 = vadd.f32 %v2135, %v2139
    %v3500 = vrot.slane %v3499, 4
    %v3501 = vadd.f32 %v3499, %v3500
    %v3502 = vrot.slane %v3501, 2
    %v3503 = vadd.f32 %v3501, %v3502
    %v3504 = vrot.slane %v3503, 1
    %v3505 = vadd.f32 %v3503, %v3504
    %v3506 = vadd.f32 %v2136, %v2140
    %v3507 = vrot.slane %v3506, 4
    %v3508 = vadd.f32 %v3506, %v3507
    %v3509 = vrot.slane %v3508, 2
    %v3510 = vadd.f32 %v3508, %v3509
    %v3511 = vrot.slane %v3510, 1
    %v3512 = vadd.f32 %v3510, %v3511
    %v3513 = vadd.f32 %v2141, %v2145
    %v3514 = vrot.slane %v3513, 4
    %v3515 = vadd.f32 %v3513, %v3514
    %v3516 = vrot.slane %v3515, 2
    %v3517 = vadd.f32 %v3515, %v3516
    %v3518 = vrot.slane %v3517, 1
    %v3519 = vadd.f32 %v3517, %v3518
    %v3520 = vadd.f32 %v2142, %v2146
    %v3521 = vrot.slane %v3520, 4
    %v3522 = vadd.f32 %v3520, %v3521
    %v3523 = vrot.slane %v3522, 2
    %v3524 = vadd.f32 %v3522, %v3523
    %v3525 = vrot.slane %v3524, 1
    %v3526 = vadd.f32 %v3524, %v3525
    %v3527 = vadd.f32 %v2143, %v2147
    %v3528 = vrot.slane %v3527, 4
    %v3529 = vadd.f32 %v3527, %v3528
    %v3530 = vrot.slane %v3529, 2
    %v3531 = vadd.f32 %v3529, %v3530
    %v3532 = vrot.slane %v3531, 1
    %v3533 = vadd.f32 %v3531, %v3532
    %v3534 = vadd.f32 %v2144, %v2148
    %v3535 = vrot.slane %v3534, 4
    %v3536 = vadd.f32 %v3534, %v3535
    %v3537 = vrot.slane %v3536, 2
    %v3538 = vadd.f32 %v3536, %v3537
    %v3539 = vrot.slane %v3538, 1
    %v3540 = vadd.f32 %v3538, %v3539
    %v3541 = vadd.f32 %v2149, %v2153
    %v3542 = vrot.slane %v3541, 4
    %v3543 = vadd.f32 %v3541, %v3542
    %v3544 = vrot.slane %v3543, 2
    %v3545 = vadd.f32 %v3543, %v3544
    %v3546 = vrot.slane %v3545, 1
    %v3547 = vadd.f32 %v3545, %v3546
    %v3548 = vadd.f32 %v2150, %v2154
    %v3549 = vrot.slane %v3548, 4
    %v3550 = vadd.f32 %v3548, %v3549
    %v3551 = vrot.slane %v3550, 2
    %v3552 = vadd.f32 %v3550, %v3551
    %v3553 = vrot.slane %v3552, 1
    %v3554 = vadd.f32 %v3552, %v3553
    %v3555 = vadd.f32 %v2151, %v2155
    %v3556 = vrot.slane %v3555, 4
    %v3557 = vadd.f32 %v3555, %v3556
    %v3558 = vrot.slane %v3557, 2
    %v3559 = vadd.f32 %v3557, %v3558
    %v3560 = vrot.slane %v3559, 1
    %v3561 = vadd.f32 %v3559, %v3560
    %v3562 = vadd.f32 %v2152, %v2156
    %v3563 = vrot.slane %v3562, 4
    %v3564 = vadd.f32 %v3562, %v3563
    %v3565 = vrot.slane %v3564, 2
    %v3566 = vadd.f32 %v3564, %v3565
    %v3567 = vrot.slane %v3566, 1
    %v3568 = vadd.f32 %v3566, %v3567
    %v3569 = vadd.f32 %v2157, %v2161
    %v3570 = vrot.slane %v3569, 4
    %v3571 = vadd.f32 %v3569, %v3570
    %v3572 = vrot.slane %v3571, 2
    %v3573 = vadd.f32 %v3571, %v3572
    %v3574 = vrot.slane %v3573, 1
    %v3575 = vadd.f32 %v3573, %v3574
    %v3576 = vadd.f32 %v2158, %v2162
    %v3577 = vrot.slane %v3576, 4
    %v3578 = vadd.f32 %v3576, %v3577
    %v3579 = vrot.slane %v3578, 2
    %v3580 = vadd.f32 %v3578, %v3579
    %v3581 = vrot.slane %v3580, 1
    %v3582 = vadd.f32 %v3580, %v3581
    %v3583 = vadd.f32 %v2159, %v2163
    %v3584 = vrot.slane %v3583, 4
    %v3585 = vadd.f32 %v3583, %v3584
    %v3586 = vrot.slane %v3585, 2
    %v3587 = vadd.f32 %v3585, %v3586
    %v3588 = vrot.slane %v3587, 1
    %v3589 = vadd.f32 %v3587, %v3588
    %v3590 = vadd.f32 %v2160, %v2164
    %v3591 = vrot.slane %v3590, 4
    %v3592 = vadd.f32 %v3590, %v3591
    %v3593 = vrot.slane %v3592, 2
    %v3594 = vadd.f32 %v3592, %v3593
    %v3595 = vrot.slane %v3594, 1
    %v3596 = vadd.f32 %v3594, %v3595
    %v3597 = vadd.f32 %v2165, %v2169
    %v3598 = vrot.slane %v3597, 4
    %v3599 = vadd.f32 %v3597, %v3598
    %v3600 = vrot.slane %v3599, 2
    %v3601 = vadd.f32 %v3599, %v3600
    %v3602 = vrot.slane %v3601, 1
    %v3603 = vadd.f32 %v3601, %v3602
    %v3604 = vadd.f32 %v2166, %v2170
    %v3605 = vrot.slane %v3604, 4
    %v3606 = vadd.f32 %v3604, %v3605
    %v3607 = vrot.slane %v3606, 2
    %v3608 = vadd.f32 %v3606, %v3607
    %v3609 = vrot.slane %v3608, 1
    %v3610 = vadd.f32 %v3608, %v3609
    %v3611 = vadd.f32 %v2167, %v2171
    %v3612 = vrot.slane %v3611, 4
    %v3613 = vadd.f32 %v3611, %v3612
    %v3614 = vrot.slane %v3613, 2
    %v3615 = vadd.f32 %v3613, %v3614
    %v3616 = vrot.slane %v3615, 1
    %v3617 = vadd.f32 %v3615, %v3616
    %v3618 = vadd.f32 %v2168, %v2172
    %v3619 = vrot.slane %v3618, 4
    %v3620 = vadd.f32 %v3618, %v3619
    %v3621 = vrot.slane %v3620, 2
    %v3622 = vadd.f32 %v3620, %v3621
    %v3623 = vrot.slane %v3622, 1
    %v3624 = vadd.f32 %v3622, %v3623
    %v3625 = vadd.f32 %v2173, %v2177
    %v3626 = vrot.slane %v3625, 4
    %v3627 = vadd.f32 %v3625, %v3626
    %v3628 = vrot.slane %v3627, 2
    %v3629 = vadd.f32 %v3627, %v3628
    %v3630 = vrot.slane %v3629, 1
    %v3631 = vadd.f32 %v3629, %v3630
    %v3632 = vadd.f32 %v2174, %v2178
    %v3633 = vrot.slane %v3632, 4
    %v3634 = vadd.f32 %v3632, %v3633
    %v3635 = vrot.slane %v3634, 2
    %v3636 = vadd.f32 %v3634, %v3635
    %v3637 = vrot.slane %v3636, 1
    %v3638 = vadd.f32 %v3636, %v3637
    %v3639 = vadd.f32 %v2175, %v2179
    %v3640 = vrot.slane %v3639, 4
    %v3641 = vadd.f32 %v3639, %v3640
    %v3642 = vrot.slane %v3641, 2
    %v3643 = vadd.f32 %v3641, %v3642
    %v3644 = vrot.slane %v3643, 1
    %v3645 = vadd.f32 %v3643, %v3644
    %v3646 = vadd.f32 %v2176, %v2180
    %v3647 = vrot.slane %v3646, 4
    %v3648 = vadd.f32 %v3646, %v3647
    %v3649 = vrot.slane %v3648, 2
    %v3650 = vadd.f32 %v3648, %v3649
    %v3651 = vrot.slane %v3650, 1
    %v3652 = vadd.f32 %v3650, %v3651
    %v3653 = vadd.f32 %v2181, %v2185
    %v3654 = vrot.slane %v3653, 4
    %v3655 = vadd.f32 %v3653, %v3654
    %v3656 = vrot.slane %v3655, 2
    %v3657 = vadd.f32 %v3655, %v3656
    %v3658 = vrot.slane %v3657, 1
    %v3659 = vadd.f32 %v3657, %v3658
    %v3660 = vadd.f32 %v2182, %v2186
    %v3661 = vrot.slane %v3660, 4
    %v3662 = vadd.f32 %v3660, %v3661
    %v3663 = vrot.slane %v3662, 2
    %v3664 = vadd.f32 %v3662, %v3663
    %v3665 = vrot.slane %v3664, 1
    %v3666 = vadd.f32 %v3664, %v3665
    %v3667 = vadd.f32 %v2183, %v2187
    %v3668 = vrot.slane %v3667, 4
    %v3669 = vadd.f32 %v3667, %v3668
    %v3670 = vrot.slane %v3669, 2
    %v3671 = vadd.f32 %v3669, %v3670
    %v3672 = vrot.slane %v3671, 1
    %v3673 = vadd.f32 %v3671, %v3672
    %v3674 = vadd.f32 %v2184, %v2188
    %v3675 = vrot.slane %v3674, 4
    %v3676 = vadd.f32 %v3674, %v3675
    %v3677 = vrot.slane %v3676, 2
    %v3678 = vadd.f32 %v3676, %v3677
    %v3679 = vrot.slane %v3678, 1
    %v3680 = vadd.f32 %v3678, %v3679
    %v3681 = vadd.f32 %v2189, %v2193
    %v3682 = vrot.slane %v3681, 4
    %v3683 = vadd.f32 %v3681, %v3682
    %v3684 = vrot.slane %v3683, 2
    %v3685 = vadd.f32 %v3683, %v3684
    %v3686 = vrot.slane %v3685, 1
    %v3687 = vadd.f32 %v3685, %v3686
    %v3688 = vadd.f32 %v2190, %v2194
    %v3689 = vrot.slane %v3688, 4
    %v3690 = vadd.f32 %v3688, %v3689
    %v3691 = vrot.slane %v3690, 2
    %v3692 = vadd.f32 %v3690, %v3691
    %v3693 = vrot.slane %v3692, 1
    %v3694 = vadd.f32 %v3692, %v3693
    %v3695 = vadd.f32 %v2191, %v2195
    %v3696 = vrot.slane %v3695, 4
    %v3697 = vadd.f32 %v3695, %v3696
    %v3698 = vrot.slane %v3697, 2
    %v3699 = vadd.f32 %v3697, %v3698
    %v3700 = vrot.slane %v3699, 1
    %v3701 = vadd.f32 %v3699, %v3700
    %v3702 = vadd.f32 %v2192, %v2196
    %v3703 = vrot.slane %v3702, 4
    %v3704 = vadd.f32 %v3702, %v3703
    %v3705 = vrot.slane %v3704, 2
    %v3706 = vadd.f32 %v3704, %v3705
    %v3707 = vrot.slane %v3706, 1
    %v3708 = vadd.f32 %v3706, %v3707
    %v3709 = vadd.f32 %v2197, %v2201
    %v3710 = vrot.slane %v3709, 4
    %v3711 = vadd.f32 %v3709, %v3710
    %v3712 = vrot.slane %v3711, 2
    %v3713 = vadd.f32 %v3711, %v3712
    %v3714 = vrot.slane %v3713, 1
    %v3715 = vadd.f32 %v3713, %v3714
    %v3716 = vadd.f32 %v2198, %v2202
    %v3717 = vrot.slane %v3716, 4
    %v3718 = vadd.f32 %v3716, %v3717
    %v3719 = vrot.slane %v3718, 2
    %v3720 = vadd.f32 %v3718, %v3719
    %v3721 = vrot.slane %v3720, 1
    %v3722 = vadd.f32 %v3720, %v3721
    %v3723 = vadd.f32 %v2199, %v2203
    %v3724 = vrot.slane %v3723, 4
    %v3725 = vadd.f32 %v3723, %v3724
    %v3726 = vrot.slane %v3725, 2
    %v3727 = vadd.f32 %v3725, %v3726
    %v3728 = vrot.slane %v3727, 1
    %v3729 = vadd.f32 %v3727, %v3728
    %v3730 = vadd.f32 %v2200, %v2204
    %v3731 = vrot.slane %v3730, 4
    %v3732 = vadd.f32 %v3730, %v3731
    %v3733 = vrot.slane %v3732, 2
    %v3734 = vadd.f32 %v3732, %v3733
    %v3735 = vrot.slane %v3734, 1
    %v3736 = vadd.f32 %v3734, %v3735
    %v3737 = vadd.f32 %v2205, %v2209
    %v3738 = vrot.slane %v3737, 4
    %v3739 = vadd.f32 %v3737, %v3738
    %v3740 = vrot.slane %v3739, 2
    %v3741 = vadd.f32 %v3739, %v3740
    %v3742 = vrot.slane %v3741, 1
    %v3743 = vadd.f32 %v3741, %v3742
    %v3744 = vadd.f32 %v2206, %v2210
    %v3745 = vrot.slane %v3744, 4
    %v3746 = vadd.f32 %v3744, %v3745
    %v3747 = vrot.slane %v3746, 2
    %v3748 = vadd.f32 %v3746, %v3747
    %v3749 = vrot.slane %v3748, 1
    %v3750 = vadd.f32 %v3748, %v3749
    %v3751 = vadd.f32 %v2207, %v2211
    %v3752 = vrot.slane %v3751, 4
    %v3753 = vadd.f32 %v3751, %v3752
    %v3754 = vrot.slane %v3753, 2
    %v3755 = vadd.f32 %v3753, %v3754
    %v3756 = vrot.slane %v3755, 1
    %v3757 = vadd.f32 %v3755, %v3756
    %v3758 = vadd.f32 %v2208, %v2212
    %v3759 = vrot.slane %v3758, 4
    %v3760 = vadd.f32 %v3758, %v3759
    %v3761 = vrot.slane %v3760, 2
    %v3762 = vadd.f32 %v3760, %v3761
    %v3763 = vrot.slane %v3762, 1
    %v3764 = vadd.f32 %v3762, %v3763
    %v3765 = vadd.f32 %v2213, %v2217
    %v3766 = vrot.slane %v3765, 4
    %v3767 = vadd.f32 %v3765, %v3766
    %v3768 = vrot.slane %v3767, 2
    %v3769 = vadd.f32 %v3767, %v3768
    %v3770 = vrot.slane %v3769, 1
    %v3771 = vadd.f32 %v3769, %v3770
    %v3772 = vadd.f32 %v2214, %v2218
    %v3773 = vrot.slane %v3772, 4
    %v3774 = vadd.f32 %v3772, %v3773
    %v3775 = vrot.slane %v3774, 2
    %v3776 = vadd.f32 %v3774, %v3775
    %v3777 = vrot.slane %v3776, 1
    %v3778 = vadd.f32 %v3776, %v3777
    %v3779 = vadd.f32 %v2215, %v2219
    %v3780 = vrot.slane %v3779, 4
    %v3781 = vadd.f32 %v3779, %v3780
    %v3782 = vrot.slane %v3781, 2
    %v3783 = vadd.f32 %v3781, %v3782
    %v3784 = vrot.slane %v3783, 1
    %v3785 = vadd.f32 %v3783, %v3784
    %v3786 = vadd.f32 %v2216, %v2220
    %v3787 = vrot.slane %v3786, 4
    %v3788 = vadd.f32 %v3786, %v3787
    %v3789 = vrot.slane %v3788, 2
    %v3790 = vadd.f32 %v3788, %v3789
    %v3791 = vrot.slane %v3790, 1
    %v3792 = vadd.f32 %v3790, %v3791
    %v3793 = vadd.f32 %v2221, %v2225
    %v3794 = vrot.slane %v3793, 4
    %v3795 = vadd.f32 %v3793, %v3794
    %v3796 = vrot.slane %v3795, 2
    %v3797 = vadd.f32 %v3795, %v3796
    %v3798 = vrot.slane %v3797, 1
    %v3799 = vadd.f32 %v3797, %v3798
    %v3800 = vadd.f32 %v2222, %v2226
    %v3801 = vrot.slane %v3800, 4
    %v3802 = vadd.f32 %v3800, %v3801
    %v3803 = vrot.slane %v3802, 2
    %v3804 = vadd.f32 %v3802, %v3803
    %v3805 = vrot.slane %v3804, 1
    %v3806 = vadd.f32 %v3804, %v3805
    %v3807 = vadd.f32 %v2223, %v2227
    %v3808 = vrot.slane %v3807, 4
    %v3809 = vadd.f32 %v3807, %v3808
    %v3810 = vrot.slane %v3809, 2
    %v3811 = vadd.f32 %v3809, %v3810
    %v3812 = vrot.slane %v3811, 1
    %v3813 = vadd.f32 %v3811, %v3812
    %v3814 = vadd.f32 %v2224, %v2228
    %v3815 = vrot.slane %v3814, 4
    %v3816 = vadd.f32 %v3814, %v3815
    %v3817 = vrot.slane %v3816, 2
    %v3818 = vadd.f32 %v3816, %v3817
    %v3819 = vrot.slane %v3818, 1
    %v3820 = vadd.f32 %v3818, %v3819
    %v3821 = vadd.f32 %v2229, %v2233
    %v3822 = vrot.slane %v3821, 4
    %v3823 = vadd.f32 %v3821, %v3822
    %v3824 = vrot.slane %v3823, 2
    %v3825 = vadd.f32 %v3823, %v3824
    %v3826 = vrot.slane %v3825, 1
    %v3827 = vadd.f32 %v3825, %v3826
    %v3828 = vadd.f32 %v2230, %v2234
    %v3829 = vrot.slane %v3828, 4
    %v3830 = vadd.f32 %v3828, %v3829
    %v3831 = vrot.slane %v3830, 2
    %v3832 = vadd.f32 %v3830, %v3831
    %v3833 = vrot.slane %v3832, 1
    %v3834 = vadd.f32 %v3832, %v3833
    %v3835 = vadd.f32 %v2231, %v2235
    %v3836 = vrot.slane %v3835, 4
    %v3837 = vadd.f32 %v3835, %v3836
    %v3838 = vrot.slane %v3837, 2
    %v3839 = vadd.f32 %v3837, %v3838
    %v3840 = vrot.slane %v3839, 1
    %v3841 = vadd.f32 %v3839, %v3840
    %v3842 = vadd.f32 %v2232, %v2236
    %v3843 = vrot.slane %v3842, 4
    %v3844 = vadd.f32 %v3842, %v3843
    %v3845 = vrot.slane %v3844, 2
    %v3846 = vadd.f32 %v3844, %v3845
    %v3847 = vrot.slane %v3846, 1
    %v3848 = vadd.f32 %v3846, %v3847
    %v3849 = vadd.f32 %v2237, %v2241
    %v3850 = vrot.slane %v3849, 4
    %v3851 = vadd.f32 %v3849, %v3850
    %v3852 = vrot.slane %v3851, 2
    %v3853 = vadd.f32 %v3851, %v3852
    %v3854 = vrot.slane %v3853, 1
    %v3855 = vadd.f32 %v3853, %v3854
    %v3856 = vadd.f32 %v2238, %v2242
    %v3857 = vrot.slane %v3856, 4
    %v3858 = vadd.f32 %v3856, %v3857
    %v3859 = vrot.slane %v3858, 2
    %v3860 = vadd.f32 %v3858, %v3859
    %v3861 = vrot.slane %v3860, 1
    %v3862 = vadd.f32 %v3860, %v3861
    %v3863 = vadd.f32 %v2239, %v2243
    %v3864 = vrot.slane %v3863, 4
    %v3865 = vadd.f32 %v3863, %v3864
    %v3866 = vrot.slane %v3865, 2
    %v3867 = vadd.f32 %v3865, %v3866
    %v3868 = vrot.slane %v3867, 1
    %v3869 = vadd.f32 %v3867, %v3868
    %v3870 = vadd.f32 %v2240, %v2244
    %v3871 = vrot.slane %v3870, 4
    %v3872 = vadd.f32 %v3870, %v3871
    %v3873 = vrot.slane %v3872, 2
    %v3874 = vadd.f32 %v3872, %v3873
    %v3875 = vrot.slane %v3874, 1
    %v3876 = vadd.f32 %v3874, %v3875
    %v3877 = vadd.f32 %v2245, %v2249
    %v3878 = vrot.slane %v3877, 4
    %v3879 = vadd.f32 %v3877, %v3878
    %v3880 = vrot.slane %v3879, 2
    %v3881 = vadd.f32 %v3879, %v3880
    %v3882 = vrot.slane %v3881, 1
    %v3883 = vadd.f32 %v3881, %v3882
    %v3884 = vadd.f32 %v2246, %v2250
    %v3885 = vrot.slane %v3884, 4
    %v3886 = vadd.f32 %v3884, %v3885
    %v3887 = vrot.slane %v3886, 2
    %v3888 = vadd.f32 %v3886, %v3887
    %v3889 = vrot.slane %v3888, 1
    %v3890 = vadd.f32 %v3888, %v3889
    %v3891 = vadd.f32 %v2247, %v2251
    %v3892 = vrot.slane %v3891, 4
    %v3893 = vadd.f32 %v3891, %v3892
    %v3894 = vrot.slane %v3893, 2
    %v3895 = vadd.f32 %v3893, %v3894
    %v3896 = vrot.slane %v3895, 1
    %v3897 = vadd.f32 %v3895, %v3896
    %v3898 = vadd.f32 %v2248, %v2252
    %v3899 = vrot.slane %v3898, 4
    %v3900 = vadd.f32 %v3898, %v3899
    %v3901 = vrot.slane %v3900, 2
    %v3902 = vadd.f32 %v3900, %v3901
    %v3903 = vrot.slane %v3902, 1
    %v3904 = vadd.f32 %v3902, %v3903
    %v3905 = vadd.f32 %v2253, %v2257
    %v3906 = vrot.slane %v3905, 4
    %v3907 = vadd.f32 %v3905, %v3906
    %v3908 = vrot.slane %v3907, 2
    %v3909 = vadd.f32 %v3907, %v3908
    %v3910 = vrot.slane %v3909, 1
    %v3911 = vadd.f32 %v3909, %v3910
    %v3912 = vadd.f32 %v2254, %v2258
    %v3913 = vrot.slane %v3912, 4
    %v3914 = vadd.f32 %v3912, %v3913
    %v3915 = vrot.slane %v3914, 2
    %v3916 = vadd.f32 %v3914, %v3915
    %v3917 = vrot.slane %v3916, 1
    %v3918 = vadd.f32 %v3916, %v3917
    %v3919 = vadd.f32 %v2255, %v2259
    %v3920 = vrot.slane %v3919, 4
    %v3921 = vadd.f32 %v3919, %v3920
    %v3922 = vrot.slane %v3921, 2
    %v3923 = vadd.f32 %v3921, %v3922
    %v3924 = vrot.slane %v3923, 1
    %v3925 = vadd.f32 %v3923, %v3924
    %v3926 = vadd.f32 %v2256, %v2260
    %v3927 = vrot.slane %v3926, 4
    %v3928 = vadd.f32 %v3926, %v3927
    %v3929 = vrot.slane %v3928, 2
    %v3930 = vadd.f32 %v3928, %v3929
    %v3931 = vrot.slane %v3930, 1
    %v3932 = vadd.f32 %v3930, %v3931
    %v3933 = vadd.f32 %v2261, %v2265
    %v3934 = vrot.slane %v3933, 4
    %v3935 = vadd.f32 %v3933, %v3934
    %v3936 = vrot.slane %v3935, 2
    %v3937 = vadd.f32 %v3935, %v3936
    %v3938 = vrot.slane %v3937, 1
    %v3939 = vadd.f32 %v3937, %v3938
    %v3940 = vadd.f32 %v2262, %v2266
    %v3941 = vrot.slane %v3940, 4
    %v3942 = vadd.f32 %v3940, %v3941
    %v3943 = vrot.slane %v3942, 2
    %v3944 = vadd.f32 %v3942, %v3943
    %v3945 = vrot.slane %v3944, 1
    %v3946 = vadd.f32 %v3944, %v3945
    %v3947 = vadd.f32 %v2263, %v2267
    %v3948 = vrot.slane %v3947, 4
    %v3949 = vadd.f32 %v3947, %v3948
    %v3950 = vrot.slane %v3949, 2
    %v3951 = vadd.f32 %v3949, %v3950
    %v3952 = vrot.slane %v3951, 1
    %v3953 = vadd.f32 %v3951, %v3952
    %v3954 = vadd.f32 %v2264, %v2268
    %v3955 = vrot.slane %v3954, 4
    %v3956 = vadd.f32 %v3954, %v3955
    %v3957 = vrot.slane %v3956, 2
    %v3958 = vadd.f32 %v3956, %v3957
    %v3959 = vrot.slane %v3958, 1
    %v3960 = vadd.f32 %v3958, %v3959
    %v3961 = vadd.f32 %v2269, %v2273
    %v3962 = vrot.slane %v3961, 4
    %v3963 = vadd.f32 %v3961, %v3962
    %v3964 = vrot.slane %v3963, 2
    %v3965 = vadd.f32 %v3963, %v3964
    %v3966 = vrot.slane %v3965, 1
    %v3967 = vadd.f32 %v3965, %v3966
    %v3968 = vadd.f32 %v2270, %v2274
    %v3969 = vrot.slane %v3968, 4
    %v3970 = vadd.f32 %v3968, %v3969
    %v3971 = vrot.slane %v3970, 2
    %v3972 = vadd.f32 %v3970, %v3971
    %v3973 = vrot.slane %v3972, 1
    %v3974 = vadd.f32 %v3972, %v3973
    %v3975 = vadd.f32 %v2271, %v2275
    %v3976 = vrot.slane %v3975, 4
    %v3977 = vadd.f32 %v3975, %v3976
    %v3978 = vrot.slane %v3977, 2
    %v3979 = vadd.f32 %v3977, %v3978
    %v3980 = vrot.slane %v3979, 1
    %v3981 = vadd.f32 %v3979, %v3980
    %v3982 = vadd.f32 %v2272, %v2276
    %v3983 = vrot.slane %v3982, 4
    %v3984 = vadd.f32 %v3982, %v3983
    %v3985 = vrot.slane %v3984, 2
    %v3986 = vadd.f32 %v3984, %v3985
    %v3987 = vrot.slane %v3986, 1
    %v3988 = vadd.f32 %v3986, %v3987
    %v3989 = vadd.f32 %v2277, %v2281
    %v3990 = vrot.slane %v3989, 4
    %v3991 = vadd.f32 %v3989, %v3990
    %v3992 = vrot.slane %v3991, 2
    %v3993 = vadd.f32 %v3991, %v3992
    %v3994 = vrot.slane %v3993, 1
    %v3995 = vadd.f32 %v3993, %v3994
    %v3996 = vadd.f32 %v2278, %v2282
    %v3997 = vrot.slane %v3996, 4
    %v3998 = vadd.f32 %v3996, %v3997
    %v3999 = vrot.slane %v3998, 2
    %v4000 = vadd.f32 %v3998, %v3999
    %v4001 = vrot.slane %v4000, 1
    %v4002 = vadd.f32 %v4000, %v4001
    %v4003 = vadd.f32 %v2279, %v2283
    %v4004 = vrot.slane %v4003, 4
    %v4005 = vadd.f32 %v4003, %v4004
    %v4006 = vrot.slane %v4005, 2
    %v4007 = vadd.f32 %v4005, %v4006
    %v4008 = vrot.slane %v4007, 1
    %v4009 = vadd.f32 %v4007, %v4008
    %v4010 = vadd.f32 %v2280, %v2284
    %v4011 = vrot.slane %v4010, 4
    %v4012 = vadd.f32 %v4010, %v4011
    %v4013 = vrot.slane %v4012, 2
    %v4014 = vadd.f32 %v4012, %v4013
    %v4015 = vrot.slane %v4014, 1
    %v4016 = vadd.f32 %v4014, %v4015
    %v4017 = vadd.f32 %v2285, %v2289
    %v4018 = vrot.slane %v4017, 4
    %v4019 = vadd.f32 %v4017, %v4018
    %v4020 = vrot.slane %v4019, 2
    %v4021 = vadd.f32 %v4019, %v4020
    %v4022 = vrot.slane %v4021, 1
    %v4023 = vadd.f32 %v4021, %v4022
    %v4024 = vadd.f32 %v2286, %v2290
    %v4025 = vrot.slane %v4024, 4
    %v4026 = vadd.f32 %v4024, %v4025
    %v4027 = vrot.slane %v4026, 2
    %v4028 = vadd.f32 %v4026, %v4027
    %v4029 = vrot.slane %v4028, 1
    %v4030 = vadd.f32 %v4028, %v4029
    %v4031 = vadd.f32 %v2287, %v2291
    %v4032 = vrot.slane %v4031, 4
    %v4033 = vadd.f32 %v4031, %v4032
    %v4034 = vrot.slane %v4033, 2
    %v4035 = vadd.f32 %v4033, %v4034
    %v4036 = vrot.slane %v4035, 1
    %v4037 = vadd.f32 %v4035, %v4036
    %v4038 = vadd.f32 %v2288, %v2292
    %v4039 = vrot.slane %v4038, 4
    %v4040 = vadd.f32 %v4038, %v4039
    %v4041 = vrot.slane %v4040, 2
    %v4042 = vadd.f32 %v4040, %v4041
    %v4043 = vrot.slane %v4042, 1
    %v4044 = vadd.f32 %v4042, %v4043
    %v4045 = vadd.f32 %v2293, %v2297
    %v4046 = vrot.slane %v4045, 4
    %v4047 = vadd.f32 %v4045, %v4046
    %v4048 = vrot.slane %v4047, 2
    %v4049 = vadd.f32 %v4047, %v4048
    %v4050 = vrot.slane %v4049, 1
    %v4051 = vadd.f32 %v4049, %v4050
    %v4052 = vadd.f32 %v2294, %v2298
    %v4053 = vrot.slane %v4052, 4
    %v4054 = vadd.f32 %v4052, %v4053
    %v4055 = vrot.slane %v4054, 2
    %v4056 = vadd.f32 %v4054, %v4055
    %v4057 = vrot.slane %v4056, 1
    %v4058 = vadd.f32 %v4056, %v4057
    %v4059 = vadd.f32 %v2295, %v2299
    %v4060 = vrot.slane %v4059, 4
    %v4061 = vadd.f32 %v4059, %v4060
    %v4062 = vrot.slane %v4061, 2
    %v4063 = vadd.f32 %v4061, %v4062
    %v4064 = vrot.slane %v4063, 1
    %v4065 = vadd.f32 %v4063, %v4064
    %v4066 = vadd.f32 %v2296, %v2300
    %v4067 = vrot.slane %v4066, 4
    %v4068 = vadd.f32 %v4066, %v4067
    %v4069 = vrot.slane %v4068, 2
    %v4070 = vadd.f32 %v4068, %v4069
    %v4071 = vrot.slane %v4070, 1
    %v4072 = vadd.f32 %v4070, %v4071
    %v4073 = vadd.f32 %v2301, %v2305
    %v4074 = vrot.slane %v4073, 4
    %v4075 = vadd.f32 %v4073, %v4074
    %v4076 = vrot.slane %v4075, 2
    %v4077 = vadd.f32 %v4075, %v4076
    %v4078 = vrot.slane %v4077, 1
    %v4079 = vadd.f32 %v4077, %v4078
    %v4080 = vadd.f32 %v2302, %v2306
    %v4081 = vrot.slane %v4080, 4
    %v4082 = vadd.f32 %v4080, %v4081
    %v4083 = vrot.slane %v4082, 2
    %v4084 = vadd.f32 %v4082, %v4083
    %v4085 = vrot.slane %v4084, 1
    %v4086 = vadd.f32 %v4084, %v4085
    %v4087 = vadd.f32 %v2303, %v2307
    %v4088 = vrot.slane %v4087, 4
    %v4089 = vadd.f32 %v4087, %v4088
    %v4090 = vrot.slane %v4089, 2
    %v4091 = vadd.f32 %v4089, %v4090
    %v4092 = vrot.slane %v4091, 1
    %v4093 = vadd.f32 %v4091, %v4092
    %v4094 = vadd.f32 %v2304, %v2308
    %v4095 = vrot.slane %v4094, 4
    %v4096 = vadd.f32 %v4094, %v4095
    %v4097 = vrot.slane %v4096, 2
    %v4098 = vadd.f32 %v4096, %v4097
    %v4099 = vrot.slane %v4098, 1
    %v4100 = vadd.f32 %v4098, %v4099
    %v4101 = vpack.c.bf16 %v2315, %v2315
    %v4102 = vpack.c.bf16 %v2322, %v2322
    %v4103 = vpack.c.bf16 %v2329, %v2329
    %v4104 = vpack.c.bf16 %v2336, %v2336
    %v4105 = vpack.c.bf16 %v2343, %v2343
    %v4106 = vpack.c.bf16 %v2350, %v2350
    %v4107 = vpack.c.bf16 %v2357, %v2357
    %v4108 = vpack.c.bf16 %v2364, %v2364
    %v4109 = vpack.c.bf16 %v2371, %v2371
    %v4110 = vpack.c.bf16 %v2378, %v2378
    %v4111 = vpack.c.bf16 %v2385, %v2385
    %v4112 = vpack.c.bf16 %v2392, %v2392
    %v4113 = vpack.c.bf16 %v2399, %v2399
    %v4114 = vpack.c.bf16 %v2406, %v2406
    %v4115 = vpack.c.bf16 %v2413, %v2413
    %v4116 = vpack.c.bf16 %v2420, %v2420
    %v4117 = vpack.c.bf16 %v2427, %v2427
    %v4118 = vpack.c.bf16 %v2434, %v2434
    %v4119 = vpack.c.bf16 %v2441, %v2441
    %v4120 = vpack.c.bf16 %v2448, %v2448
    %v4121 = vpack.c.bf16 %v2455, %v2455
    %v4122 = vpack.c.bf16 %v2462, %v2462
    %v4123 = vpack.c.bf16 %v2469, %v2469
    %v4124 = vpack.c.bf16 %v2476, %v2476
    %v4125 = vpack.c.bf16 %v2483, %v2483
    %v4126 = vpack.c.bf16 %v2490, %v2490
    %v4127 = vpack.c.bf16 %v2497, %v2497
    %v4128 = vpack.c.bf16 %v2504, %v2504
    %v4129 = vpack.c.bf16 %v2511, %v2511
    %v4130 = vpack.c.bf16 %v2518, %v2518
    %v4131 = vpack.c.bf16 %v2525, %v2525
    %v4132 = vpack.c.bf16 %v2532, %v2532
    %v4133 = vpack.c.bf16 %v2539, %v2539
    %v4134 = vpack.c.bf16 %v2546, %v2546
    %v4135 = vpack.c.bf16 %v2553, %v2553
    %v4136 = vpack.c.bf16 %v2560, %v2560
    %v4137 = vpack.c.bf16 %v2567, %v2567
    %v4138 = vpack.c.bf16 %v2574, %v2574
    %v4139 = vpack.c.bf16 %v2581, %v2581
    %v4140 = vpack.c.bf16 %v2588, %v2588
    %v4141 = vpack.c.bf16 %v2595, %v2595
    %v4142 = vpack.c.bf16 %v2602, %v2602
    %v4143 = vpack.c.bf16 %v2609, %v2609
    %v4144 = vpack.c.bf16 %v2616, %v2616
    %v4145 = vpack.c.bf16 %v2623, %v2623
    %v4146 = vpack.c.bf16 %v2630, %v2630
    %v4147 = vpack.c.bf16 %v2637, %v2637
    %v4148 = vpack.c.bf16 %v2644, %v2644
    %v4149 = vpack.c.bf16 %v2651, %v2651
    %v4150 = vpack.c.bf16 %v2658, %v2658
    %v4151 = vpack.c.bf16 %v2665, %v2665
    %v4152 = vpack.c.bf16 %v2672, %v2672
    %v4153 = vpack.c.bf16 %v2679, %v2679
    %v4154 = vpack.c.bf16 %v2686, %v2686
    %v4155 = vpack.c.bf16 %v2693, %v2693
    %v4156 = vpack.c.bf16 %v2700, %v2700
    %v4157 = vpack.c.bf16 %v2707, %v2707
    %v4158 = vpack.c.bf16 %v2714, %v2714
    %v4159 = vpack.c.bf16 %v2721, %v2721
    %v4160 = vpack.c.bf16 %v2728, %v2728
    %v4161 = vpack.c.bf16 %v2735, %v2735
    %v4162 = vpack.c.bf16 %v2742, %v2742
    %v4163 = vpack.c.bf16 %v2749, %v2749
    %v4164 = vpack.c.bf16 %v2756, %v2756
    %v4165 = vpack.c.bf16 %v2763, %v2763
    %v4166 = vpack.c.bf16 %v2770, %v2770
    %v4167 = vpack.c.bf16 %v2777, %v2777
    %v4168 = vpack.c.bf16 %v2784, %v2784
    %v4169 = vpack.c.bf16 %v2791, %v2791
    %v4170 = vpack.c.bf16 %v2798, %v2798
    %v4171 = vpack.c.bf16 %v2805, %v2805
    %v4172 = vpack.c.bf16 %v2812, %v2812
    %v4173 = vpack.c.bf16 %v2819, %v2819
    %v4174 = vpack.c.bf16 %v2826, %v2826
    %v4175 = vpack.c.bf16 %v2833, %v2833
    %v4176 = vpack.c.bf16 %v2840, %v2840
    %v4177 = vpack.c.bf16 %v2847, %v2847
    %v4178 = vpack.c.bf16 %v2854, %v2854
    %v4179 = vpack.c.bf16 %v2861, %v2861
    %v4180 = vpack.c.bf16 %v2868, %v2868
    %v4181 = vpack.c.bf16 %v2875, %v2875
    %v4182 = vpack.c.bf16 %v2882, %v2882
    %v4183 = vpack.c.bf16 %v2889, %v2889
    %v4184 = vpack.c.bf16 %v2896, %v2896
    %v4185 = vpack.c.bf16 %v2903, %v2903
    %v4186 = vpack.c.bf16 %v2910, %v2910
    %v4187 = vpack.c.bf16 %v2917, %v2917
    %v4188 = vpack.c.bf16 %v2924, %v2924
    %v4189 = vpack.c.bf16 %v2931, %v2931
    %v4190 = vpack.c.bf16 %v2938, %v2938
    %v4191 = vpack.c.bf16 %v2945, %v2945
    %v4192 = vpack.c.bf16 %v2952, %v2952
    %v4193 = vpack.c.bf16 %v2959, %v2959
    %v4194 = vpack.c.bf16 %v2966, %v2966
    %v4195 = vpack.c.bf16 %v2973, %v2973
    %v4196 = vpack.c.bf16 %v2980, %v2980
    %v4197 = vpack.c.bf16 %v2987, %v2987
    %v4198 = vpack.c.bf16 %v2994, %v2994
    %v4199 = vpack.c.bf16 %v3001, %v3001
    %v4200 = vpack.c.bf16 %v3008, %v3008
    %v4201 = vpack.c.bf16 %v3015, %v3015
    %v4202 = vpack.c.bf16 %v3022, %v3022
    %v4203 = vpack.c.bf16 %v3029, %v3029
    %v4204 = vpack.c.bf16 %v3036, %v3036
    %v4205 = vpack.c.bf16 %v3043, %v3043
    %v4206 = vpack.c.bf16 %v3050, %v3050
    %v4207 = vpack.c.bf16 %v3057, %v3057
    %v4208 = vpack.c.bf16 %v3064, %v3064
    %v4209 = vpack.c.bf16 %v3071, %v3071
    %v4210 = vpack.c.bf16 %v3078, %v3078
    %v4211 = vpack.c.bf16 %v3085, %v3085
    %v4212 = vpack.c.bf16 %v3092, %v3092
    %v4213 = vpack.c.bf16 %v3099, %v3099
    %v4214 = vpack.c.bf16 %v3106, %v3106
    %v4215 = vpack.c.bf16 %v3113, %v3113
    %v4216 = vpack.c.bf16 %v3120, %v3120
    %v4217 = vpack.c.bf16 %v3127, %v3127
    %v4218 = vpack.c.bf16 %v3134, %v3134
    %v4219 = vpack.c.bf16 %v3141, %v3141
    %v4220 = vpack.c.bf16 %v3148, %v3148
    %v4221 = vpack.c.bf16 %v3155, %v3155
    %v4222 = vpack.c.bf16 %v3162, %v3162
    %v4223 = vpack.c.bf16 %v3169, %v3169
    %v4224 = vpack.c.bf16 %v3176, %v3176
    %v4225 = vpack.c.bf16 %v3183, %v3183
    %v4226 = vpack.c.bf16 %v3190, %v3190
    %v4227 = vpack.c.bf16 %v3197, %v3197
    %v4228 = vpack.c.bf16 %v3204, %v3204
    %v4229 = vpack.c.bf16 %v3211, %v3211
    %v4230 = vpack.c.bf16 %v3218, %v3218
    %v4231 = vpack.c.bf16 %v3225, %v3225
    %v4232 = vpack.c.bf16 %v3232, %v3232
    %v4233 = vpack.c.bf16 %v3239, %v3239
    %v4234 = vpack.c.bf16 %v3246, %v3246
    %v4235 = vpack.c.bf16 %v3253, %v3253
    %v4236 = vpack.c.bf16 %v3260, %v3260
    %v4237 = vpack.c.bf16 %v3267, %v3267
    %v4238 = vpack.c.bf16 %v3274, %v3274
    %v4239 = vpack.c.bf16 %v3281, %v3281
    %v4240 = vpack.c.bf16 %v3288, %v3288
    %v4241 = vpack.c.bf16 %v3295, %v3295
    %v4242 = vpack.c.bf16 %v3302, %v3302
    %v4243 = vpack.c.bf16 %v3309, %v3309
    %v4244 = vpack.c.bf16 %v3316, %v3316
    %v4245 = vpack.c.bf16 %v3323, %v3323
    %v4246 = vpack.c.bf16 %v3330, %v3330
    %v4247 = vpack.c.bf16 %v3337, %v3337
    %v4248 = vpack.c.bf16 %v3344, %v3344
    %v4249 = vpack.c.bf16 %v3351, %v3351
    %v4250 = vpack.c.bf16 %v3358, %v3358
    %v4251 = vpack.c.bf16 %v3365, %v3365
    %v4252 = vpack.c.bf16 %v3372, %v3372
    %v4253 = vpack.c.bf16 %v3379, %v3379
    %v4254 = vpack.c.bf16 %v3386, %v3386
    %v4255 = vpack.c.bf16 %v3393, %v3393
    %v4256 = vpack.c.bf16 %v3400, %v3400
    %v4257 = vpack.c.bf16 %v3407, %v3407
    %v4258 = vpack.c.bf16 %v3414, %v3414
    %v4259 = vpack.c.bf16 %v3421, %v3421
    %v4260 = vpack.c.bf16 %v3428, %v3428
    %v4261 = vpack.c.bf16 %v3435, %v3435
    %v4262 = vpack.c.bf16 %v3442, %v3442
    %v4263 = vpack.c.bf16 %v3449, %v3449
    %v4264 = vpack.c.bf16 %v3456, %v3456
    %v4265 = vpack.c.bf16 %v3463, %v3463
    %v4266 = vpack.c.bf16 %v3470, %v3470
    %v4267 = vpack.c.bf16 %v3477, %v3477
    %v4268 = vpack.c.bf16 %v3484, %v3484
    %v4269 = vpack.c.bf16 %v3491, %v3491
    %v4270 = vpack.c.bf16 %v3498, %v3498
    %v4271 = vpack.c.bf16 %v3505, %v3505
    %v4272 = vpack.c.bf16 %v3512, %v3512
    %v4273 = vpack.c.bf16 %v3519, %v3519
    %v4274 = vpack.c.bf16 %v3526, %v3526
    %v4275 = vpack.c.bf16 %v3533, %v3533
    %v4276 = vpack.c.bf16 %v3540, %v3540
    %v4277 = vpack.c.bf16 %v3547, %v3547
    %v4278 = vpack.c.bf16 %v3554, %v3554
    %v4279 = vpack.c.bf16 %v3561, %v3561
    %v4280 = vpack.c.bf16 %v3568, %v3568
    %v4281 = vpack.c.bf16 %v3575, %v3575
    %v4282 = vpack.c.bf16 %v3582, %v3582
    %v4283 = vpack.c.bf16 %v3589, %v3589
    %v4284 = vpack.c.bf16 %v3596, %v3596
    %v4285 = vpack.c.bf16 %v3603, %v3603
    %v4286 = vpack.c.bf16 %v3610, %v3610
    %v4287 = vpack.c.bf16 %v3617, %v3617
    %v4288 = vpack.c.bf16 %v3624, %v3624
    %v4289 = vpack.c.bf16 %v3631, %v3631
    %v4290 = vpack.c.bf16 %v3638, %v3638
    %v4291 = vpack.c.bf16 %v3645, %v3645
    %v4292 = vpack.c.bf16 %v3652, %v3652
    %v4293 = vpack.c.bf16 %v3659, %v3659
    %v4294 = vpack.c.bf16 %v3666, %v3666
    %v4295 = vpack.c.bf16 %v3673, %v3673
    %v4296 = vpack.c.bf16 %v3680, %v3680
    %v4297 = vpack.c.bf16 %v3687, %v3687
    %v4298 = vpack.c.bf16 %v3694, %v3694
    %v4299 = vpack.c.bf16 %v3701, %v3701
    %v4300 = vpack.c.bf16 %v3708, %v3708
    %v4301 = vpack.c.bf16 %v3715, %v3715
    %v4302 = vpack.c.bf16 %v3722, %v3722
    %v4303 = vpack.c.bf16 %v3729, %v3729
    %v4304 = vpack.c.bf16 %v3736, %v3736
    %v4305 = vpack.c.bf16 %v3743, %v3743
    %v4306 = vpack.c.bf16 %v3750, %v3750
    %v4307 = vpack.c.bf16 %v3757, %v3757
    %v4308 = vpack.c.bf16 %v3764, %v3764
    %v4309 = vpack.c.bf16 %v3771, %v3771
    %v4310 = vpack.c.bf16 %v3778, %v3778
    %v4311 = vpack.c.bf16 %v3785, %v3785
    %v4312 = vpack.c.bf16 %v3792, %v3792
    %v4313 = vpack.c.bf16 %v3799, %v3799
    %v4314 = vpack.c.bf16 %v3806, %v3806
    %v4315 = vpack.c.bf16 %v3813, %v3813
    %v4316 = vpack.c.bf16 %v3820, %v3820
    %v4317 = vpack.c.bf16 %v3827, %v3827
    %v4318 = vpack.c.bf16 %v3834, %v3834
    %v4319 = vpack.c.bf16 %v3841, %v3841
    %v4320 = vpack.c.bf16 %v3848, %v3848
    %v4321 = vpack.c.bf16 %v3855, %v3855
    %v4322 = vpack.c.bf16 %v3862, %v3862
    %v4323 = vpack.c.bf16 %v3869, %v3869
    %v4324 = vpack.c.bf16 %v3876, %v3876
    %v4325 = vpack.c.bf16 %v3883, %v3883
    %v4326 = vpack.c.bf16 %v3890, %v3890
    %v4327 = vpack.c.bf16 %v3897, %v3897
    %v4328 = vpack.c.bf16 %v3904, %v3904
    %v4329 = vpack.c.bf16 %v3911, %v3911
    %v4330 = vpack.c.bf16 %v3918, %v3918
    %v4331 = vpack.c.bf16 %v3925, %v3925
    %v4332 = vpack.c.bf16 %v3932, %v3932
    %v4333 = vpack.c.bf16 %v3939, %v3939
    %v4334 = vpack.c.bf16 %v3946, %v3946
    %v4335 = vpack.c.bf16 %v3953, %v3953
    %v4336 = vpack.c.bf16 %v3960, %v3960
    %v4337 = vpack.c.bf16 %v3967, %v3967
    %v4338 = vpack.c.bf16 %v3974, %v3974
    %v4339 = vpack.c.bf16 %v3981, %v3981
    %v4340 = vpack.c.bf16 %v3988, %v3988
    %v4341 = vpack.c.bf16 %v3995, %v3995
    %v4342 = vpack.c.bf16 %v4002, %v4002
    %v4343 = vpack.c.bf16 %v4009, %v4009
    %v4344 = vpack.c.bf16 %v4016, %v4016
    %v4345 = vpack.c.bf16 %v4023, %v4023
    %v4346 = vpack.c.bf16 %v4030, %v4030
    %v4347 = vpack.c.bf16 %v4037, %v4037
    %v4348 = vpack.c.bf16 %v4044, %v4044
    %v4349 = vpack.c.bf16 %v4051, %v4051
    %v4350 = vpack.c.bf16 %v4058, %v4058
    %v4351 = vpack.c.bf16 %v4065, %v4065
    %v4352 = vpack.c.bf16 %v4072, %v4072
    %v4353 = vpack.c.bf16 %v4079, %v4079
    %v4354 = vpack.c.bf16 %v4086, %v4086
    %v4355 = vpack.c.bf16 %v4093, %v4093
    %v4356 = vpack.c.bf16 %v4100, %v4100
    %v4357 = vld [vmem:[#allocation2] sm:$0xf]
    %v4358 = vld [vmem:[#allocation2 + $0x4] sm:$0xf]
    %v4359 = vld [vmem:[#allocation2 + $0x8] sm:$0xf]
    %v4360 = vld [vmem:[#allocation2 + $0xc] sm:$0xf]
    %v4361 = vld [vmem:[#allocation2 + $0x10] sm:$0xf]
    %v4362 = vld [vmem:[#allocation2 + $0x14] sm:$0xf]
    %v4363 = vld [vmem:[#allocation2 + $0x18] sm:$0xf]
    %v4364 = vld [vmem:[#allocation2 + $0x1c] sm:$0xf]
    %v4365 = vld [vmem:[#allocation2 + $0x20] sm:$0xf]
    %v4366 = vld [vmem:[#allocation2 + $0x24] sm:$0xf]
    %v4367 = vld [vmem:[#allocation2 + $0x28] sm:$0xf]
    %v4368 = vld [vmem:[#allocation2 + $0x2c] sm:$0xf]
    %v4369 = vld [vmem:[#allocation2 + $0x30] sm:$0xf]
    %v4370 = vld [vmem:[#allocation2 + $0x34] sm:$0xf]
    %v4371 = vld [vmem:[#allocation2 + $0x38] sm:$0xf]
    %v4372 = vld [vmem:[#allocation2 + $0x3c] sm:$0xf]
    %v4373 = vld [vmem:[#allocation2 + $0x40] sm:$0xf]
    %v4374 = vld [vmem:[#allocation2 + $0x44] sm:$0xf]
    %v4375 = vld [vmem:[#allocation2 + $0x48] sm:$0xf]
    %v4376 = vld [vmem:[#allocation2 + $0x4c] sm:$0xf]
    %v4377 = vld [vmem:[#allocation2 + $0x50] sm:$0xf]
    %v4378 = vld [vmem:[#allocation2 + $0x54] sm:$0xf]
    %v4379 = vld [vmem:[#allocation2 + $0x58] sm:$0xf]
    %v4380 = vld [vmem:[#allocation2 + $0x5c] sm:$0xf]
    %v4381 = vld [vmem:[#allocation2 + $0x60] sm:$0xf]
    %v4382 = vld [vmem:[#allocation2 + $0x64] sm:$0xf]
    %v4383 = vld [vmem:[#allocation2 + $0x68] sm:$0xf]
    %v4384 = vld [vmem:[#allocation2 + $0x6c] sm:$0xf]
    %v4385 = vld [vmem:[#allocation2 + $0x70] sm:$0xf]
    %v4386 = vld [vmem:[#allocation2 + $0x74] sm:$0xf]
    %v4387 = vld [vmem:[#allocation2 + $0x78] sm:$0xf]
    %v4388 = vld [vmem:[#allocation2 + $0x7c] sm:$0xf]
    %v4389 = vld [vmem:[#allocation2 + $0x80] sm:$0xf]
    %v4390 = vld [vmem:[#allocation2 + $0x84] sm:$0xf]
    %v4391 = vld [vmem:[#allocation2 + $0x88] sm:$0xf]
    %v4392 = vld [vmem:[#allocation2 + $0x8c] sm:$0xf]
    %v4393 = vld [vmem:[#allocation2 + $0x90] sm:$0xf]
    %v4394 = vld [vmem:[#allocation2 + $0x94] sm:$0xf]
    %v4395 = vld [vmem:[#allocation2 + $0x98] sm:$0xf]
    %v4396 = vld [vmem:[#allocation2 + $0x9c] sm:$0xf]
    %v4397 = vld [vmem:[#allocation2 + $0xa0] sm:$0xf]
    %v4398 = vld [vmem:[#allocation2 + $0xa4] sm:$0xf]
    %v4399 = vld [vmem:[#allocation2 + $0xa8] sm:$0xf]
    %v4400 = vld [vmem:[#allocation2 + $0xac] sm:$0xf]
    %v4401 = vld [vmem:[#allocation2 + $0xb0] sm:$0xf]
    %v4402 = vld [vmem:[#allocation2 + $0xb4] sm:$0xf]
    %v4403 = vld [vmem:[#allocation2 + $0xb8] sm:$0xf]
    %v4404 = vld [vmem:[#allocation2 + $0xbc] sm:$0xf]
    %v4405 = vld [vmem:[#allocation2 + $0xc0] sm:$0xf]
    %v4406 = vld [vmem:[#allocation2 + $0xc4] sm:$0xf]
    %v4407 = vld [vmem:[#allocation2 + $0xc8] sm:$0xf]
    %v4408 = vld [vmem:[#allocation2 + $0xcc] sm:$0xf]
    %v4409 = vld [vmem:[#allocation2 + $0xd0] sm:$0xf]
    %v4410 = vld [vmem:[#allocation2 + $0xd4] sm:$0xf]
    %v4411 = vld [vmem:[#allocation2 + $0xd8] sm:$0xf]
    %v4412 = vld [vmem:[#allocation2 + $0xdc] sm:$0xf]
    %v4413 = vld [vmem:[#allocation2 + $0xe0] sm:$0xf]
    %v4414 = vld [vmem:[#allocation2 + $0xe4] sm:$0xf]
    %v4415 = vld [vmem:[#allocation2 + $0xe8] sm:$0xf]
    %v4416 = vld [vmem:[#allocation2 + $0xec] sm:$0xf]
    %v4417 = vld [vmem:[#allocation2 + $0xf0] sm:$0xf]
    %v4418 = vld [vmem:[#allocation2 + $0xf4] sm:$0xf]
    %v4419 = vld [vmem:[#allocation2 + $0xf8] sm:$0xf]
    %v4420 = vld [vmem:[#allocation2 + $0xfc] sm:$0xf]
    %v4677 = vunpack.c.l.b16 %v4101
    %v4678 = vunpack.c.l.b16 %v4102
    %v4679 = vunpack.c.l.b16 %v4103
    %v4680 = vunpack.c.l.b16 %v4104
    %v4681 = vunpack.c.l.b16 %v4105
    %v4682 = vunpack.c.l.b16 %v4106
    %v4683 = vunpack.c.l.b16 %v4107
    %v4684 = vunpack.c.l.b16 %v4108
    %v4685 = vunpack.c.l.b16 %v4109
    %v4686 = vunpack.c.l.b16 %v4110
    %v4687 = vunpack.c.l.b16 %v4111
    %v4688 = vunpack.c.l.b16 %v4112
    %v4689 = vunpack.c.l.b16 %v4113
    %v4690 = vunpack.c.l.b16 %v4114
    %v4691 = vunpack.c.l.b16 %v4115
    %v4692 = vunpack.c.l.b16 %v4116
    %v4693 = vunpack.c.l.b16 %v4117
    %v4694 = vunpack.c.l.b16 %v4118
    %v4695 = vunpack.c.l.b16 %v4119
    %v4696 = vunpack.c.l.b16 %v4120
    %v4697 = vunpack.c.l.b16 %v4121
    %v4698 = vunpack.c.l.b16 %v4122
    %v4699 = vunpack.c.l.b16 %v4123
    %v4700 = vunpack.c.l.b16 %v4124
    %v4701 = vunpack.c.l.b16 %v4125
    %v4702 = vunpack.c.l.b16 %v4126
    %v4703 = vunpack.c.l.b16 %v4127
    %v4704 = vunpack.c.l.b16 %v4128
    %v4705 = vunpack.c.l.b16 %v4129
    %v4706 = vunpack.c.l.b16 %v4130
    %v4707 = vunpack.c.l.b16 %v4131
    %v4708 = vunpack.c.l.b16 %v4132
    %v4709 = vunpack.c.l.b16 %v4133
    %v4710 = vunpack.c.l.b16 %v4134
    %v4711 = vunpack.c.l.b16 %v4135
    %v4712 = vunpack.c.l.b16 %v4136
    %v4713 = vunpack.c.l.b16 %v4137
    %v4714 = vunpack.c.l.b16 %v4138
    %v4715 = vunpack.c.l.b16 %v4139
    %v4716 = vunpack.c.l.b16 %v4140
    %v4717 = vunpack.c.l.b16 %v4141
    %v4718 = vunpack.c.l.b16 %v4142
    %v4719 = vunpack.c.l.b16 %v4143
    %v4720 = vunpack.c.l.b16 %v4144
    %v4721 = vunpack.c.l.b16 %v4145
    %v4722 = vunpack.c.l.b16 %v4146
    %v4723 = vunpack.c.l.b16 %v4147
    %v4724 = vunpack.c.l.b16 %v4148
    %v4725 = vunpack.c.l.b16 %v4149
    %v4726 = vunpack.c.l.b16 %v4150
    %v4727 = vunpack.c.l.b16 %v4151
    %v4728 = vunpack.c.l.b16 %v4152
    %v4729 = vunpack.c.l.b16 %v4153
    %v4730 = vunpack.c.l.b16 %v4154
    %v4731 = vunpack.c.l.b16 %v4155
    %v4732 = vunpack.c.l.b16 %v4156
    %v4733 = vunpack.c.l.b16 %v4157
    %v4734 = vunpack.c.l.b16 %v4158
    %v4735 = vunpack.c.l.b16 %v4159
    %v4736 = vunpack.c.l.b16 %v4160
    %v4737 = vunpack.c.l.b16 %v4161
    %v4738 = vunpack.c.l.b16 %v4162
    %v4739 = vunpack.c.l.b16 %v4163
    %v4740 = vunpack.c.l.b16 %v4164
    %v4741 = vunpack.c.l.b16 %v4165
    %v4742 = vunpack.c.l.b16 %v4166
    %v4743 = vunpack.c.l.b16 %v4167
    %v4744 = vunpack.c.l.b16 %v4168
    %v4745 = vunpack.c.l.b16 %v4169
    %v4746 = vunpack.c.l.b16 %v4170
    %v4747 = vunpack.c.l.b16 %v4171
    %v4748 = vunpack.c.l.b16 %v4172
    %v4749 = vunpack.c.l.b16 %v4173
    %v4750 = vunpack.c.l.b16 %v4174
    %v4751 = vunpack.c.l.b16 %v4175
    %v4752 = vunpack.c.l.b16 %v4176
    %v4753 = vunpack.c.l.b16 %v4177
    %v4754 = vunpack.c.l.b16 %v4178
    %v4755 = vunpack.c.l.b16 %v4179
    %v4756 = vunpack.c.l.b16 %v4180
    %v4757 = vunpack.c.l.b16 %v4181
    %v4758 = vunpack.c.l.b16 %v4182
    %v4759 = vunpack.c.l.b16 %v4183
    %v4760 = vunpack.c.l.b16 %v4184
    %v4761 = vunpack.c.l.b16 %v4185
    %v4762 = vunpack.c.l.b16 %v4186
    %v4763 = vunpack.c.l.b16 %v4187
    %v4764 = vunpack.c.l.b16 %v4188
    %v4765 = vunpack.c.l.b16 %v4189
    %v4766 = vunpack.c.l.b16 %v4190
    %v4767 = vunpack.c.l.b16 %v4191
    %v4768 = vunpack.c.l.b16 %v4192
    %v4769 = vunpack.c.l.b16 %v4193
    %v4770 = vunpack.c.l.b16 %v4194
    %v4771 = vunpack.c.l.b16 %v4195
    %v4772 = vunpack.c.l.b16 %v4196
    %v4773 = vunpack.c.l.b16 %v4197
    %v4774 = vunpack.c.l.b16 %v4198
    %v4775 = vunpack.c.l.b16 %v4199
    %v4776 = vunpack.c.l.b16 %v4200
    %v4777 = vunpack.c.l.b16 %v4201
    %v4778 = vunpack.c.l.b16 %v4202
    %v4779 = vunpack.c.l.b16 %v4203
    %v4780 = vunpack.c.l.b16 %v4204
    %v4781 = vunpack.c.l.b16 %v4205
    %v4782 = vunpack.c.l.b16 %v4206
    %v4783 = vunpack.c.l.b16 %v4207
    %v4784 = vunpack.c.l.b16 %v4208
    %v4785 = vunpack.c.l.b16 %v4209
    %v4786 = vunpack.c.l.b16 %v4210
    %v4787 = vunpack.c.l.b16 %v4211
    %v4788 = vunpack.c.l.b16 %v4212
    %v4789 = vunpack.c.l.b16 %v4213
    %v4790 = vunpack.c.l.b16 %v4214
    %v4791 = vunpack.c.l.b16 %v4215
    %v4792 = vunpack.c.l.b16 %v4216
    %v4793 = vunpack.c.l.b16 %v4217
    %v4794 = vunpack.c.l.b16 %v4218
    %v4795 = vunpack.c.l.b16 %v4219
    %v4796 = vunpack.c.l.b16 %v4220
    %v4797 = vunpack.c.l.b16 %v4221
    %v4798 = vunpack.c.l.b16 %v4222
    %v4799 = vunpack.c.l.b16 %v4223
    %v4800 = vunpack.c.l.b16 %v4224
    %v4801 = vunpack.c.l.b16 %v4225
    %v4802 = vunpack.c.l.b16 %v4226
    %v4803 = vunpack.c.l.b16 %v4227
    %v4804 = vunpack.c.l.b16 %v4228
    %v4805 = vunpack.c.l.b16 %v4229
    %v4806 = vunpack.c.l.b16 %v4230
    %v4807 = vunpack.c.l.b16 %v4231
    %v4808 = vunpack.c.l.b16 %v4232
    %v4809 = vunpack.c.l.b16 %v4233
    %v4810 = vunpack.c.l.b16 %v4234
    %v4811 = vunpack.c.l.b16 %v4235
    %v4812 = vunpack.c.l.b16 %v4236
    %v4813 = vunpack.c.l.b16 %v4237
    %v4814 = vunpack.c.l.b16 %v4238
    %v4815 = vunpack.c.l.b16 %v4239
    %v4816 = vunpack.c.l.b16 %v4240
    %v4817 = vunpack.c.l.b16 %v4241
    %v4818 = vunpack.c.l.b16 %v4242
    %v4819 = vunpack.c.l.b16 %v4243
    %v4820 = vunpack.c.l.b16 %v4244
    %v4821 = vunpack.c.l.b16 %v4245
    %v4822 = vunpack.c.l.b16 %v4246
    %v4823 = vunpack.c.l.b16 %v4247
    %v4824 = vunpack.c.l.b16 %v4248
    %v4825 = vunpack.c.l.b16 %v4249
    %v4826 = vunpack.c.l.b16 %v4250
    %v4827 = vunpack.c.l.b16 %v4251
    %v4828 = vunpack.c.l.b16 %v4252
    %v4829 = vunpack.c.l.b16 %v4253
    %v4830 = vunpack.c.l.b16 %v4254
    %v4831 = vunpack.c.l.b16 %v4255
    %v4832 = vunpack.c.l.b16 %v4256
    %v4833 = vunpack.c.l.b16 %v4257
    %v4834 = vunpack.c.l.b16 %v4258
    %v4835 = vunpack.c.l.b16 %v4259
    %v4836 = vunpack.c.l.b16 %v4260
    %v4837 = vunpack.c.l.b16 %v4261
    %v4838 = vunpack.c.l.b16 %v4262
    %v4839 = vunpack.c.l.b16 %v4263
    %v4840 = vunpack.c.l.b16 %v4264
    %v4841 = vunpack.c.l.b16 %v4265
    %v4842 = vunpack.c.l.b16 %v4266
    %v4843 = vunpack.c.l.b16 %v4267
    %v4844 = vunpack.c.l.b16 %v4268
    %v4845 = vunpack.c.l.b16 %v4269
    %v4846 = vunpack.c.l.b16 %v4270
    %v4847 = vunpack.c.l.b16 %v4271
    %v4848 = vunpack.c.l.b16 %v4272
    %v4849 = vunpack.c.l.b16 %v4273
    %v4850 = vunpack.c.l.b16 %v4274
    %v4851 = vunpack.c.l.b16 %v4275
    %v4852 = vunpack.c.l.b16 %v4276
    %v4853 = vunpack.c.l.b16 %v4277
    %v4854 = vunpack.c.l.b16 %v4278
    %v4855 = vunpack.c.l.b16 %v4279
    %v4856 = vunpack.c.l.b16 %v4280
    %v4857 = vunpack.c.l.b16 %v4281
    %v4858 = vunpack.c.l.b16 %v4282
    %v4859 = vunpack.c.l.b16 %v4283
    %v4860 = vunpack.c.l.b16 %v4284
    %v4861 = vunpack.c.l.b16 %v4285
    %v4862 = vunpack.c.l.b16 %v4286
    %v4863 = vunpack.c.l.b16 %v4287
    %v4864 = vunpack.c.l.b16 %v4288
    %v4865 = vunpack.c.l.b16 %v4289
    %v4866 = vunpack.c.l.b16 %v4290
    %v4867 = vunpack.c.l.b16 %v4291
    %v4868 = vunpack.c.l.b16 %v4292
    %v4869 = vunpack.c.l.b16 %v4293
    %v4870 = vunpack.c.l.b16 %v4294
    %v4871 = vunpack.c.l.b16 %v4295
    %v4872 = vunpack.c.l.b16 %v4296
    %v4873 = vunpack.c.l.b16 %v4297
    %v4874 = vunpack.c.l.b16 %v4298
    %v4875 = vunpack.c.l.b16 %v4299
    %v4876 = vunpack.c.l.b16 %v4300
    %v4877 = vunpack.c.l.b16 %v4301
    %v4878 = vunpack.c.l.b16 %v4302
    %v4879 = vunpack.c.l.b16 %v4303
    %v4880 = vunpack.c.l.b16 %v4304
    %v4881 = vunpack.c.l.b16 %v4305
    %v4882 = vunpack.c.l.b16 %v4306
    %v4883 = vunpack.c.l.b16 %v4307
    %v4884 = vunpack.c.l.b16 %v4308
    %v4885 = vunpack.c.l.b16 %v4309
    %v4886 = vunpack.c.l.b16 %v4310
    %v4887 = vunpack.c.l.b16 %v4311
    %v4888 = vunpack.c.l.b16 %v4312
    %v4889 = vunpack.c.l.b16 %v4313
    %v4890 = vunpack.c.l.b16 %v4314
    %v4891 = vunpack.c.l.b16 %v4315
    %v4892 = vunpack.c.l.b16 %v4316
    %v4893 = vunpack.c.l.b16 %v4317
    %v4894 = vunpack.c.l.b16 %v4318
    %v4895 = vunpack.c.l.b16 %v4319
    %v4896 = vunpack.c.l.b16 %v4320
    %v4897 = vunpack.c.l.b16 %v4321
    %v4898 = vunpack.c.l.b16 %v4322
    %v4899 = vunpack.c.l.b16 %v4323
    %v4900 = vunpack.c.l.b16 %v4324
    %v4901 = vunpack.c.l.b16 %v4325
    %v4902 = vunpack.c.l.b16 %v4326
    %v4903 = vunpack.c.l.b16 %v4327
    %v4904 = vunpack.c.l.b16 %v4328
    %v4905 = vunpack.c.l.b16 %v4329
    %v4906 = vunpack.c.l.b16 %v4330
    %v4907 = vunpack.c.l.b16 %v4331
    %v4908 = vunpack.c.l.b16 %v4332
    %v4909 = vunpack.c.l.b16 %v4333
    %v4910 = vunpack.c.l.b16 %v4334
    %v4911 = vunpack.c.l.b16 %v4335
    %v4912 = vunpack.c.l.b16 %v4336
    %v4913 = vunpack.c.l.b16 %v4337
    %v4914 = vunpack.c.l.b16 %v4338
    %v4915 = vunpack.c.l.b16 %v4339
    %v4916 = vunpack.c.l.b16 %v4340
    %v4917 = vunpack.c.l.b16 %v4341
    %v4918 = vunpack.c.l.b16 %v4342
    %v4919 = vunpack.c.l.b16 %v4343
    %v4920 = vunpack.c.l.b16 %v4344
    %v4921 = vunpack.c.l.b16 %v4345
    %v4922 = vunpack.c.l.b16 %v4346
    %v4923 = vunpack.c.l.b16 %v4347
    %v4924 = vunpack.c.l.b16 %v4348
    %v4925 = vunpack.c.l.b16 %v4349
    %v4926 = vunpack.c.l.b16 %v4350
    %v4927 = vunpack.c.l.b16 %v4351
    %v4928 = vunpack.c.l.b16 %v4352
    %v4929 = vunpack.c.l.b16 %v4353
    %v4930 = vunpack.c.l.b16 %v4354
    %v4931 = vunpack.c.l.b16 %v4355
    %v4932 = vunpack.c.l.b16 %v4356
    %vm4933 = vcmask 1041409
    %v4934 = vsel %vm4933, %v4681, %v4677
    %vm4935 = vcmask 1042434
    %v4936 = vsel %vm4935, %v4685, %v4934
    %vm4937 = vcmask 1043459
    %v4938 = vsel %vm4937, %v4689, %v4936
    %vm4939 = vcmask 1044484
    %v4940 = vsel %vm4939, %v4693, %v4938
    %vm4941 = vcmask 1045509
    %v4942 = vsel %vm4941, %v4697, %v4940
    %vm4943 = vcmask 1046534
    %v4944 = vsel %vm4943, %v4701, %v4942
    %vm4945 = vcmask 1047559
    %v4946 = vsel %vm4945, %v4705, %v4944
    %v4947 = vsel %vm4933, %v4682, %v4678
    %v4948 = vsel %vm4935, %v4686, %v4947
    %v4949 = vsel %vm4937, %v4690, %v4948
    %v4950 = vsel %vm4939, %v4694, %v4949
    %v4951 = vsel %vm4941, %v4698, %v4950
    %v4952 = vsel %vm4943, %v4702, %v4951
    %v4953 = vsel %vm4945, %v4706, %v4952
    %v4954 = vsel %vm4933, %v4683, %v4679
    %v4955 = vsel %vm4935, %v4687, %v4954
    %v4956 = vsel %vm4937, %v4691, %v4955
    %v4957 = vsel %vm4939, %v4695, %v4956
    %v4958 = vsel %vm4941, %v4699, %v4957
    %v4959 = vsel %vm4943, %v4703, %v4958
    %v4960 = vsel %vm4945, %v4707, %v4959
    %v4961 = vsel %vm4933, %v4684, %v4680
    %v4962 = vsel %vm4935, %v4688, %v4961
    %v4963 = vsel %vm4937, %v4692, %v4962
    %v4964 = vsel %vm4939, %v4696, %v4963
    %v4965 = vsel %vm4941, %v4700, %v4964
    %v4966 = vsel %vm4943, %v4704, %v4965
    %v4967 = vsel %vm4945, %v4708, %v4966
    %v4968 = vsel %vm4933, %v4713, %v4709
    %v4969 = vsel %vm4935, %v4717, %v4968
    %v4970 = vsel %vm4937, %v4721, %v4969
    %v4971 = vsel %vm4939, %v4725, %v4970
    %v4972 = vsel %vm4941, %v4729, %v4971
    %v4973 = vsel %vm4943, %v4733, %v4972
    %v4974 = vsel %vm4945, %v4737, %v4973
    %v4975 = vsel %vm4933, %v4714, %v4710
    %v4976 = vsel %vm4935, %v4718, %v4975
    %v4977 = vsel %vm4937, %v4722, %v4976
    %v4978 = vsel %vm4939, %v4726, %v4977
    %v4979 = vsel %vm4941, %v4730, %v4978
    %v4980 = vsel %vm4943, %v4734, %v4979
    %v4981 = vsel %vm4945, %v4738, %v4980
    %v4982 = vsel %vm4933, %v4715, %v4711
    %v4983 = vsel %vm4935, %v4719, %v4982
    %v4984 = vsel %vm4937, %v4723, %v4983
    %v4985 = vsel %vm4939, %v4727, %v4984
    %v4986 = vsel %vm4941, %v4731, %v4985
    %v4987 = vsel %vm4943, %v4735, %v4986
    %v4988 = vsel %vm4945, %v4739, %v4987
    %v4989 = vsel %vm4933, %v4716, %v4712
    %v4990 = vsel %vm4935, %v4720, %v4989
    %v4991 = vsel %vm4937, %v4724, %v4990
    %v4992 = vsel %vm4939, %v4728, %v4991
    %v4993 = vsel %vm4941, %v4732, %v4992
    %v4994 = vsel %vm4943, %v4736, %v4993
    %v4995 = vsel %vm4945, %v4740, %v4994
    %v4996 = vsel %vm4933, %v4745, %v4741
    %v4997 = vsel %vm4935, %v4749, %v4996
    %v4998 = vsel %vm4937, %v4753, %v4997
    %v4999 = vsel %vm4939, %v4757, %v4998
    %v5000 = vsel %vm4941, %v4761, %v4999
    %v5001 = vsel %vm4943, %v4765, %v5000
    %v5002 = vsel %vm4945, %v4769, %v5001
    %v5003 = vsel %vm4933, %v4746, %v4742
    %v5004 = vsel %vm4935, %v4750, %v5003
    %v5005 = vsel %vm4937, %v4754, %v5004
    %v5006 = vsel %vm4939, %v4758, %v5005
    %v5007 = vsel %vm4941, %v4762, %v5006
    %v5008 = vsel %vm4943, %v4766, %v5007
    %v5009 = vsel %vm4945, %v4770, %v5008
    %v5010 = vsel %vm4933, %v4747, %v4743
    %v5011 = vsel %vm4935, %v4751, %v5010
    %v5012 = vsel %vm4937, %v4755, %v5011
    %v5013 = vsel %vm4939, %v4759, %v5012
    %v5014 = vsel %vm4941, %v4763, %v5013
    %v5015 = vsel %vm4943, %v4767, %v5014
    %v5016 = vsel %vm4945, %v4771, %v5015
    %v5017 = vsel %vm4933, %v4748, %v4744
    %v5018 = vsel %vm4935, %v4752, %v5017
    %v5019 = vsel %vm4937, %v4756, %v5018
    %v5020 = vsel %vm4939, %v4760, %v5019
    %v5021 = vsel %vm4941, %v4764, %v5020
    %v5022 = vsel %vm4943, %v4768, %v5021
    %v5023 = vsel %vm4945, %v4772, %v5022
    %v5024 = vsel %vm4933, %v4777, %v4773
    %v5025 = vsel %vm4935, %v4781, %v5024
    %v5026 = vsel %vm4937, %v4785, %v5025
    %v5027 = vsel %vm4939, %v4789, %v5026
    %v5028 = vsel %vm4941, %v4793, %v5027
    %v5029 = vsel %vm4943, %v4797, %v5028
    %v5030 = vsel %vm4945, %v4801, %v5029
    %v5031 = vsel %vm4933, %v4778, %v4774
    %v5032 = vsel %vm4935, %v4782, %v5031
    %v5033 = vsel %vm4937, %v4786, %v5032
    %v5034 = vsel %vm4939, %v4790, %v5033
    %v5035 = vsel %vm4941, %v4794, %v5034
    %v5036 = vsel %vm4943, %v4798, %v5035
    %v5037 = vsel %vm4945, %v4802, %v5036
    %v5038 = vsel %vm4933, %v4779, %v4775
    %v5039 = vsel %vm4935, %v4783, %v5038
    %v5040 = vsel %vm4937, %v4787, %v5039
    %v5041 = vsel %vm4939, %v4791, %v5040
    %v5042 = vsel %vm4941, %v4795, %v5041
    %v5043 = vsel %vm4943, %v4799, %v5042
    %v5044 = vsel %vm4945, %v4803, %v5043
    %v5045 = vsel %vm4933, %v4780, %v4776
    %v5046 = vsel %vm4935, %v4784, %v5045
    %v5047 = vsel %vm4937, %v4788, %v5046
    %v5048 = vsel %vm4939, %v4792, %v5047
    %v5049 = vsel %vm4941, %v4796, %v5048
    %v5050 = vsel %vm4943, %v4800, %v5049
    %v5051 = vsel %vm4945, %v4804, %v5050
    %v5052 = vsel %vm4933, %v4809, %v4805
    %v5053 = vsel %vm4935, %v4813, %v5052
    %v5054 = vsel %vm4937, %v4817, %v5053
    %v5055 = vsel %vm4939, %v4821, %v5054
    %v5056 = vsel %vm4941, %v4825, %v5055
    %v5057 = vsel %vm4943, %v4829, %v5056
    %v5058 = vsel %vm4945, %v4833, %v5057
    %v5059 = vsel %vm4933, %v4810, %v4806
    %v5060 = vsel %vm4935, %v4814, %v5059
    %v5061 = vsel %vm4937, %v4818, %v5060
    %v5062 = vsel %vm4939, %v4822, %v5061
    %v5063 = vsel %vm4941, %v4826, %v5062
    %v5064 = vsel %vm4943, %v4830, %v5063
    %v5065 = vsel %vm4945, %v4834, %v5064
    %v5066 = vsel %vm4933, %v4811, %v4807
    %v5067 = vsel %vm4935, %v4815, %v5066
    %v5068 = vsel %vm4937, %v4819, %v5067
    %v5069 = vsel %vm4939, %v4823, %v5068
    %v5070 = vsel %vm4941, %v4827, %v5069
    %v5071 = vsel %vm4943, %v4831, %v5070
    %v5072 = vsel %vm4945, %v4835, %v5071
    %v5073 = vsel %vm4933, %v4812, %v4808
    %v5074 = vsel %vm4935, %v4816, %v5073
    %v5075 = vsel %vm4937, %v4820, %v5074
    %v5076 = vsel %vm4939, %v4824, %v5075
    %v5077 = vsel %vm4941, %v4828, %v5076
    %v5078 = vsel %vm4943, %v4832, %v5077
    %v5079 = vsel %vm4945, %v4836, %v5078
    %v5080 = vsel %vm4933, %v4841, %v4837
    %v5081 = vsel %vm4935, %v4845, %v5080
    %v5082 = vsel %vm4937, %v4849, %v5081
    %v5083 = vsel %vm4939, %v4853, %v5082
    %v5084 = vsel %vm4941, %v4857, %v5083
    %v5085 = vsel %vm4943, %v4861, %v5084
    %v5086 = vsel %vm4945, %v4865, %v5085
    %v5087 = vsel %vm4933, %v4842, %v4838
    %v5088 = vsel %vm4935, %v4846, %v5087
    %v5089 = vsel %vm4937, %v4850, %v5088
    %v5090 = vsel %vm4939, %v4854, %v5089
    %v5091 = vsel %vm4941, %v4858, %v5090
    %v5092 = vsel %vm4943, %v4862, %v5091
    %v5093 = vsel %vm4945, %v4866, %v5092
    %v5094 = vsel %vm4933, %v4843, %v4839
    %v5095 = vsel %vm4935, %v4847, %v5094
    %v5096 = vsel %vm4937, %v4851, %v5095
    %v5097 = vsel %vm4939, %v4855, %v5096
    %v5098 = vsel %vm4941, %v4859, %v5097
    %v5099 = vsel %vm4943, %v4863, %v5098
    %v5100 = vsel %vm4945, %v4867, %v5099
    %v5101 = vsel %vm4933, %v4844, %v4840
    %v5102 = vsel %vm4935, %v4848, %v5101
    %v5103 = vsel %vm4937, %v4852, %v5102
    %v5104 = vsel %vm4939, %v4856, %v5103
    %v5105 = vsel %vm4941, %v4860, %v5104
    %v5106 = vsel %vm4943, %v4864, %v5105
    %v5107 = vsel %vm4945, %v4868, %v5106
    %v5108 = vsel %vm4933, %v4873, %v4869
    %v5109 = vsel %vm4935, %v4877, %v5108
    %v5110 = vsel %vm4937, %v4881, %v5109
    %v5111 = vsel %vm4939, %v4885, %v5110
    %v5112 = vsel %vm4941, %v4889, %v5111
    %v5113 = vsel %vm4943, %v4893, %v5112
    %v5114 = vsel %vm4945, %v4897, %v5113
    %v5115 = vsel %vm4933, %v4874, %v4870
    %v5116 = vsel %vm4935, %v4878, %v5115
    %v5117 = vsel %vm4937, %v4882, %v5116
    %v5118 = vsel %vm4939, %v4886, %v5117
    %v5119 = vsel %vm4941, %v4890, %v5118
    %v5120 = vsel %vm4943, %v4894, %v5119
    %v5121 = vsel %vm4945, %v4898, %v5120
    %v5122 = vsel %vm4933, %v4875, %v4871
    %v5123 = vsel %vm4935, %v4879, %v5122
    %v5124 = vsel %vm4937, %v4883, %v5123
    %v5125 = vsel %vm4939, %v4887, %v5124
    %v5126 = vsel %vm4941, %v4891, %v5125
    %v5127 = vsel %vm4943, %v4895, %v5126
    %v5128 = vsel %vm4945, %v4899, %v5127
    %v5129 = vsel %vm4933, %v4876, %v4872
    %v5130 = vsel %vm4935, %v4880, %v5129
    %v5131 = vsel %vm4937, %v4884, %v5130
    %v5132 = vsel %vm4939, %v4888, %v5131
    %v5133 = vsel %vm4941, %v4892, %v5132
    %v5134 = vsel %vm4943, %v4896, %v5133
    %v5135 = vsel %vm4945, %v4900, %v5134
    %v5136 = vsel %vm4933, %v4905, %v4901
    %v5137 = vsel %vm4935, %v4909, %v5136
    %v5138 = vsel %vm4937, %v4913, %v5137
    %v5139 = vsel %vm4939, %v4917, %v5138
    %v5140 = vsel %vm4941, %v4921, %v5139
    %v5141 = vsel %vm4943, %v4925, %v5140
    %v5142 = vsel %vm4945, %v4929, %v5141
    %v5143 = vsel %vm4933, %v4906, %v4902
    %v5144 = vsel %vm4935, %v4910, %v5143
    %v5145 = vsel %vm4937, %v4914, %v5144
    %v5146 = vsel %vm4939, %v4918, %v5145
    %v5147 = vsel %vm4941, %v4922, %v5146
    %v5148 = vsel %vm4943, %v4926, %v5147
    %v5149 = vsel %vm4945, %v4930, %v5148
    %v5150 = vsel %vm4933, %v4907, %v4903
    %v5151 = vsel %vm4935, %v4911, %v5150
    %v5152 = vsel %vm4937, %v4915, %v5151
    %v5153 = vsel %vm4939, %v4919, %v5152
    %v5154 = vsel %vm4941, %v4923, %v5153
    %v5155 = vsel %vm4943, %v4927, %v5154
    %v5156 = vsel %vm4945, %v4931, %v5155
    %v5157 = vsel %vm4933, %v4908, %v4904
    %v5158 = vsel %vm4935, %v4912, %v5157
    %v5159 = vsel %vm4937, %v4916, %v5158
    %v5160 = vsel %vm4939, %v4920, %v5159
    %v5161 = vsel %vm4941, %v4924, %v5160
    %v5162 = vsel %vm4943, %v4928, %v5161
    %v5163 = vsel %vm4945, %v4932, %v5162
    %v5164 = vpack.c.b16 %v4974, %v4946
    %v5165 = vpack.c.b16 %v4981, %v4953
    %v5166 = vpack.c.b16 %v4988, %v4960
    %v5167 = vpack.c.b16 %v4995, %v4967
    %v5168 = vpack.c.b16 %v5030, %v5002
    %v5169 = vpack.c.b16 %v5037, %v5009
    %v5170 = vpack.c.b16 %v5044, %v5016
    %v5171 = vpack.c.b16 %v5051, %v5023
    %v5172 = vpack.c.b16 %v5086, %v5058
    %v5173 = vpack.c.b16 %v5093, %v5065
    %v5174 = vpack.c.b16 %v5100, %v5072
    %v5175 = vpack.c.b16 %v5107, %v5079
    %v5176 = vpack.c.b16 %v5142, %v5114
    %v5177 = vpack.c.b16 %v5149, %v5121
    %v5178 = vpack.c.b16 %v5156, %v5128
    %v5179 = vpack.c.b16 %v5163, %v5135
    %v5260 = vunpack.c.l.b16 %v4357
    %v5261 = vunpack.c.l.b16 %v4358
    %v5262 = vunpack.c.l.b16 %v4359
    %v5263 = vunpack.c.l.b16 %v4360
    %v5264 = vunpack.c.l.b16 %v4361
    %v5265 = vunpack.c.l.b16 %v4362
    %v5266 = vunpack.c.l.b16 %v4363
    %v5267 = vunpack.c.l.b16 %v4364
    %v5268 = vunpack.c.l.b16 %v4365
    %v5269 = vunpack.c.l.b16 %v4366
    %v5270 = vunpack.c.l.b16 %v4367
    %v5271 = vunpack.c.l.b16 %v4368
    %v5272 = vunpack.c.l.b16 %v4369
    %v5273 = vunpack.c.l.b16 %v4370
    %v5274 = vunpack.c.l.b16 %v4371
    %v5275 = vunpack.c.l.b16 %v4372
    %v5276 = vunpack.c.l.b16 %v4373
    %v5277 = vunpack.c.l.b16 %v4374
    %v5278 = vunpack.c.l.b16 %v4375
    %v5279 = vunpack.c.l.b16 %v4376
    %v5280 = vunpack.c.l.b16 %v4377
    %v5281 = vunpack.c.l.b16 %v4378
    %v5282 = vunpack.c.l.b16 %v4379
    %v5283 = vunpack.c.l.b16 %v4380
    %v5284 = vunpack.c.l.b16 %v4381
    %v5285 = vunpack.c.l.b16 %v4382
    %v5286 = vunpack.c.l.b16 %v4383
    %v5287 = vunpack.c.l.b16 %v4384
    %v5288 = vunpack.c.l.b16 %v4385
    %v5289 = vunpack.c.l.b16 %v4386
    %v5290 = vunpack.c.l.b16 %v4387
    %v5291 = vunpack.c.l.b16 %v4388
    %v5292 = vunpack.c.l.b16 %v4389
    %v5293 = vunpack.c.l.b16 %v4390
    %v5294 = vunpack.c.l.b16 %v4391
    %v5295 = vunpack.c.l.b16 %v4392
    %v5296 = vunpack.c.l.b16 %v4393
    %v5297 = vunpack.c.l.b16 %v4394
    %v5298 = vunpack.c.l.b16 %v4395
    %v5299 = vunpack.c.l.b16 %v4396
    %v5300 = vunpack.c.l.b16 %v4397
    %v5301 = vunpack.c.l.b16 %v4398
    %v5302 = vunpack.c.l.b16 %v4399
    %v5303 = vunpack.c.l.b16 %v4400
    %v5304 = vunpack.c.l.b16 %v4401
    %v5305 = vunpack.c.l.b16 %v4402
    %v5306 = vunpack.c.l.b16 %v4403
    %v5307 = vunpack.c.l.b16 %v4404
    %v5308 = vunpack.c.l.b16 %v4405
    %v5309 = vunpack.c.l.b16 %v4406
    %v5310 = vunpack.c.l.b16 %v4407
    %v5311 = vunpack.c.l.b16 %v4408
    %v5312 = vunpack.c.l.b16 %v4409
    %v5313 = vunpack.c.l.b16 %v4410
    %v5314 = vunpack.c.l.b16 %v4411
    %v5315 = vunpack.c.l.b16 %v4412
    %v5316 = vunpack.c.l.b16 %v4413
    %v5317 = vunpack.c.l.b16 %v4414
    %v5318 = vunpack.c.l.b16 %v4415
    %v5319 = vunpack.c.l.b16 %v4416
    %v5320 = vunpack.c.l.b16 %v4417
    %v5321 = vunpack.c.l.b16 %v4418
    %v5322 = vunpack.c.l.b16 %v4419
    %v5323 = vunpack.c.l.b16 %v4420
    %v5324 = vpack.c.b16 %v5261, %v5260
    %v5325 = vpack.c.b16 %v5263, %v5262
    %v5326 = vpack.c.b16 %v5265, %v5264
    %v5327 = vpack.c.b16 %v5267, %v5266
    %v5328 = vpack.c.b16 %v5269, %v5268
    %v5329 = vpack.c.b16 %v5271, %v5270
    %v5330 = vpack.c.b16 %v5273, %v5272
    %v5331 = vpack.c.b16 %v5275, %v5274
    %v5332 = vpack.c.b16 %v5277, %v5276
    %v5333 = vpack.c.b16 %v5279, %v5278
    %v5334 = vpack.c.b16 %v5281, %v5280
    %v5335 = vpack.c.b16 %v5283, %v5282
    %v5336 = vpack.c.b16 %v5285, %v5284
    %v5337 = vpack.c.b16 %v5287, %v5286
    %v5338 = vpack.c.b16 %v5289, %v5288
    %v5339 = vpack.c.b16 %v5291, %v5290
    %v5340 = vpack.c.b16 %v5293, %v5292
    %v5341 = vpack.c.b16 %v5295, %v5294
    %v5342 = vpack.c.b16 %v5297, %v5296
    %v5343 = vpack.c.b16 %v5299, %v5298
    %v5344 = vpack.c.b16 %v5301, %v5300
    %v5345 = vpack.c.b16 %v5303, %v5302
    %v5346 = vpack.c.b16 %v5305, %v5304
    %v5347 = vpack.c.b16 %v5307, %v5306
    %v5348 = vpack.c.b16 %v5309, %v5308
    %v5349 = vpack.c.b16 %v5311, %v5310
    %v5350 = vpack.c.b16 %v5313, %v5312
    %v5351 = vpack.c.b16 %v5315, %v5314
    %v5352 = vpack.c.b16 %v5317, %v5316
    %v5353 = vpack.c.b16 %v5319, %v5318
    %v5354 = vpack.c.b16 %v5321, %v5320
    %v5355 = vpack.c.b16 %v5323, %v5322
    %5388 = vmatprep.subr.bf16.mxu0 0
    %5389 = vmatpush1.bf16.msra.mxu0 %v5331
    %5390 = vmatprep.subr.bf16.mxu0 0
    %5391 = vmatpush1.bf16.msra.mxu0 %v5330
    %5392 = vmatprep.subr.bf16.mxu0 0
    %5393 = vmatpush1.bf16.msra.mxu0 %v5329
    %5394 = vmatprep.subr.bf16.mxu0 0
    %5395 = vmatpush1.bf16.msra.mxu0 %v5328
    %5396 = vmatprep.subr.bf16.mxu0 0
    %5397 = vmatpush1.bf16.msra.mxu0 %v5327
    %5398 = vmatprep.subr.bf16.mxu0 0
    %5399 = vmatpush1.bf16.msra.mxu0 %v5326
    %5400 = vmatprep.subr.bf16.mxu0 0
    %5401 = vmatpush1.bf16.msra.mxu0 %v5325
    %5402 = vmatprep.subr.bf16.mxu0 0
    %5403 = vmatpush1.bf16.msra.mxu0 %v5324
    %5404 = vmatprep.subr.bf16.mxu0 0
    %5405 = vmatpush2.bf16.msra.mxu0 %v5339
    %5406 = vmatprep.subr.bf16.mxu0 0
    %5407 = vmatpush2.bf16.msra.mxu0 %v5338
    %5408 = vmatprep.subr.bf16.mxu0 0
    %5409 = vmatpush2.bf16.msra.mxu0 %v5337
    %5410 = vmatprep.subr.bf16.mxu0 0
    %5411 = vmatpush2.bf16.msra.mxu0 %v5336
    %5412 = vmatprep.subr.bf16.mxu0 0
    %5413 = vmatpush2.bf16.msra.mxu0 %v5335
    %5414 = vmatprep.subr.bf16.mxu0 0
    %5415 = vmatpush2.bf16.msra.mxu0 %v5334
    %5416 = vmatprep.subr.bf16.mxu0 0
    %5417 = vmatpush2.bf16.msra.mxu0 %v5333
    %5418 = vmatprep.subr.bf16.mxu0 0
    %5419 = vmatpush2.bf16.msra.mxu0 %v5332
    %5420 = vmatprep.mubr.bf16.mxu0 %v5165
    %5421 = vmatmul.mubr.bf16.gmra.mxu0 %v5164
    %v5422 = vpop.f32.mrf.mxu0
    %v5423 = vadd.f32 0.0, %v5422
    %v5424 = vpop.f32.mrf.mxu0
    %v5425 = vpop.f32.mrf.mxu0
    %v5426 = vadd.f32 0.0, %v5425
    %v5427 = vpop.f32.mrf.mxu0
    %5428 = vmatprep.mubr.bf16.mxu0 %v5169
    %5429 = vmatmul.mubr.bf16.gmra.mxu0 %v5168
    %v5430 = vpop.f32.mrf.mxu0
    %v5431 = vadd.f32 0.0, %v5430
    %v5432 = vpop.f32.mrf.mxu0
    %v5433 = vpop.f32.mrf.mxu0
    %v5434 = vadd.f32 0.0, %v5433
    %v5435 = vpop.f32.mrf.mxu0
    %5436 = vmatprep.mubr.bf16.mxu0 %v5173
    %5437 = vmatmul.mubr.bf16.gmra.mxu0 %v5172
    %v5438 = vpop.f32.mrf.mxu0
    %v5439 = vadd.f32 0.0, %v5438
    %v5440 = vpop.f32.mrf.mxu0
    %v5441 = vpop.f32.mrf.mxu0
    %v5442 = vadd.f32 0.0, %v5441
    %v5443 = vpop.f32.mrf.mxu0
    %5444 = vmatprep.mubr.bf16.mxu0 %v5177
    %5445 = vmatmul.mubr.bf16.gmra.mxu0 %v5176
    %v5446 = vpop.f32.mrf.mxu0
    %v5447 = vadd.f32 0.0, %v5446
    %v5448 = vpop.f32.mrf.mxu0
    %v5449 = vpop.f32.mrf.mxu0
    %v5450 = vadd.f32 0.0, %v5449
    %v5451 = vpop.f32.mrf.mxu0
    %5452 = vdwg.mxu0
    %5453 = vmatprep.subr.bf16.mxu0 0
    %5454 = vmatpush1.bf16.msra.mxu0 %v5347
    %5455 = vmatprep.subr.bf16.mxu0 0
    %5456 = vmatpush1.bf16.msra.mxu0 %v5346
    %5457 = vmatprep.subr.bf16.mxu0 0
    %5458 = vmatpush1.bf16.msra.mxu0 %v5345
    %5459 = vmatprep.subr.bf16.mxu0 0
    %5460 = vmatpush1.bf16.msra.mxu0 %v5344
    %5461 = vmatprep.subr.bf16.mxu0 0
    %5462 = vmatpush1.bf16.msra.mxu0 %v5343
    %5463 = vmatprep.subr.bf16.mxu0 0
    %5464 = vmatpush1.bf16.msra.mxu0 %v5342
    %5465 = vmatprep.subr.bf16.mxu0 0
    %5466 = vmatpush1.bf16.msra.mxu0 %v5341
    %5467 = vmatprep.subr.bf16.mxu0 0
    %5468 = vmatpush1.bf16.msra.mxu0 %v5340
    %5469 = vmatprep.subr.bf16.mxu0 0
    %5470 = vmatpush2.bf16.msra.mxu0 %v5355
    %5471 = vmatprep.subr.bf16.mxu0 0
    %5472 = vmatpush2.bf16.msra.mxu0 %v5354
    %5473 = vmatprep.subr.bf16.mxu0 0
    %5474 = vmatpush2.bf16.msra.mxu0 %v5353
    %5475 = vmatprep.subr.bf16.mxu0 0
    %5476 = vmatpush2.bf16.msra.mxu0 %v5352
    %5477 = vmatprep.subr.bf16.mxu0 0
    %5478 = vmatpush2.bf16.msra.mxu0 %v5351
    %5479 = vmatprep.subr.bf16.mxu0 0
    %5480 = vmatpush2.bf16.msra.mxu0 %v5350
    %5481 = vmatprep.subr.bf16.mxu0 0
    %5482 = vmatpush2.bf16.msra.mxu0 %v5349
    %5483 = vmatprep.subr.bf16.mxu0 0
    %5484 = vmatpush2.bf16.msra.mxu0 %v5348
    %5485 = vmatprep.mubr.bf16.mxu0 %v5167
    %5486 = vmatmul.mubr.bf16.gmra.mxu0 %v5166
    %v5487 = vpop.f32.mrf.mxu0
    %v5488 = vadd.f32 %v5423, %v5487
    %v5489 = vpop.f32.mrf.mxu0
    %v5490 = vpop.f32.mrf.mxu0
    %v5491 = vadd.f32 %v5426, %v5490
    %v5492 = vpop.f32.mrf.mxu0
    %5493 = vmatprep.mubr.bf16.mxu0 %v5171
    %5494 = vmatmul.mubr.bf16.gmra.mxu0 %v5170
    %v5495 = vpop.f32.mrf.mxu0
    %v5496 = vadd.f32 %v5431, %v5495
    %v5497 = vpop.f32.mrf.mxu0
    %v5498 = vpop.f32.mrf.mxu0
    %v5499 = vadd.f32 %v5434, %v5498
    %v5500 = vpop.f32.mrf.mxu0
    %5501 = vmatprep.mubr.bf16.mxu0 %v5175
    %5502 = vmatmul.mubr.bf16.gmra.mxu0 %v5174
    %v5503 = vpop.f32.mrf.mxu0
    %v5504 = vadd.f32 %v5439, %v5503
    %v5505 = vpop.f32.mrf.mxu0
    %v5506 = vpop.f32.mrf.mxu0
    %v5507 = vadd.f32 %v5442, %v5506
    %v5508 = vpop.f32.mrf.mxu0
    %5509 = vmatprep.mubr.bf16.mxu0 %v5179
    %5510 = vmatmul.mubr.bf16.gmra.mxu0 %v5178
    %v5511 = vpop.f32.mrf.mxu0
    %v5512 = vadd.f32 %v5447, %v5511
    %v5513 = vpop.f32.mrf.mxu0
    %v5514 = vpop.f32.mrf.mxu0
    %v5515 = vadd.f32 %v5450, %v5514
    %v5516 = vpop.f32.mrf.mxu0
    %5517 = vdwg.mxu0
    %v5518 = vld [vmem:[%s1] sm:$0xff]
    %v5519 = vld [vmem:[%s1 + $0x8] sm:$0xff]
    %v5520 = vld [vmem:[%s1 + $0x10] sm:$0xff]
    %v5521 = vld [vmem:[%s1 + $0x18] sm:$0xff]
    %v5522 = vld [vmem:[%s1 + $0x20] sm:$0xff]
    %v5523 = vld [vmem:[%s1 + $0x28] sm:$0xff]
    %v5524 = vld [vmem:[%s1 + $0x30] sm:$0xff]
    %v5525 = vld [vmem:[%s1 + $0x38] sm:$0xff]
    %5527 = vset.pattern.permute.xlu0 0
    %5528 = vperm.xlu0 %5527, %v5518
    %v5529 = vpop.permute.xlu0 %5528
    %5532 = vset.pattern.permute.xlu0 0
    %5533 = vperm.xlu0 %5532, %v5519
    %v5534 = vpop.permute.xlu0 %5533
    %5537 = vset.pattern.permute.xlu0 0
    %5538 = vperm.xlu0 %5537, %v5520
    %v5539 = vpop.permute.xlu0 %5538
    %5542 = vset.pattern.permute.xlu0 0
    %5543 = vperm.xlu0 %5542, %v5521
    %v5544 = vpop.permute.xlu0 %5543
    %5547 = vset.pattern.permute.xlu0 0
    %5548 = vperm.xlu0 %5547, %v5522
    %v5549 = vpop.permute.xlu0 %5548
    %5552 = vset.pattern.permute.xlu0 0
    %5553 = vperm.xlu0 %5552, %v5523
    %v5554 = vpop.permute.xlu0 %5553
    %5557 = vset.pattern.permute.xlu0 0
    %5558 = vperm.xlu0 %5557, %v5524
    %v5559 = vpop.permute.xlu0 %5558
    %5562 = vset.pattern.permute.xlu0 0
    %5563 = vperm.xlu0 %5562, %v5525
    %v5564 = vpop.permute.xlu0 %5563
    %v5566 = vmul.f32 %v5488, %v5529
    %v5567 = vmul.f32 %v5491, %v5534
    %v5568 = vmul.f32 %v5496, %v5539
    %v5569 = vmul.f32 %v5499, %v5544
    %v5570 = vmul.f32 %v5504, %v5549
    %v5571 = vmul.f32 %v5507, %v5554
    %v5572 = vmul.f32 %v5512, %v5559
    %v5573 = vmul.f32 %v5515, %v5564
    %v5574 = vpack.c.bf16 %v5567, %v5566
    %v5575 = vpack.c.bf16 %v5569, %v5568
    %v5576 = vpack.c.bf16 %v5571, %v5570
    %v5577 = vpack.c.bf16 %v5573, %v5572
    %v5578 = vld [vmem:[%s3] sm:$0xff]
    %v5579 = vld [vmem:[%s3 + $0x8] sm:$0xff]
    %v5580 = vld [vmem:[%s3 + $0x10] sm:$0xff]
    %v5581 = vld [vmem:[%s3 + $0x18] sm:$0xff]
    %v5582 = vld [vmem:[%s3 + $0x20] sm:$0xff]
    %v5583 = vld [vmem:[%s3 + $0x28] sm:$0xff]
    %v5584 = vld [vmem:[%s3 + $0x30] sm:$0xff]
    %v5585 = vld [vmem:[%s3 + $0x38] sm:$0xff]
    %v5586 = vld [vmem:[%s3 + $0x40] sm:$0xff]
    %v5587 = vld [vmem:[%s3 + $0x48] sm:$0xff]
    %v5588 = vld [vmem:[%s3 + $0x50] sm:$0xff]
    %v5589 = vld [vmem:[%s3 + $0x58] sm:$0xff]
    %v5590 = vld [vmem:[%s3 + $0x60] sm:$0xff]
    %v5591 = vld [vmem:[%s3 + $0x68] sm:$0xff]
    %v5592 = vld [vmem:[%s3 + $0x70] sm:$0xff]
    %v5593 = vld [vmem:[%s3 + $0x78] sm:$0xff]
    %v5594 = vld [vmem:[%s4] sm:$0x3]
    %v5596 = vlaneseq
    %v5597 = vshrl.u32 %v5596, 7
    %v5598 = vsub.s32 0, %v5597
    %v5599 = vrot.slane %v5594, %v5598
    %v5600 = vlaneseq
    %v5601 = vshrl.u32 %v5600, 7
    %v5602 = vsub.s32 1, %v5601
    %v5603 = vrot.slane %v5594, %v5602
    %v5622 = vunpack.c.l.b16 %v5578
    %v5623 = vunpack.c.h.b16 %v5578
    %v5624 = vunpack.c.l.b16 %v5579
    %v5625 = vunpack.c.h.b16 %v5579
    %v5626 = vunpack.c.l.b16 %v5580
    %v5627 = vunpack.c.h.b16 %v5580
    %v5628 = vunpack.c.l.b16 %v5581
    %v5629 = vunpack.c.h.b16 %v5581
    %v5630 = vunpack.c.l.b16 %v5582
    %v5631 = vunpack.c.h.b16 %v5582
    %v5632 = vunpack.c.l.b16 %v5583
    %v5633 = vunpack.c.h.b16 %v5583
    %v5634 = vunpack.c.l.b16 %v5584
    %v5635 = vunpack.c.h.b16 %v5584
    %v5636 = vunpack.c.l.b16 %v5585
    %v5637 = vunpack.c.h.b16 %v5585
    %v5638 = vunpack.c.l.b16 %v5586
    %v5639 = vunpack.c.h.b16 %v5586
    %v5640 = vunpack.c.l.b16 %v5587
    %v5641 = vunpack.c.h.b16 %v5587
    %v5642 = vunpack.c.l.b16 %v5588
    %v5643 = vunpack.c.h.b16 %v5588
    %v5644 = vunpack.c.l.b16 %v5589
    %v5645 = vunpack.c.h.b16 %v5589
    %v5646 = vunpack.c.l.b16 %v5590
    %v5647 = vunpack.c.h.b16 %v5590
    %v5648 = vunpack.c.l.b16 %v5591
    %v5649 = vunpack.c.h.b16 %v5591
    %v5650 = vunpack.c.l.b16 %v5592
    %v5651 = vunpack.c.h.b16 %v5592
    %v5652 = vunpack.c.l.b16 %v5593
    %v5653 = vunpack.c.h.b16 %v5593
    %v5654 = vpack.c.b16 %v5624, %v5622
    %v5655 = vpack.c.b16 %v5625, %v5623
    %v5656 = vpack.c.b16 %v5628, %v5626
    %v5657 = vpack.c.b16 %v5629, %v5627
    %v5658 = vpack.c.b16 %v5632, %v5630
    %v5659 = vpack.c.b16 %v5633, %v5631
    %v5660 = vpack.c.b16 %v5636, %v5634
    %v5661 = vpack.c.b16 %v5637, %v5635
    %v5662 = vpack.c.b16 %v5640, %v5638
    %v5663 = vpack.c.b16 %v5641, %v5639
    %v5664 = vpack.c.b16 %v5644, %v5642
    %v5665 = vpack.c.b16 %v5645, %v5643
    %v5666 = vpack.c.b16 %v5648, %v5646
    %v5667 = vpack.c.b16 %v5649, %v5647
    %v5668 = vpack.c.b16 %v5652, %v5650
    %v5669 = vpack.c.b16 %v5653, %v5651
    %5686 = vmatprep.subr.bf16.mxu0 %v5669
    %5687 = vmatpush1.bf16.msra.mxu0 %v5668
    %5688 = vmatprep.subr.bf16.mxu0 %v5667
    %5689 = vmatpush1.bf16.msra.mxu0 %v5666
    %5690 = vmatprep.subr.bf16.mxu0 %v5665
    %5691 = vmatpush1.bf16.msra.mxu0 %v5664
    %5692 = vmatprep.subr.bf16.mxu0 %v5663
    %5693 = vmatpush1.bf16.msra.mxu0 %v5662
    %5694 = vmatprep.subr.bf16.mxu0 %v5661
    %5695 = vmatpush1.bf16.msra.mxu0 %v5660
    %5696 = vmatprep.subr.bf16.mxu0 %v5659
    %5697 = vmatpush1.bf16.msra.mxu0 %v5658
    %5698 = vmatprep.subr.bf16.mxu0 %v5657
    %5699 = vmatpush1.bf16.msra.mxu0 %v5656
    %5700 = vmatprep.subr.bf16.mxu0 %v5655
    %5701 = vmatpush1.bf16.msra.mxu0 %v5654
    %5702 = vmatprep.subr.bf16.mxu0 0
    %5703 = vmatpush2.bf16.msra.mxu0 0
    %5704 = vmatprep.subr.bf16.mxu0 0
    %5705 = vmatpush2.bf16.msra.mxu0 0
    %5706 = vmatprep.subr.bf16.mxu0 0
    %5707 = vmatpush2.bf16.msra.mxu0 0
    %5708 = vmatprep.subr.bf16.mxu0 0
    %5709 = vmatpush2.bf16.msra.mxu0 0
    %5710 = vmatprep.subr.bf16.mxu0 0
    %5711 = vmatpush2.bf16.msra.mxu0 0
    %5712 = vmatprep.subr.bf16.mxu0 0
    %5713 = vmatpush2.bf16.msra.mxu0 0
    %5714 = vmatprep.subr.bf16.mxu0 0
    %5715 = vmatpush2.bf16.msra.mxu0 0
    %5716 = vmatprep.subr.bf16.mxu0 0
    %5717 = vmatpush2.bf16.msra.mxu0 0
    %5718 = vmatprep.mubr.bf16.mxu0 0
    %5719 = vmatmul.mubr.bf16.gmra.mxu0 %v5574
    %v5720 = vpop.f32.mrf.mxu0
    %v5721 = vadd.f32 %v5599, %v5720
    %v5722 = vpop.f32.mrf.mxu0
    %v5723 = vadd.f32 %v5603, %v5722
    %v5724 = vpop.f32.mrf.mxu0
    %v5725 = vadd.f32 %v5599, %v5724
    %v5726 = vpop.f32.mrf.mxu0
    %v5727 = vadd.f32 %v5603, %v5726
    %5728 = vmatprep.mubr.bf16.mxu0 0
    %5729 = vmatmul.mubr.bf16.gmra.mxu0 %v5575
    %v5730 = vpop.f32.mrf.mxu0
    %v5731 = vadd.f32 %v5599, %v5730
    %v5732 = vpop.f32.mrf.mxu0
    %v5733 = vadd.f32 %v5603, %v5732
    %v5734 = vpop.f32.mrf.mxu0
    %v5735 = vadd.f32 %v5599, %v5734
    %v5736 = vpop.f32.mrf.mxu0
    %v5737 = vadd.f32 %v5603, %v5736
    %5738 = vmatprep.mubr.bf16.mxu0 0
    %5739 = vmatmul.mubr.bf16.gmra.mxu0 %v5576
    %v5740 = vpop.f32.mrf.mxu0
    %v5741 = vadd.f32 %v5599, %v5740
    %v5742 = vpop.f32.mrf.mxu0
    %v5743 = vadd.f32 %v5603, %v5742
    %v5744 = vpop.f32.mrf.mxu0
    %v5745 = vadd.f32 %v5599, %v5744
    %v5746 = vpop.f32.mrf.mxu0
    %v5747 = vadd.f32 %v5603, %v5746
    %5748 = vmatprep.mubr.bf16.mxu0 0
    %5749 = vmatmul.mubr.bf16.gmra.mxu0 %v5577
    %v5750 = vpop.f32.mrf.mxu0
    %v5751 = vadd.f32 %v5599, %v5750
    %v5752 = vpop.f32.mrf.mxu0
    %v5753 = vadd.f32 %v5603, %v5752
    %v5754 = vpop.f32.mrf.mxu0
    %v5755 = vadd.f32 %v5599, %v5754
    %v5756 = vpop.f32.mrf.mxu0
    %v5757 = vadd.f32 %v5603, %v5756
    %5758 = vdwg.mxu0
    %vm5759 = vcmp.gt.f32.partialorder %v5721, 0.0
    %vm5760 = vcmp.gt.f32.partialorder %v5723, 0.0
    %vm5761 = vcmp.gt.f32.partialorder %v5725, 0.0
    %vm5762 = vcmp.gt.f32.partialorder %v5727, 0.0
    %vm5763 = vcmp.gt.f32.partialorder %v5731, 0.0
    %vm5764 = vcmp.gt.f32.partialorder %v5733, 0.0
    %vm5765 = vcmp.gt.f32.partialorder %v5735, 0.0
    %vm5766 = vcmp.gt.f32.partialorder %v5737, 0.0
    %vm5767 = vcmp.gt.f32.partialorder %v5741, 0.0
    %vm5768 = vcmp.gt.f32.partialorder %v5743, 0.0
    %vm5769 = vcmp.gt.f32.partialorder %v5745, 0.0
    %vm5770 = vcmp.gt.f32.partialorder %v5747, 0.0
    %vm5771 = vcmp.gt.f32.partialorder %v5751, 0.0
    %vm5772 = vcmp.gt.f32.partialorder %v5753, 0.0
    %vm5773 = vcmp.gt.f32.partialorder %v5755, 0.0
    %vm5774 = vcmp.gt.f32.partialorder %v5757, 0.0
    %v5775 = vmin.f32 %v5721, 0.0
    %v5776 = vmin.f32 %v5723, 0.0
    %v5777 = vmin.f32 %v5725, 0.0
    %v5778 = vmin.f32 %v5727, 0.0
    %v5779 = vmin.f32 %v5731, 0.0
    %v5780 = vmin.f32 %v5733, 0.0
    %v5781 = vmin.f32 %v5735, 0.0
    %v5782 = vmin.f32 %v5737, 0.0
    %v5783 = vmin.f32 %v5741, 0.0
    %v5784 = vmin.f32 %v5743, 0.0
    %v5785 = vmin.f32 %v5745, 0.0
    %v5786 = vmin.f32 %v5747, 0.0
    %v5787 = vmin.f32 %v5751, 0.0
    %v5788 = vmin.f32 %v5753, 0.0
    %v5789 = vmin.f32 %v5755, 0.0
    %v5790 = vmin.f32 %v5757, 0.0
    %v5791 = vmul.f32 %v5775, 1.442695
    %v5792 = vpow.pop %v5791
    %v5793 = vmul.f32 %v5776, 1.442695
    %v5794 = vpow.pop %v5793
    %v5795 = vmul.f32 %v5777, 1.442695
    %v5796 = vpow.pop %v5795
    %v5797 = vmul.f32 %v5778, 1.442695
    %v5798 = vpow.pop %v5797
    %v5799 = vmul.f32 %v5779, 1.442695
    %v5800 = vpow.pop %v5799
    %v5801 = vmul.f32 %v5780, 1.442695
    %v5802 = vpow.pop %v5801
    %v5803 = vmul.f32 %v5781, 1.442695
    %v5804 = vpow.pop %v5803
    %v5805 = vmul.f32 %v5782, 1.442695
    %v5806 = vpow.pop %v5805
    %v5807 = vmul.f32 %v5783, 1.442695
    %v5808 = vpow.pop %v5807
    %v5809 = vmul.f32 %v5784, 1.442695
    %v5810 = vpow.pop %v5809
    %v5811 = vmul.f32 %v5785, 1.442695
    %v5812 = vpow.pop %v5811
    %v5813 = vmul.f32 %v5786, 1.442695
    %v5814 = vpow.pop %v5813
    %v5815 = vmul.f32 %v5787, 1.442695
    %v5816 = vpow.pop %v5815
    %v5817 = vmul.f32 %v5788, 1.442695
    %v5818 = vpow.pop %v5817
    %v5819 = vmul.f32 %v5789, 1.442695
    %v5820 = vpow.pop %v5819
    %v5821 = vmul.f32 %v5790, 1.442695
    %v5822 = vpow.pop %v5821
    %v5823 = vsub.f32 %v5792, 1.0
    %v5824 = vsub.f32 %v5794, 1.0
    %v5825 = vsub.f32 %v5796, 1.0
    %v5826 = vsub.f32 %v5798, 1.0
    %v5827 = vsub.f32 %v5800, 1.0
    %v5828 = vsub.f32 %v5802, 1.0
    %v5829 = vsub.f32 %v5804, 1.0
    %v5830 = vsub.f32 %v5806, 1.0
    %v5831 = vsub.f32 %v5808, 1.0
    %v5832 = vsub.f32 %v5810, 1.0
    %v5833 = vsub.f32 %v5812, 1.0
    %v5834 = vsub.f32 %v5814, 1.0
    %v5835 = vsub.f32 %v5816, 1.0
    %v5836 = vsub.f32 %v5818, 1.0
    %v5837 = vsub.f32 %v5820, 1.0
    %v5838 = vsub.f32 %v5822, 1.0
    %v5839 = vsel %vm5759, %v5721, %v5823
    %v5840 = vsel %vm5760, %v5723, %v5824
    %v5841 = vsel %vm5761, %v5725, %v5825
    %v5842 = vsel %vm5762, %v5727, %v5826
    %v5843 = vsel %vm5763, %v5731, %v5827
    %v5844 = vsel %vm5764, %v5733, %v5828
    %v5845 = vsel %vm5765, %v5735, %v5829
    %v5846 = vsel %vm5766, %v5737, %v5830
    %v5847 = vsel %vm5767, %v5741, %v5831
    %v5848 = vsel %vm5768, %v5743, %v5832
    %v5849 = vsel %vm5769, %v5745, %v5833
    %v5850 = vsel %vm5770, %v5747, %v5834
    %v5851 = vsel %vm5771, %v5751, %v5835
    %v5852 = vsel %vm5772, %v5753, %v5836
    %v5853 = vsel %vm5773, %v5755, %v5837
    %v5854 = vsel %vm5774, %v5757, %v5838
    %v5855 = vpack.c.bf16 %v5841, %v5839
    %v5856 = vpack.c.bf16 %v5842, %v5840
    %v5857 = vpack.c.bf16 %v5845, %v5843
    %v5858 = vpack.c.bf16 %v5846, %v5844
    %v5859 = vpack.c.bf16 %v5849, %v5847
    %v5860 = vpack.c.bf16 %v5850, %v5848
    %v5861 = vpack.c.bf16 %v5853, %v5851
    %v5862 = vpack.c.bf16 %v5854, %v5852
    %v5863 = vld [vmem:[#allocation5] sm:$0xf]
    %v5864 = vld [vmem:[#allocation5 + $0x4] sm:$0xf]
    %v5865 = vld [vmem:[#allocation5 + $0x8] sm:$0xf]
    %v5866 = vld [vmem:[#allocation5 + $0xc] sm:$0xf]
    %v5867 = vld [vmem:[#allocation5 + $0x10] sm:$0xf]
    %v5868 = vld [vmem:[#allocation5 + $0x14] sm:$0xf]
    %v5869 = vld [vmem:[#allocation5 + $0x18] sm:$0xf]
    %v5870 = vld [vmem:[#allocation5 + $0x1c] sm:$0xf]
    %v5871 = vld [vmem:[#allocation5 + $0x20] sm:$0xf]
    %v5872 = vld [vmem:[#allocation5 + $0x24] sm:$0xf]
    %v5873 = vld [vmem:[#allocation5 + $0x28] sm:$0xf]
    %v5874 = vld [vmem:[#allocation5 + $0x2c] sm:$0xf]
    %v5875 = vld [vmem:[#allocation5 + $0x30] sm:$0xf]
    %v5876 = vld [vmem:[#allocation5 + $0x34] sm:$0xf]
    %v5877 = vld [vmem:[#allocation5 + $0x38] sm:$0xf]
    %v5878 = vld [vmem:[#allocation5 + $0x3c] sm:$0xf]
    %v5879 = vld [vmem:[#allocation5 + $0x40] sm:$0xf]
    %v5880 = vld [vmem:[#allocation5 + $0x44] sm:$0xf]
    %v5881 = vld [vmem:[#allocation5 + $0x48] sm:$0xf]
    %v5882 = vld [vmem:[#allocation5 + $0x4c] sm:$0xf]
    %v5883 = vld [vmem:[#allocation5 + $0x50] sm:$0xf]
    %v5884 = vld [vmem:[#allocation5 + $0x54] sm:$0xf]
    %v5885 = vld [vmem:[#allocation5 + $0x58] sm:$0xf]
    %v5886 = vld [vmem:[#allocation5 + $0x5c] sm:$0xf]
    %v5887 = vld [vmem:[#allocation5 + $0x60] sm:$0xf]
    %v5888 = vld [vmem:[#allocation5 + $0x64] sm:$0xf]
    %v5889 = vld [vmem:[#allocation5 + $0x68] sm:$0xf]
    %v5890 = vld [vmem:[#allocation5 + $0x6c] sm:$0xf]
    %v5891 = vld [vmem:[#allocation5 + $0x70] sm:$0xf]
    %v5892 = vld [vmem:[#allocation5 + $0x74] sm:$0xf]
    %v5893 = vld [vmem:[#allocation5 + $0x78] sm:$0xf]
    %v5894 = vld [vmem:[#allocation5 + $0x7c] sm:$0xf]
    %v5895 = vld [vmem:[%s6] sm:$0x1]
    %v5897 = vlaneseq
    %v5898 = vshrl.u32 %v5897, 7
    %v5899 = vsub.s32 0, %v5898
    %v5900 = vrot.slane %v5895, %v5899
    %v5934 = vunpack.c.l.b16 %v5863
    %v5935 = vunpack.c.l.b16 %v5864
    %v5936 = vunpack.c.l.b16 %v5865
    %v5937 = vunpack.c.l.b16 %v5866
    %v5938 = vunpack.c.l.b16 %v5867
    %v5939 = vunpack.c.l.b16 %v5868
    %v5940 = vunpack.c.l.b16 %v5869
    %v5941 = vunpack.c.l.b16 %v5870
    %v5942 = vunpack.c.l.b16 %v5871
    %v5943 = vunpack.c.l.b16 %v5872
    %v5944 = vunpack.c.l.b16 %v5873
    %v5945 = vunpack.c.l.b16 %v5874
    %v5946 = vunpack.c.l.b16 %v5875
    %v5947 = vunpack.c.l.b16 %v5876
    %v5948 = vunpack.c.l.b16 %v5877
    %v5949 = vunpack.c.l.b16 %v5878
    %v5950 = vunpack.c.l.b16 %v5879
    %v5951 = vunpack.c.l.b16 %v5880
    %v5952 = vunpack.c.l.b16 %v5881
    %v5953 = vunpack.c.l.b16 %v5882
    %v5954 = vunpack.c.l.b16 %v5883
    %v5955 = vunpack.c.l.b16 %v5884
    %v5956 = vunpack.c.l.b16 %v5885
    %v5957 = vunpack.c.l.b16 %v5886
    %v5958 = vunpack.c.l.b16 %v5887
    %v5959 = vunpack.c.l.b16 %v5888
    %v5960 = vunpack.c.l.b16 %v5889
    %v5961 = vunpack.c.l.b16 %v5890
    %v5962 = vunpack.c.l.b16 %v5891
    %v5963 = vunpack.c.l.b16 %v5892
    %v5964 = vunpack.c.l.b16 %v5893
    %v5965 = vunpack.c.l.b16 %v5894
    %v5966 = vpack.c.b16 %v5935, %v5934
    %v5967 = vpack.c.b16 %v5937, %v5936
    %v5968 = vpack.c.b16 %v5939, %v5938
    %v5969 = vpack.c.b16 %v5941, %v5940
    %v5970 = vpack.c.b16 %v5943, %v5942
    %v5971 = vpack.c.b16 %v5945, %v5944
    %v5972 = vpack.c.b16 %v5947, %v5946
    %v5973 = vpack.c.b16 %v5949, %v5948
    %v5974 = vpack.c.b16 %v5951, %v5950
    %v5975 = vpack.c.b16 %v5953, %v5952
    %v5976 = vpack.c.b16 %v5955, %v5954
    %v5977 = vpack.c.b16 %v5957, %v5956
    %v5978 = vpack.c.b16 %v5959, %v5958
    %v5979 = vpack.c.b16 %v5961, %v5960
    %v5980 = vpack.c.b16 %v5963, %v5962
    %v5981 = vpack.c.b16 %v5965, %v5964
    %5998 = vmatprep.subr.bf16.mxu0 0
    %5999 = vmatpush1.bf16.msra.mxu0 %v5973
    %6000 = vmatprep.subr.bf16.mxu0 0
    %6001 = vmatpush1.bf16.msra.mxu0 %v5972
    %6002 = vmatprep.subr.bf16.mxu0 0
    %6003 = vmatpush1.bf16.msra.mxu0 %v5971
    %6004 = vmatprep.subr.bf16.mxu0 0
    %6005 = vmatpush1.bf16.msra.mxu0 %v5970
    %6006 = vmatprep.subr.bf16.mxu0 0
    %6007 = vmatpush1.bf16.msra.mxu0 %v5969
    %6008 = vmatprep.subr.bf16.mxu0 0
    %6009 = vmatpush1.bf16.msra.mxu0 %v5968
    %6010 = vmatprep.subr.bf16.mxu0 0
    %6011 = vmatpush1.bf16.msra.mxu0 %v5967
    %6012 = vmatprep.subr.bf16.mxu0 0
    %6013 = vmatpush1.bf16.msra.mxu0 %v5966
    %6014 = vmatprep.subr.bf16.mxu0 0
    %6015 = vmatpush2.bf16.msra.mxu0 %v5981
    %6016 = vmatprep.subr.bf16.mxu0 0
    %6017 = vmatpush2.bf16.msra.mxu0 %v5980
    %6018 = vmatprep.subr.bf16.mxu0 0
    %6019 = vmatpush2.bf16.msra.mxu0 %v5979
    %6020 = vmatprep.subr.bf16.mxu0 0
    %6021 = vmatpush2.bf16.msra.mxu0 %v5978
    %6022 = vmatprep.subr.bf16.mxu0 0
    %6023 = vmatpush2.bf16.msra.mxu0 %v5977
    %6024 = vmatprep.subr.bf16.mxu0 0
    %6025 = vmatpush2.bf16.msra.mxu0 %v5976
    %6026 = vmatprep.subr.bf16.mxu0 0
    %6027 = vmatpush2.bf16.msra.mxu0 %v5975
    %6028 = vmatprep.subr.bf16.mxu0 0
    %6029 = vmatpush2.bf16.msra.mxu0 %v5974
    %6030 = vmatprep.mubr.bf16.mxu0 %v5856
    %6031 = vmatmul.mubr.bf16.gmra.mxu0 %v5855
    %v6032 = vpop.f32.mrf.mxu0
    %v6033 = vadd.f32 %v5900, %v6032
    %v6034 = vpop.f32.mrf.mxu0
    %v6035 = vpop.f32.mrf.mxu0
    %v6036 = vadd.f32 %v5900, %v6035
    %v6037 = vpop.f32.mrf.mxu0
    %6038 = vmatprep.mubr.bf16.mxu0 %v5858
    %6039 = vmatmul.mubr.bf16.gmra.mxu0 %v5857
    %v6040 = vpop.f32.mrf.mxu0
    %v6041 = vadd.f32 %v5900, %v6040
    %v6042 = vpop.f32.mrf.mxu0
    %v6043 = vpop.f32.mrf.mxu0
    %v6044 = vadd.f32 %v5900, %v6043
    %v6045 = vpop.f32.mrf.mxu0
    %6046 = vmatprep.mubr.bf16.mxu0 %v5860
    %6047 = vmatmul.mubr.bf16.gmra.mxu0 %v5859
    %v6048 = vpop.f32.mrf.mxu0
    %v6049 = vadd.f32 %v5900, %v6048
    %v6050 = vpop.f32.mrf.mxu0
    %v6051 = vpop.f32.mrf.mxu0
    %v6052 = vadd.f32 %v5900, %v6051
    %v6053 = vpop.f32.mrf.mxu0
    %6054 = vmatprep.mubr.bf16.mxu0 %v5862
    %6055 = vmatmul.mubr.bf16.gmra.mxu0 %v5861
    %v6056 = vpop.f32.mrf.mxu0
    %v6057 = vadd.f32 %v5900, %v6056
    %v6058 = vpop.f32.mrf.mxu0
    %v6059 = vpop.f32.mrf.mxu0
    %v6060 = vadd.f32 %v5900, %v6059
    %v6061 = vpop.f32.mrf.mxu0
    %6062 = vdwg.mxu0
    %6063 = vst [vmem:[#allocation7] sm:$0xff] %v6033
    %6064 = vst [vmem:[#allocation7 + $0x8] sm:$0xff] %v6036
    %6065 = vst [vmem:[#allocation7 + $0x10] sm:$0xff] %v6041
    %6066 = vst [vmem:[#allocation7 + $0x18] sm:$0xff] %v6044
    %6067 = vst [vmem:[#allocation7 + $0x20] sm:$0xff] %v6049
    %6068 = vst [vmem:[#allocation7 + $0x28] sm:$0xff] %v6052
    %6069 = vst [vmem:[#allocation7 + $0x30] sm:$0xff] %v6057
    %6070 = vst [vmem:[#allocation7 + $0x38] sm:$0xff] %v6060
    // Predicated region
    $region38: #{tpu_custom_call.1} parent=1 // pred_check
      _
    $region39: #{tpu_custom_call.1} parent=1 // pred_check_branch
      %6072 = sbr.rel (0) target = $region41
    $region40: #{tpu_custom_call.1} parent=1 // pred_region
      %s6074 = ssub.s32 1024, 1024
      %6075 = vsyncadd [#allocation4], %s6074
      %s6076 = sshll.u32 [#allocation7], 4
      %s6077 = int_to_ptr.vmem [resolvable:$true] %s6076
      %6082 = dma.vmem_to_hbm [thread:$0]  %s6077, 1024, %s7, [#allocation4], 128, 128, 8
    $region41: #{tpu_custom_call.1} parent=1 // pred_fallthru
      _
    // Predicated region
    $region42: #{tpu_custom_call.1} parent=1 // pred_check
      _
    $region43: #{tpu_custom_call.1} parent=1 // pred_check_branch
      %6084 = sbr.rel (0) target = $region45
    $region44: #{tpu_custom_call.1} parent=1 // pred_region
      %6085 = dma.done [#allocation4], 1024
    $region45: #{tpu_custom_call.1} parent=1 // pred_fallthru
      _
    %6086 = vsyncpa [#allocation3], 1
    %6087 = vsyncpa [#allocation6], 1
    %6088 = vsyncpa [#allocation4], 1

</llo_original>
